<compile_context>
chip_gen: v7x
topology: tpu7x:2x2x1
jax: 0.10.0
libtpu: 0.0.40
codegen_flags: <defaults>
</compile_context>

<pallas_src>
import functools

import jax
import jax.numpy as jnp
from jax.experimental import pallas as pl
from jax.experimental.pallas import tpu as pltpu

EPS = 1e-5          # nn.BatchNorm2d default eps
NEG_SLOPE = 0.1     # LeakyReLU(0.1)
LANE = 128          # NOTE: with real channel counts > 128, rounding Cp to a
                    # multiple of 256 feeds the full 256-wide MXU on v6e/v7x.


def _round_up(x, m):
    return (x + m - 1) // m * m


@functools.lru_cache(maxsize=1)
def _vmem_limit():
    """Scoped-VMEM limit: ~3/4 of physical (96 MiB v5e/v6e, 48 MiB v7x)."""
    try:
        cap = int(pltpu.get_tpu_info().vmem_capacity_bytes)
        return max(32 * 1024 * 1024, min(cap * 3 // 4, 96 * 1024 * 1024))
    except Exception:
        return 32 * 1024 * 1024


def _pick_tile(m, cap=512):
    """Largest power-of-two tile <= cap that divides m (>= 8); else full m."""
    t = cap
    while t >= 8:
        if t <= m and m % t == 0:
            return t
        t //= 2
    return m


def _pick_th(ho, wo):
    """Output rows per conv grid step: th | Ho, th*Wo ~ 256..4096, (th*Wo)%8==0."""
    divs = [d for d in range(1, ho + 1) if ho % d == 0]
    divs = [d for d in divs if d * wo <= 4096] or [1]
    pref = [d for d in divs if (d * wo) % 8 == 0] or divs
    for d in pref:
        if d * wo >= 256:
            return d
    return pref[-1]


# --------------------------------------------------------------------------- #
# Kernel 1a: KxK conv, TH output rows per step, tap loop unrolled in-kernel.   #
# --------------------------------------------------------------------------- #
def conv_block_kernel(p_ref, w_ref, y_ref, st_ref, *, k, s, th, wo):
    """p_ref: (s*s, Hq, Wq, Cp) resident phase planes of one batch image.
    w_ref: (k*k, Cp, Cp) resident weights. Computes TH output rows (rows
    [hb*TH, hb*TH+TH) of the output image) as k*k accumulated MXU matmuls,
    writes the bf16 pre-BN block and its shifted per-block stats."""
    hb = pl.program_id(1)
    r0 = hb * th
    cp = y_ref.shape[-1]

    acc = None
    for dy in range(k):
        for dx in range(k):
            ph = (dy % s) * s + (dx % s)
            xb = p_ref[ph, pl.ds(r0 + dy // s, th), pl.ds(dx // s, wo), :]
            contrib = jnp.dot(xb.reshape(th * wo, cp), w_ref[dy * k + dx],
                              preferred_element_type=jnp.float32)
            acc = contrib if acc is None else acc + contrib

    y_ref[...] = acc.reshape(th, wo, cp).astype(y_ref.dtype)

    # Shifted (per-block-mean) partial stats for a well-conditioned variance.
    ssum = jnp.sum(acc, axis=0, keepdims=True)                 # (1, Cp)
    dev = acc - ssum * (1.0 / (th * wo))
    ssq = jnp.sum(dev * dev, axis=0, keepdims=True)            # (1, Cp)
    st_ref[...] = jnp.concatenate([ssum, ssq], axis=0)         # one (2, Cp) store


# --------------------------------------------------------------------------- #
# Kernel 1b: 1x1 conv as a plain tiled GEMM over M = N*H*W.                    #
# --------------------------------------------------------------------------- #
def gemm_stats_kernel(x_ref, w_ref, y_ref, st_ref):
    acc = jnp.dot(x_ref[...], w_ref[...], preferred_element_type=jnp.float32)
    y_ref[...] = acc.astype(y_ref.dtype)
    n_b = acc.shape[0]
    ssum = jnp.sum(acc, axis=0, keepdims=True)
    dev = acc - ssum * (1.0 / n_b)
    ssq = jnp.sum(dev * dev, axis=0, keepdims=True)
    st_ref[...] = jnp.concatenate([ssum, ssq], axis=0)


# --------------------------------------------------------------------------- #
# Kernel 2: BN normalize (folded scale/bias) + LeakyReLU (+ fused residual).   #
# --------------------------------------------------------------------------- #
def bn_act_kernel(y_ref, s_ref, b_ref, o_ref):
    v = y_ref[...].astype(jnp.float32) * s_ref[...] + b_ref[...]
    o_ref[...] = jnp.where(v >= 0, v, NEG_SLOPE * v).astype(o_ref.dtype)


def bn_act_res_kernel(y_ref, s_ref, b_ref, r_ref, o_ref):
    v = y_ref[...].astype(jnp.float32) * s_ref[...] + b_ref[...]
    v = jnp.where(v >= 0, v, NEG_SLOPE * v) + r_ref[...].astype(jnp.float32)
    o_ref[...] = v.astype(o_ref.dtype)


# --------------------------------------------------------------------------- #
# Wrappers                                                                     #
# --------------------------------------------------------------------------- #
def _build_phases(x, k, s, pad, Ho, Wo):
    """Row+column parity phase planes so every tap (dy, dx) of a strided conv is
    a contiguous slice: plane (dy%s)*s + dx%s, rows h+dy//s, cols w+dx//s."""
    xp = jnp.pad(x, ((0, 0), (pad, pad), (pad, pad), (0, 0)))
    Hq = Ho + (k - 1) // s
    Wq = Wo + (k - 1) // s
    planes = []
    for pr in range(s):
        for pc in range(s):
            v = xp[:, pr::s, pc::s, :][:, :Hq, :Wq, :]
            ph, pw = Hq - v.shape[1], Wq - v.shape[2]
            if ph or pw:
                v = jnp.pad(v, ((0, 0), (0, ph), (0, pw), (0, 0)))
            planes.append(v)
    return jnp.stack(planes, axis=0), Hq, Wq


def _conv_kxk(x, w, *, k, s, pad, Ho, Wo):
    N, H, W, Cp = x.shape
    taps = k * k
    if s == 1:
        # Just a spatial pad (no phase re-layout copy for stride-1 layers).
        P = jnp.pad(x, ((0, 0), (pad, pad), (pad, pad), (0, 0)))[None]
        s2, Hq, Wq = 1, H + 2 * pad, W + 2 * pad
    else:
        P, Hq, Wq = _build_phases(x, k, s, pad, Ho, Wo)
        s2 = s * s

    th = _pick_th(Ho, Wo)
    nhb = Ho // th

    kern = functools.partial(conv_block_kernel, k=k, s=s, th=th, wo=Wo)
    y, st = pl.pallas_call(
        kern,
        grid=(N, nhb),
        in_specs=[
            # Whole padded (per-batch) image resident in VMEM; block index is
            # constant across the row-block axis so it is DMA'd once per batch.
            pl.BlockSpec((s2, None, Hq, Wq, Cp), lambda n, h: (0, n, 0, 0, 0)),
            # Full weight stack resident in VMEM (constant block index).
            pl.BlockSpec((taps, Cp, Cp), lambda n, h: (0, 0, 0)),
        ],
        out_specs=[
            pl.BlockSpec((None, th, Wo, Cp), lambda n, h: (n, h, 0, 0)),
            pl.BlockSpec((None, None, 2, Cp), lambda n, h: (n, h, 0, 0)),
        ],
        out_shape=[
            jax.ShapeDtypeStruct((N, Ho, Wo, Cp), jnp.bfloat16),   # pre-BN conv out
            jax.ShapeDtypeStruct((N, nhb, 2, Cp), jnp.float32),    # per-block stats
        ],
        compiler_params=pltpu.CompilerParams(
            dimension_semantics=("parallel", "parallel"),
            vmem_limit_bytes=_vmem_limit(),
        ),
    )(P, w)
    return y, st, th * Wo


def _conv1x1_gemm(x2, w):
    """1x1 conv as a tiled GEMM: (M, Cp) x (Cp, Cp)."""
    M, Cp = x2.shape
    tm = _pick_tile(M, cap=512)
    nblk = M // tm
    y, st = pl.pallas_call(
        gemm_stats_kernel,
        grid=(nblk,),
        in_specs=[pl.BlockSpec((tm, Cp), lambda i: (i, 0)),
                  pl.BlockSpec((Cp, Cp), lambda i: (0, 0))],
        out_specs=[pl.BlockSpec((tm, Cp), lambda i: (i, 0)),
                   pl.BlockSpec((None, 2, Cp), lambda i: (i, 0, 0))],
        out_shape=[jax.ShapeDtypeStruct((M, Cp), jnp.bfloat16),
                   jax.ShapeDtypeStruct((nblk, 2, Cp), jnp.float32)],
        compiler_params=pltpu.CompilerParams(
            dimension_semantics=("parallel",),
            vmem_limit_bytes=_vmem_limit(),
        ),
    )(x2, w.reshape(Cp, Cp))
    return y, st, tm


def _finalize_stats(st, n_b, m, gamma, beta):
    """Combine per-block (sum, sum-of-sq-deviation) with Chan's formula, then
    fold BatchNorm into scale/bias: scale = gamma*rsqrt(var+eps),
    bias = beta - mean*scale."""
    cp = st.shape[-1]
    st = st.reshape(-1, 2, cp)
    sums = st[:, 0, :]
    ssqs = st[:, 1, :]
    total = jnp.sum(sums, axis=0)
    mean = total / m
    mean_b = sums / n_b
    var = (jnp.sum(ssqs, axis=0)
           + n_b * jnp.sum((mean_b - mean[None, :]) ** 2, axis=0)) / m
    var = jnp.maximum(var, 0.0)
    scale = gamma * jax.lax.rsqrt(var + EPS)
    bias = beta - mean * scale
    return scale.reshape(1, cp), bias.reshape(1, cp)


def _bn_act(y2, scale2, bias2, residual2=None):
    """Pass 2: normalize + LeakyReLU (+ fused residual add, aliased in place),
    tiled over M with lane-dense bf16 blocks; robust to any M via row padding."""
    m, Cp = y2.shape
    tm = min(2048, _round_up(m, 8))
    mp = _round_up(m, tm)
    if mp != m:
        y2 = jnp.pad(y2, ((0, mp - m), (0, 0)))
        if residual2 is not None:
            residual2 = jnp.pad(residual2, ((0, mp - m), (0, 0)))

    row_spec = pl.BlockSpec((tm, Cp), lambda i: (i, 0))
    vec_spec = pl.BlockSpec((1, Cp), lambda i: (0, 0))
    out_shape = jax.ShapeDtypeStruct((mp, Cp), jnp.bfloat16)
    cparams = pltpu.CompilerParams(dimension_semantics=("parallel",),
                                   vmem_limit_bytes=_vmem_limit())

    if residual2 is None:
        out = pl.pallas_call(
            bn_act_kernel, grid=(mp // tm,),
            in_specs=[row_spec, vec_spec, vec_spec],
            out_specs=row_spec, out_shape=out_shape,
            compiler_params=cparams,
        )(y2, scale2, bias2)
    else:
        out = pl.pallas_call(
            bn_act_res_kernel, grid=(mp // tm,),
            in_specs=[row_spec, vec_spec, vec_spec, row_spec],
            out_specs=row_spec, out_shape=out_shape,
            input_output_aliases={3: 0},   # write result in place of the residual
            compiler_params=cparams,
        )(y2, scale2, bias2, residual2)
    return out[:m] if mp != m else out


def conv_bn_act(x, w, gamma, beta, *, k, stride, pad, residual=None):
    """One ConvLayer (conv + BatchNorm(batch stats) + LeakyReLU, pool=False),
    optionally with the ResBlock residual add fused into the epilogue.

    x: (N, H, W, Cp) bf16, channels zero-padded to a multiple of 128
    w: (k*k, Cp, Cp) bf16 (zero-padded);  gamma/beta: (Cp,) f32 (zero-padded)
    residual: optional (N, Ho, Wo, Cp) bf16;  returns (N, Ho, Wo, Cp) bf16.
    """
    N, H, W, Cp = x.shape
    Ho = (H + 2 * pad - k) // stride + 1
    Wo = (W + 2 * pad - k) // stride + 1
    m = N * Ho * Wo

    if k == 1 and stride == 1 and pad == 0:
        y2, st, n_b = _conv1x1_gemm(x.reshape(m, Cp), w)
    else:
        y4, st, n_b = _conv_kxk(x, w, k=k, s=stride, pad=pad, Ho=Ho, Wo=Wo)
        y2 = y4.reshape(m, Cp)

    scale2, bias2 = _finalize_stats(st, n_b, m, gamma, beta)
    res2 = None if residual is None else residual.reshape(m, Cp)
    out2 = _bn_act(y2, scale2, bias2, res2)
    return out2.reshape(N, Ho, Wo, Cp)


# --------------------------------------------------------------------------- #
# Parameter prep (hoisted out of the forward) and the forward pass             #
# --------------------------------------------------------------------------- #
def _prep_layer(w, gamma, beta, cp):
    """Pad channels to cp (lane-dense), flatten taps, cast weights to bf16."""
    kh, kw, cin, cout = w.shape
    wp = jnp.zeros((kh * kw, cp, cp), jnp.float32)
    wp = wp.at[:, :cin, :cout].set(w.reshape(kh * kw, cin, cout))
    gp = jnp.zeros((cp,), jnp.float32).at[:cout].set(gamma)
    bp = jnp.zeros((cp,), jnp.float32).at[:cout].set(beta)
    return wp.astype(jnp.bfloat16), gp, bp


def prepare_params(params):
    """Run once per model: channel-pad + bf16-cast all layer parameters."""
    w0, g0, b0 = params["layer0"]
    in_c, out_c = w0.shape[2], w0.shape[3]
    cp = _round_up(max(in_c, out_c), LANE)
    return {
        "layer0": _prep_layer(w0, g0, b0, cp),
        "blocks": [(_prep_layer(w1, g1, b1, cp), _prep_layer(w2, g2, b2, cp))
                   for (w1, g1, b1), (w2, g2, b2) in params["blocks"]],
    }


def res_block_forward(x_nchw, prepped, *, out_c):
    """ResBlock.forward. Input/output in NCHW to match the PyTorch module."""
    w0p, g0p, b0p = prepped["layer0"]
    cp = w0p.shape[1]
    N, in_c, H, W = x_nchw.shape

    x = jnp.transpose(x_nchw, (0, 2, 3, 1))                     # NCHW -> NHWC
    x = jnp.pad(x, ((0, 0), (0, 0), (0, 0), (0, cp - in_c))).astype(jnp.bfloat16)

    # ConvLayer(in_C, out_C, 3, stride=2, pad=1, pool=False)
    x0 = conv_bn_act(x, w0p, g0p, b0p, k=3, stride=2, pad=1)

    for l1, l2 in prepped["blocks"]:
        # ConvLayer(out_C, in_C, 1, pad=0, pool=False)  -> tiled GEMM path
        t = conv_bn_act(x0, *l1, k=1, stride=1, pad=0)
        # ConvLayer(in_C, out_C, 3, pad=1, pool=False), fused x0 += x1
        x0 = conv_bn_act(t, *l2, k=3, stride=1, pad=1, residual=x0)

    out = x0[..., :out_c].astype(jnp.float32)
    return jnp.transpose(out, (0, 3, 1, 2))                     # NHWC -> NCHW


# --------------------------------------------------------------------------- #
# Parameters, pure-XLA reference, and self-test                                #
# --------------------------------------------------------------------------- #
def make_params(key, in_c, out_c, repeat=1):
    """Deterministic synthetic parameters. Conv weights: (kh, kw, Cin, Cout),
    no bias (bias=False because bn=True). BN: gamma/beta per channel."""
    def conv_w(k, kh, cin, cout):
        return jax.random.normal(k, (kh, kh, cin, cout), jnp.float32) * 0.1

    def bn(k, c):
        k1, k2 = jax.random.split(k)
        gamma = 1.0 + 0.1 * jax.random.normal(k1, (c,), jnp.float32)
        beta = 0.1 * jax.random.normal(k2, (c,), jnp.float32)
        return gamma, beta

    keys = jax.random.split(key, 2 + 4 * repeat)
    g0, b0 = bn(keys[1], out_c)
    params = {"layer0": (conv_w(keys[0], 3, in_c, out_c), g0, b0), "blocks": []}
    for i in range(repeat):
        k = keys[2 + 4 * i: 2 + 4 * (i + 1)]
        g1, b1 = bn(k[1], in_c)
        g2, b2 = bn(k[3], out_c)
        params["blocks"].append(
            (
                (conv_w(k[0], 1, out_c, in_c), g1, b1),  # 1x1: out_C -> in_C
                (conv_w(k[2], 3, in_c, out_c), g2, b2),  # 3x3: in_C -> out_C
            )
        )
    return params


def _ref_conv_layer(x, w, gamma, beta, stride, pad):
    y = jax.lax.conv_general_dilated(
        x, w, window_strides=(stride, stride),
        padding=((pad, pad), (pad, pad)),
        dimension_numbers=("NHWC", "HWIO", "NHWC"))
    mean = jnp.mean(y, axis=(0, 1, 2))
    var = jnp.mean((y - mean) ** 2, axis=(0, 1, 2))
    y = (y - mean) * jax.lax.rsqrt(var + EPS) * gamma + beta
    return jnp.where(y >= 0, y, NEG_SLOPE * y)


def res_block_reference(x_nchw, params):
    x = jnp.transpose(x_nchw, (0, 2, 3, 1))
    w0, g0, b0 = params["layer0"]
    x0 = _ref_conv_layer(x, w0, g0, b0, 2, 1)
    for (w1, g1, b1), (w2, g2, b2) in params["blocks"]:
        t = _ref_conv_layer(x0, w1, g1, b1, 1, 0)
        x0 = x0 + _ref_conv_layer(t, w2, g2, b2, 1, 1)
    return jnp.transpose(x0, (0, 3, 1, 2))


if __name__ == "__main__":
    key = jax.random.PRNGKey(0)
    kx, kp = jax.random.split(key)

    N, in_C, H, W = 2, 4, 16, 16
    out_C = 8
    x = jax.random.normal(kx, (N, in_C, H, W), jnp.float32)
    params = make_params(kp, in_C, out_C, repeat=1)
    prepped = prepare_params(params)                  # hoisted, runs once

    fwd = jax.jit(functools.partial(res_block_forward, out_c=out_C))
    y = jax.block_until_ready(fwd(x, prepped))

    assert y.shape == (N, out_C, H // 2, W // 2), y.shape
    assert bool(jnp.all(jnp.isfinite(y)))

    # Loose-tolerance check vs a pure-XLA f32 reference (kernel matmuls use bf16
    # operands and bf16 inter-layer activations, so a few 1e-2 of drift is expected).
    y_ref = jax.block_until_ready(jax.jit(res_block_reference)(x, params))
    err = float(jnp.max(jnp.abs(y - y_ref)))
    assert err < 0.35, f"max abs err vs reference: {err}"

    print("KERNEL_OK")
</pallas_src>

<mosaic_0001>
module attributes {stable_mosaic.version = 11 : i64} {
  func.func @conv_block_kernel(%arg0: i32, %arg1: i32, %arg2: memref<4x1x9x9x128xbf16, #tpu.memory_space<vmem>>, %arg3: memref<9x128x128xbf16, #tpu.memory_space<vmem>>, %arg4: memref<1x8x8x128xbf16, #tpu.memory_space<vmem>>, %arg5: memref<1x1x2x128xf32, #tpu.memory_space<vmem>>) attributes {dimension_semantics = [#tpu.dimension_semantics<parallel>, #tpu.dimension_semantics<parallel>], iteration_bounds = array<i64: 2, 1>, scalar_prefetch = 0 : i64, scratch_operands = 0 : i64, tpu.core_type = #tpu.core_type<tc>, window_params = [{transform_indices = @transform_0, window_bounds = array<i64: 4, 1, 9, 9, 128>}, {pipeline_mode = #tpu.pipeline_mode<synchronous>, transform_indices = @transform_1, window_bounds = array<i64: 9, 128, 128>}, {transform_indices = @transform_2, window_bounds = array<i64: 1, 8, 8, 128>}, {transform_indices = @transform_3, window_bounds = array<i64: 1, 1, 2, 128>}]} {
    %c8_i32 = arith.constant 8 : i32
    %0 = arith.muli %arg1, %c8_i32 : i32
    %c0_i32 = arith.constant 0 : i32
    %1 = arith.addi %0, %c0_i32 : i32
    %c0 = arith.constant 0 : index
    %c0_0 = arith.constant 0 : index
    %2 = arith.index_cast %1 : i32 to index
    %c0_1 = arith.constant 0 : index
    %c0_2 = arith.constant 0 : index
    %3 = vector.load %arg2[%c0, %c0_0, %2, %c0_1, %c0_2] : memref<4x1x9x9x128xbf16, #tpu.memory_space<vmem>>, vector<1x1x8x8x128xbf16>
    %4 = vector.shape_cast %3 : vector<1x1x8x8x128xbf16> to vector<8x8x128xbf16>
    %5 = vector.shape_cast %4 : vector<8x8x128xbf16> to vector<64x128xbf16>
    %c0_3 = arith.constant 0 : index
    %c0_4 = arith.constant 0 : index
    %c0_5 = arith.constant 0 : index
    %6 = vector.load %arg3[%c0_3, %c0_4, %c0_5] : memref<9x128x128xbf16, #tpu.memory_space<vmem>>, vector<1x128x128xbf16>
    %7 = vector.shape_cast %6 : vector<1x128x128xbf16> to vector<128x128xbf16>
    %cst = arith.constant dense<0.000000e+00> : vector<64x128xf32>
    %8 = tpu.matmul %5, %7, %cst {dimension_numbers = #tpu.dot_dimension_numbers<[1], [0], [0], [1], [0, 0, 1, 1], [], []>} : vector<64x128xbf16>, vector<128x128xbf16>, vector<64x128xf32> -> vector<64x128xf32>
    %c0_i32_6 = arith.constant 0 : i32
    %9 = arith.addi %0, %c0_i32_6 : i32
    %c1 = arith.constant 1 : index
    %c0_7 = arith.constant 0 : index
    %10 = arith.index_cast %9 : i32 to index
    %c0_8 = arith.constant 0 : index
    %c0_9 = arith.constant 0 : index
    %11 = vector.load %arg2[%c1, %c0_7, %10, %c0_8, %c0_9] : memref<4x1x9x9x128xbf16, #tpu.memory_space<vmem>>, vector<1x1x8x8x128xbf16>
    %12 = vector.shape_cast %11 : vector<1x1x8x8x128xbf16> to vector<8x8x128xbf16>
    %13 = vector.shape_cast %12 : vector<8x8x128xbf16> to vector<64x128xbf16>
    %c1_10 = arith.constant 1 : index
    %c0_11 = arith.constant 0 : index
    %c0_12 = arith.constant 0 : index
    %14 = vector.load %arg3[%c1_10, %c0_11, %c0_12] : memref<9x128x128xbf16, #tpu.memory_space<vmem>>, vector<1x128x128xbf16>
    %15 = vector.shape_cast %14 : vector<1x128x128xbf16> to vector<128x128xbf16>
    %cst_13 = arith.constant dense<0.000000e+00> : vector<64x128xf32>
    %16 = tpu.matmul %13, %15, %cst_13 {dimension_numbers = #tpu.dot_dimension_numbers<[1], [0], [0], [1], [0, 0, 1, 1], [], []>} : vector<64x128xbf16>, vector<128x128xbf16>, vector<64x128xf32> -> vector<64x128xf32>
    %17 = arith.addf %8, %16 : vector<64x128xf32>
    %c0_i32_14 = arith.constant 0 : i32
    %18 = arith.addi %0, %c0_i32_14 : i32
    %c0_15 = arith.constant 0 : index
    %c0_16 = arith.constant 0 : index
    %19 = arith.index_cast %18 : i32 to index
    %c1_17 = arith.constant 1 : index
    %c0_18 = arith.constant 0 : index
    %20 = vector.load %arg2[%c0_15, %c0_16, %19, %c1_17, %c0_18] : memref<4x1x9x9x128xbf16, #tpu.memory_space<vmem>>, vector<1x1x8x8x128xbf16>
    %21 = vector.shape_cast %20 : vector<1x1x8x8x128xbf16> to vector<8x8x128xbf16>
    %22 = vector.shape_cast %21 : vector<8x8x128xbf16> to vector<64x128xbf16>
    %c2 = arith.constant 2 : index
    %c0_19 = arith.constant 0 : index
    %c0_20 = arith.constant 0 : index
    %23 = vector.load %arg3[%c2, %c0_19, %c0_20] : memref<9x128x128xbf16, #tpu.memory_space<vmem>>, vector<1x128x128xbf16>
    %24 = vector.shape_cast %23 : vector<1x128x128xbf16> to vector<128x128xbf16>
    %cst_21 = arith.constant dense<0.000000e+00> : vector<64x128xf32>
    %25 = tpu.matmul %22, %24, %cst_21 {dimension_numbers = #tpu.dot_dimension_numbers<[1], [0], [0], [1], [0, 0, 1, 1], [], []>} : vector<64x128xbf16>, vector<128x128xbf16>, vector<64x128xf32> -> vector<64x128xf32>
    %26 = arith.addf %17, %25 : vector<64x128xf32>
    %c0_i32_22 = arith.constant 0 : i32
    %27 = arith.addi %0, %c0_i32_22 : i32
    %c2_23 = arith.constant 2 : index
    %c0_24 = arith.constant 0 : index
    %28 = arith.index_cast %27 : i32 to index
    %c0_25 = arith.constant 0 : index
    %c0_26 = arith.constant 0 : index
    %29 = vector.load %arg2[%c2_23, %c0_24, %28, %c0_25, %c0_26] : memref<4x1x9x9x128xbf16, #tpu.memory_space<vmem>>, vector<1x1x8x8x128xbf16>
    %30 = vector.shape_cast %29 : vector<1x1x8x8x128xbf16> to vector<8x8x128xbf16>
    %31 = vector.shape_cast %30 : vector<8x8x128xbf16> to vector<64x128xbf16>
    %c3 = arith.constant 3 : index
    %c0_27 = arith.constant 0 : index
    %c0_28 = arith.constant 0 : index
    %32 = vector.load %arg3[%c3, %c0_27, %c0_28] : memref<9x128x128xbf16, #tpu.memory_space<vmem>>, vector<1x128x128xbf16>
    %33 = vector.shape_cast %32 : vector<1x128x128xbf16> to vector<128x128xbf16>
    %cst_29 = arith.constant dense<0.000000e+00> : vector<64x128xf32>
    %34 = tpu.matmul %31, %33, %cst_29 {dimension_numbers = #tpu.dot_dimension_numbers<[1], [0], [0], [1], [0, 0, 1, 1], [], []>} : vector<64x128xbf16>, vector<128x128xbf16>, vector<64x128xf32> -> vector<64x128xf32>
    %35 = arith.addf %26, %34 : vector<64x128xf32>
    %c0_i32_30 = arith.constant 0 : i32
    %36 = arith.addi %0, %c0_i32_30 : i32
    %c3_31 = arith.constant 3 : index
    %c0_32 = arith.constant 0 : index
    %37 = arith.index_cast %36 : i32 to index
    %c0_33 = arith.constant 0 : index
    %c0_34 = arith.constant 0 : index
    %38 = vector.load %arg2[%c3_31, %c0_32, %37, %c0_33, %c0_34] : memref<4x1x9x9x128xbf16, #tpu.memory_space<vmem>>, vector<1x1x8x8x128xbf16>
    %39 = vector.shape_cast %38 : vector<1x1x8x8x128xbf16> to vector<8x8x128xbf16>
    %40 = vector.shape_cast %39 : vector<8x8x128xbf16> to vector<64x128xbf16>
    %c4 = arith.constant 4 : index
    %c0_35 = arith.constant 0 : index
    %c0_36 = arith.constant 0 : index
    %41 = vector.load %arg3[%c4, %c0_35, %c0_36] : memref<9x128x128xbf16, #tpu.memory_space<vmem>>, vector<1x128x128xbf16>
    %42 = vector.shape_cast %41 : vector<1x128x128xbf16> to vector<128x128xbf16>
    %cst_37 = arith.constant dense<0.000000e+00> : vector<64x128xf32>
    %43 = tpu.matmul %40, %42, %cst_37 {dimension_numbers = #tpu.dot_dimension_numbers<[1], [0], [0], [1], [0, 0, 1, 1], [], []>} : vector<64x128xbf16>, vector<128x128xbf16>, vector<64x128xf32> -> vector<64x128xf32>
    %44 = arith.addf %35, %43 : vector<64x128xf32>
    %c0_i32_38 = arith.constant 0 : i32
    %45 = arith.addi %0, %c0_i32_38 : i32
    %c2_39 = arith.constant 2 : index
    %c0_40 = arith.constant 0 : index
    %46 = arith.index_cast %45 : i32 to index
    %c1_41 = arith.constant 1 : index
    %c0_42 = arith.constant 0 : index
    %47 = vector.load %arg2[%c2_39, %c0_40, %46, %c1_41, %c0_42] : memref<4x1x9x9x128xbf16, #tpu.memory_space<vmem>>, vector<1x1x8x8x128xbf16>
    %48 = vector.shape_cast %47 : vector<1x1x8x8x128xbf16> to vector<8x8x128xbf16>
    %49 = vector.shape_cast %48 : vector<8x8x128xbf16> to vector<64x128xbf16>
    %c5 = arith.constant 5 : index
    %c0_43 = arith.constant 0 : index
    %c0_44 = arith.constant 0 : index
    %50 = vector.load %arg3[%c5, %c0_43, %c0_44] : memref<9x128x128xbf16, #tpu.memory_space<vmem>>, vector<1x128x128xbf16>
    %51 = vector.shape_cast %50 : vector<1x128x128xbf16> to vector<128x128xbf16>
    %cst_45 = arith.constant dense<0.000000e+00> : vector<64x128xf32>
    %52 = tpu.matmul %49, %51, %cst_45 {dimension_numbers = #tpu.dot_dimension_numbers<[1], [0], [0], [1], [0, 0, 1, 1], [], []>} : vector<64x128xbf16>, vector<128x128xbf16>, vector<64x128xf32> -> vector<64x128xf32>
    %53 = arith.addf %44, %52 : vector<64x128xf32>
    %c1_i32 = arith.constant 1 : i32
    %54 = arith.addi %0, %c1_i32 : i32
    %c0_46 = arith.constant 0 : index
    %c0_47 = arith.constant 0 : index
    %55 = arith.index_cast %54 : i32 to index
    %c0_48 = arith.constant 0 : index
    %c0_49 = arith.constant 0 : index
    %56 = vector.load %arg2[%c0_46, %c0_47, %55, %c0_48, %c0_49] : memref<4x1x9x9x128xbf16, #tpu.memory_space<vmem>>, vector<1x1x8x8x128xbf16>
    %57 = vector.shape_cast %56 : vector<1x1x8x8x128xbf16> to vector<8x8x128xbf16>
    %58 = vector.shape_cast %57 : vector<8x8x128xbf16> to vector<64x128xbf16>
    %c6 = arith.constant 6 : index
    %c0_50 = arith.constant 0 : index
    %c0_51 = arith.constant 0 : index
    %59 = vector.load %arg3[%c6, %c0_50, %c0_51] : memref<9x128x128xbf16, #tpu.memory_space<vmem>>, vector<1x128x128xbf16>
    %60 = vector.shape_cast %59 : vector<1x128x128xbf16> to vector<128x128xbf16>
    %cst_52 = arith.constant dense<0.000000e+00> : vector<64x128xf32>
    %61 = tpu.matmul %58, %60, %cst_52 {dimension_numbers = #tpu.dot_dimension_numbers<[1], [0], [0], [1], [0, 0, 1, 1], [], []>} : vector<64x128xbf16>, vector<128x128xbf16>, vector<64x128xf32> -> vector<64x128xf32>
    %62 = arith.addf %53, %61 : vector<64x128xf32>
    %c1_i32_53 = arith.constant 1 : i32
    %63 = arith.addi %0, %c1_i32_53 : i32
    %c1_54 = arith.constant 1 : index
    %c0_55 = arith.constant 0 : index
    %64 = arith.index_cast %63 : i32 to index
    %c0_56 = arith.constant 0 : index
    %c0_57 = arith.constant 0 : index
    %65 = vector.load %arg2[%c1_54, %c0_55, %64, %c0_56, %c0_57] : memref<4x1x9x9x128xbf16, #tpu.memory_space<vmem>>, vector<1x1x8x8x128xbf16>
    %66 = vector.shape_cast %65 : vector<1x1x8x8x128xbf16> to vector<8x8x128xbf16>
    %67 = vector.shape_cast %66 : vector<8x8x128xbf16> to vector<64x128xbf16>
    %c7 = arith.constant 7 : index
    %c0_58 = arith.constant 0 : index
    %c0_59 = arith.constant 0 : index
    %68 = vector.load %arg3[%c7, %c0_58, %c0_59] : memref<9x128x128xbf16, #tpu.memory_space<vmem>>, vector<1x128x128xbf16>
    %69 = vector.shape_cast %68 : vector<1x128x128xbf16> to vector<128x128xbf16>
    %cst_60 = arith.constant dense<0.000000e+00> : vector<64x128xf32>
    %70 = tpu.matmul %67, %69, %cst_60 {dimension_numbers = #tpu.dot_dimension_numbers<[1], [0], [0], [1], [0, 0, 1, 1], [], []>} : vector<64x128xbf16>, vector<128x128xbf16>, vector<64x128xf32> -> vector<64x128xf32>
    %71 = arith.addf %62, %70 : vector<64x128xf32>
    %c1_i32_61 = arith.constant 1 : i32
    %72 = arith.addi %0, %c1_i32_61 : i32
    %c0_62 = arith.constant 0 : index
    %c0_63 = arith.constant 0 : index
    %73 = arith.index_cast %72 : i32 to index
    %c1_64 = arith.constant 1 : index
    %c0_65 = arith.constant 0 : index
    %74 = vector.load %arg2[%c0_62, %c0_63, %73, %c1_64, %c0_65] : memref<4x1x9x9x128xbf16, #tpu.memory_space<vmem>>, vector<1x1x8x8x128xbf16>
    %75 = vector.shape_cast %74 : vector<1x1x8x8x128xbf16> to vector<8x8x128xbf16>
    %76 = vector.shape_cast %75 : vector<8x8x128xbf16> to vector<64x128xbf16>
    %c8 = arith.constant 8 : index
    %c0_66 = arith.constant 0 : index
    %c0_67 = arith.constant 0 : index
    %77 = vector.load %arg3[%c8, %c0_66, %c0_67] : memref<9x128x128xbf16, #tpu.memory_space<vmem>>, vector<1x128x128xbf16>
    %78 = vector.shape_cast %77 : vector<1x128x128xbf16> to vector<128x128xbf16>
    %cst_68 = arith.constant dense<0.000000e+00> : vector<64x128xf32>
    %79 = tpu.matmul %76, %78, %cst_68 {dimension_numbers = #tpu.dot_dimension_numbers<[1], [0], [0], [1], [0, 0, 1, 1], [], []>} : vector<64x128xbf16>, vector<128x128xbf16>, vector<64x128xf32> -> vector<64x128xf32>
    %80 = arith.addf %71, %79 : vector<64x128xf32>
    %81 = vector.shape_cast %80 : vector<64x128xf32> to vector<8x8x128xf32>
    %82 = arith.truncf %81 : vector<8x8x128xf32> to vector<8x8x128xbf16>
    %c0_69 = arith.constant 0 : index
    %c0_70 = arith.constant 0 : index
    %c0_71 = arith.constant 0 : index
    %c0_72 = arith.constant 0 : index
    %83 = vector.load %arg4[%c0_69, %c0_70, %c0_71, %c0_72] : memref<1x8x8x128xbf16, #tpu.memory_space<vmem>>, vector<1x8x8x128xbf16>
    %84 = vector.shape_cast %83 : vector<1x8x8x128xbf16> to vector<8x8x128xbf16>
    %85 = vector.shape_cast %82 : vector<8x8x128xbf16> to vector<1x8x8x128xbf16>
    tpu.vector_store %arg4[%c0_69, %c0_70, %c0_71, %c0_72], %85 {strides = array<i32>} : memref<1x8x8x128xbf16, #tpu.memory_space<vmem>>, vector<1x8x8x128xbf16>,
    %cst_73 = arith.constant dense<0.000000e+00> : vector<128xf32>
    %86 = vector.multi_reduction <add>, %80, %cst_73 [0] : vector<64x128xf32> to vector<128xf32>
    %87 = vector.shape_cast %86 : vector<128xf32> to vector<1x128xf32>
    %cst_74 = arith.constant 1.562500e-02 : f32
    %88 = vector.broadcast %cst_74 : f32 to vector<1x128xf32>
    %89 = arith.mulf %87, %88 : vector<1x128xf32>
    %90 = vector.broadcast %89 : vector<1x128xf32> to vector<64x128xf32>
    %91 = arith.subf %80, %90 : vector<64x128xf32>
    %92 = arith.mulf %91, %91 : vector<64x128xf32>
    %cst_75 = arith.constant dense<0.000000e+00> : vector<128xf32>
    %93 = vector.multi_reduction <add>, %92, %cst_75 [0] : vector<64x128xf32> to vector<128xf32>
    %94 = vector.shape_cast %93 : vector<128xf32> to vector<1x128xf32>
    %95 = tpu.concatenate %87, %94 in 0 : vector<1x128xf32>, vector<1x128xf32> -> vector<2x128xf32>
    %c0_76 = arith.constant 0 : index
    %c0_77 = arith.constant 0 : index
    %c0_78 = arith.constant 0 : index
    %c0_79 = arith.constant 0 : index
    %96 = vector.load %arg5[%c0_76, %c0_77, %c0_78, %c0_79] : memref<1x1x2x128xf32, #tpu.memory_space<vmem>>, vector<1x1x2x128xf32>
    %97 = vector.shape_cast %96 : vector<1x1x2x128xf32> to vector<2x128xf32>
    %98 = vector.shape_cast %95 : vector<2x128xf32> to vector<1x1x2x128xf32>
    tpu.vector_store %arg5[%c0_76, %c0_77, %c0_78, %c0_79], %98 {strides = array<i32>} : memref<1x1x2x128xf32, #tpu.memory_space<vmem>>, vector<1x1x2x128xf32>,
    return
  }
  func.func @transform_0(%arg0: i32, %arg1: i32) -> (i32, i32, i32, i32, i32) {
    %c0_i32 = arith.constant 0 : i32
    %c0_i32_0 = arith.constant 0 : i32
    %c0_i32_1 = arith.constant 0 : i32
    %c0_i32_2 = arith.constant 0 : i32
    %c0_i32_3 = arith.constant 0 : i32
    return %c0_i32, %arg0, %c0_i32_0, %c0_i32_1, %c0_i32_2 : i32, i32, i32, i32, i32
  }
  func.func @transform_1(%arg0: i32, %arg1: i32) -> (i32, i32, i32) {
    %c0_i32 = arith.constant 0 : i32
    %c0_i32_0 = arith.constant 0 : i32
    %c0_i32_1 = arith.constant 0 : i32
    %c0_i32_2 = arith.constant 0 : i32
    return %c0_i32, %c0_i32_0, %c0_i32_1 : i32, i32, i32
  }
  func.func @transform_2(%arg0: i32, %arg1: i32) -> (i32, i32, i32, i32) {
    %c0_i32 = arith.constant 0 : i32
    %c0_i32_0 = arith.constant 0 : i32
    %c0_i32_1 = arith.constant 0 : i32
    return %arg0, %arg1, %c0_i32, %c0_i32_0 : i32, i32, i32, i32
  }
  func.func @transform_3(%arg0: i32, %arg1: i32) -> (i32, i32, i32, i32) {
    %c0_i32 = arith.constant 0 : i32
    %c0_i32_0 = arith.constant 0 : i32
    %c0_i32_1 = arith.constant 0 : i32
    return %arg0, %arg1, %c0_i32, %c0_i32_0 : i32, i32, i32, i32
  }
}

module attributes {stable_mosaic.version = 11 : i64} {
  func.func @bn_act_kernel(%arg0: i32, %arg1: memref<128x128xbf16, #tpu.memory_space<vmem>>, %arg2: memref<1x128xf32, #tpu.memory_space<vmem>>, %arg3: memref<1x128xf32, #tpu.memory_space<vmem>>, %arg4: memref<128x128xbf16, #tpu.memory_space<vmem>>) attributes {dimension_semantics = [#tpu.dimension_semantics<parallel>], iteration_bounds = array<i64: 1>, scalar_prefetch = 0 : i64, scratch_operands = 0 : i64, tpu.core_type = #tpu.core_type<tc>, window_params = [{transform_indices = @transform_0, window_bounds = array<i64: 128, 128>}, {pipeline_mode = #tpu.pipeline_mode<synchronous>, transform_indices = @transform_1, window_bounds = array<i64: 1, 128>}, {pipeline_mode = #tpu.pipeline_mode<synchronous>, transform_indices = @transform_2, window_bounds = array<i64: 1, 128>}, {transform_indices = @transform_3, window_bounds = array<i64: 128, 128>}]} {
    %c0 = arith.constant 0 : index
    %c0_0 = arith.constant 0 : index
    %0 = vector.load %arg1[%c0, %c0_0] : memref<128x128xbf16, #tpu.memory_space<vmem>>, vector<128x128xbf16>
    %1 = arith.extf %0 : vector<128x128xbf16> to vector<128x128xf32>
    %c0_1 = arith.constant 0 : index
    %c0_2 = arith.constant 0 : index
    %2 = vector.load %arg2[%c0_1, %c0_2] : memref<1x128xf32, #tpu.memory_space<vmem>>, vector<1x128xf32>
    %3 = vector.broadcast %2 : vector<1x128xf32> to vector<128x128xf32>
    %4 = arith.mulf %1, %3 : vector<128x128xf32>
    %c0_3 = arith.constant 0 : index
    %c0_4 = arith.constant 0 : index
    %5 = vector.load %arg3[%c0_3, %c0_4] : memref<1x128xf32, #tpu.memory_space<vmem>>, vector<1x128xf32>
    %6 = vector.broadcast %5 : vector<1x128xf32> to vector<128x128xf32>
    %7 = arith.addf %4, %6 : vector<128x128xf32>
    %cst = arith.constant 0.000000e+00 : f32
    %8 = vector.broadcast %cst : f32 to vector<128x128xf32>
    %9 = arith.cmpf oge, %7, %8 : vector<128x128xf32>
    %cst_5 = arith.constant 1.000000e-01 : f32
    %10 = vector.broadcast %cst_5 : f32 to vector<128x128xf32>
    %11 = arith.mulf %10, %7 : vector<128x128xf32>
    %12 = arith.select %9, %7, %11 : vector<128x128xi1>, vector<128x128xf32>
    %13 = arith.truncf %12 : vector<128x128xf32> to vector<128x128xbf16>
    %c0_6 = arith.constant 0 : index
    %c0_7 = arith.constant 0 : index
    %14 = vector.load %arg4[%c0_6, %c0_7] : memref<128x128xbf16, #tpu.memory_space<vmem>>, vector<128x128xbf16>
    tpu.vector_store %arg4[%c0_6, %c0_7], %13 {strides = array<i32>} : memref<128x128xbf16, #tpu.memory_space<vmem>>, vector<128x128xbf16>,
    return
  }
  func.func @transform_0(%arg0: i32) -> (i32, i32) {
    %c0_i32 = arith.constant 0 : i32
    %c0_i32_0 = arith.constant 0 : i32
    return %arg0, %c0_i32 : i32, i32
  }
  func.func @transform_1(%arg0: i32) -> (i32, i32) {
    %c0_i32 = arith.constant 0 : i32
    %c0_i32_0 = arith.constant 0 : i32
    %c0_i32_1 = arith.constant 0 : i32
    return %c0_i32, %c0_i32_0 : i32, i32
  }
  func.func @transform_2(%arg0: i32) -> (i32, i32) {
    %c0_i32 = arith.constant 0 : i32
    %c0_i32_0 = arith.constant 0 : i32
    %c0_i32_1 = arith.constant 0 : i32
    return %c0_i32, %c0_i32_0 : i32, i32
  }
  func.func @transform_3(%arg0: i32) -> (i32, i32) {
    %c0_i32 = arith.constant 0 : i32
    %c0_i32_0 = arith.constant 0 : i32
    return %arg0, %c0_i32 : i32, i32
  }
}

module attributes {stable_mosaic.version = 11 : i64} {
  func.func @gemm_stats_kernel(%arg0: i32, %arg1: memref<128x128xbf16, #tpu.memory_space<vmem>>, %arg2: memref<128x128xbf16, #tpu.memory_space<vmem>>, %arg3: memref<128x128xbf16, #tpu.memory_space<vmem>>, %arg4: memref<1x2x128xf32, #tpu.memory_space<vmem>>) attributes {dimension_semantics = [#tpu.dimension_semantics<parallel>], iteration_bounds = array<i64: 1>, scalar_prefetch = 0 : i64, scratch_operands = 0 : i64, tpu.core_type = #tpu.core_type<tc>, window_params = [{transform_indices = @transform_0, window_bounds = array<i64: 128, 128>}, {pipeline_mode = #tpu.pipeline_mode<synchronous>, transform_indices = @transform_1, window_bounds = array<i64: 128, 128>}, {transform_indices = @transform_2, window_bounds = array<i64: 128, 128>}, {transform_indices = @transform_3, window_bounds = array<i64: 1, 2, 128>}]} {
    %c0 = arith.constant 0 : index
    %c0_0 = arith.constant 0 : index
    %0 = vector.load %arg1[%c0, %c0_0] : memref<128x128xbf16, #tpu.memory_space<vmem>>, vector<128x128xbf16>
    %c0_1 = arith.constant 0 : index
    %c0_2 = arith.constant 0 : index
    %1 = vector.load %arg2[%c0_1, %c0_2] : memref<128x128xbf16, #tpu.memory_space<vmem>>, vector<128x128xbf16>
    %cst = arith.constant dense<0.000000e+00> : vector<128x128xf32>
    %2 = tpu.matmul %0, %1, %cst {dimension_numbers = #tpu.dot_dimension_numbers<[1], [0], [0], [1], [0, 0, 1, 1], [], []>} : vector<128x128xbf16>, vector<128x128xbf16>, vector<128x128xf32> -> vector<128x128xf32>
    %3 = arith.truncf %2 : vector<128x128xf32> to vector<128x128xbf16>
    %c0_3 = arith.constant 0 : index
    %c0_4 = arith.constant 0 : index
    %4 = vector.load %arg3[%c0_3, %c0_4] : memref<128x128xbf16, #tpu.memory_space<vmem>>, vector<128x128xbf16>
    tpu.vector_store %arg3[%c0_3, %c0_4], %3 {strides = array<i32>} : memref<128x128xbf16, #tpu.memory_space<vmem>>, vector<128x128xbf16>,
    %cst_5 = arith.constant dense<0.000000e+00> : vector<128xf32>
    %5 = vector.multi_reduction <add>, %2, %cst_5 [0] : vector<128x128xf32> to vector<128xf32>
    %6 = vector.shape_cast %5 : vector<128xf32> to vector<1x128xf32>
    %cst_6 = arith.constant 7.812500e-03 : f32
    %7 = vector.broadcast %cst_6 : f32 to vector<1x128xf32>
    %8 = arith.mulf %6, %7 : vector<1x128xf32>
    %9 = vector.broadcast %8 : vector<1x128xf32> to vector<128x128xf32>
    %10 = arith.subf %2, %9 : vector<128x128xf32>
    %11 = arith.mulf %10, %10 : vector<128x128xf32>
    %cst_7 = arith.constant dense<0.000000e+00> : vector<128xf32>
    %12 = vector.multi_reduction <add>, %11, %cst_7 [0] : vector<128x128xf32> to vector<128xf32>
    %13 = vector.shape_cast %12 : vector<128xf32> to vector<1x128xf32>
    %14 = tpu.concatenate %6, %13 in 0 : vector<1x128xf32>, vector<1x128xf32> -> vector<2x128xf32>
    %c0_8 = arith.constant 0 : index
    %c0_9 = arith.constant 0 : index
    %c0_10 = arith.constant 0 : index
    %15 = vector.load %arg4[%c0_8, %c0_9, %c0_10] : memref<1x2x128xf32, #tpu.memory_space<vmem>>, vector<1x2x128xf32>
    %16 = vector.shape_cast %15 : vector<1x2x128xf32> to vector<2x128xf32>
    %17 = vector.shape_cast %14 : vector<2x128xf32> to vector<1x2x128xf32>
    tpu.vector_store %arg4[%c0_8, %c0_9, %c0_10], %17 {strides = array<i32>} : memref<1x2x128xf32, #tpu.memory_space<vmem>>, vector<1x2x128xf32>,
    return
  }
  func.func @transform_0(%arg0: i32) -> (i32, i32) {
    %c0_i32 = arith.constant 0 : i32
    %c0_i32_0 = arith.constant 0 : i32
    return %arg0, %c0_i32 : i32, i32
  }
  func.func @transform_1(%arg0: i32) -> (i32, i32) {
    %c0_i32 = arith.constant 0 : i32
    %c0_i32_0 = arith.constant 0 : i32
    %c0_i32_1 = arith.constant 0 : i32
    return %c0_i32, %c0_i32_0 : i32, i32
  }
  func.func @transform_2(%arg0: i32) -> (i32, i32) {
    %c0_i32 = arith.constant 0 : i32
    %c0_i32_0 = arith.constant 0 : i32
    return %arg0, %c0_i32 : i32, i32
  }
  func.func @transform_3(%arg0: i32) -> (i32, i32, i32) {
    %c0_i32 = arith.constant 0 : i32
    %c0_i32_0 = arith.constant 0 : i32
    %c0_i32_1 = arith.constant 0 : i32
    return %arg0, %c0_i32, %c0_i32_0 : i32, i32, i32
  }
}

module attributes {stable_mosaic.version = 11 : i64} {
  func.func @conv_block_kernel(%arg0: i32, %arg1: i32, %arg2: memref<1x1x10x10x128xbf16, #tpu.memory_space<vmem>>, %arg3: memref<9x128x128xbf16, #tpu.memory_space<vmem>>, %arg4: memref<1x8x8x128xbf16, #tpu.memory_space<vmem>>, %arg5: memref<1x1x2x128xf32, #tpu.memory_space<vmem>>) attributes {dimension_semantics = [#tpu.dimension_semantics<parallel>, #tpu.dimension_semantics<parallel>], iteration_bounds = array<i64: 2, 1>, scalar_prefetch = 0 : i64, scratch_operands = 0 : i64, tpu.core_type = #tpu.core_type<tc>, window_params = [{transform_indices = @transform_0, window_bounds = array<i64: 1, 1, 10, 10, 128>}, {pipeline_mode = #tpu.pipeline_mode<synchronous>, transform_indices = @transform_1, window_bounds = array<i64: 9, 128, 128>}, {transform_indices = @transform_2, window_bounds = array<i64: 1, 8, 8, 128>}, {transform_indices = @transform_3, window_bounds = array<i64: 1, 1, 2, 128>}]} {
    %c8_i32 = arith.constant 8 : i32
    %0 = arith.muli %arg1, %c8_i32 : i32
    %c0_i32 = arith.constant 0 : i32
    %1 = arith.addi %0, %c0_i32 : i32
    %c0 = arith.constant 0 : index
    %c0_0 = arith.constant 0 : index
    %2 = arith.index_cast %1 : i32 to index
    %c0_1 = arith.constant 0 : index
    %c0_2 = arith.constant 0 : index
    %3 = vector.load %arg2[%c0, %c0_0, %2, %c0_1, %c0_2] : memref<1x1x10x10x128xbf16, #tpu.memory_space<vmem>>, vector<1x1x8x8x128xbf16>
    %4 = vector.shape_cast %3 : vector<1x1x8x8x128xbf16> to vector<8x8x128xbf16>
    %5 = vector.shape_cast %4 : vector<8x8x128xbf16> to vector<64x128xbf16>
    %c0_3 = arith.constant 0 : index
    %c0_4 = arith.constant 0 : index
    %c0_5 = arith.constant 0 : index
    %6 = vector.load %arg3[%c0_3, %c0_4, %c0_5] : memref<9x128x128xbf16, #tpu.memory_space<vmem>>, vector<1x128x128xbf16>
    %7 = vector.shape_cast %6 : vector<1x128x128xbf16> to vector<128x128xbf16>
    %cst = arith.constant dense<0.000000e+00> : vector<64x128xf32>
    %8 = tpu.matmul %5, %7, %cst {dimension_numbers = #tpu.dot_dimension_numbers<[1], [0], [0], [1], [0, 0, 1, 1], [], []>} : vector<64x128xbf16>, vector<128x128xbf16>, vector<64x128xf32> -> vector<64x128xf32>
    %c0_i32_6 = arith.constant 0 : i32
    %9 = arith.addi %0, %c0_i32_6 : i32
    %c0_7 = arith.constant 0 : index
    %c0_8 = arith.constant 0 : index
    %10 = arith.index_cast %9 : i32 to index
    %c1 = arith.constant 1 : index
    %c0_9 = arith.constant 0 : index
    %11 = vector.load %arg2[%c0_7, %c0_8, %10, %c1, %c0_9] : memref<1x1x10x10x128xbf16, #tpu.memory_space<vmem>>, vector<1x1x8x8x128xbf16>
    %12 = vector.shape_cast %11 : vector<1x1x8x8x128xbf16> to vector<8x8x128xbf16>
    %13 = vector.shape_cast %12 : vector<8x8x128xbf16> to vector<64x128xbf16>
    %c1_10 = arith.constant 1 : index
    %c0_11 = arith.constant 0 : index
    %c0_12 = arith.constant 0 : index
    %14 = vector.load %arg3[%c1_10, %c0_11, %c0_12] : memref<9x128x128xbf16, #tpu.memory_space<vmem>>, vector<1x128x128xbf16>
    %15 = vector.shape_cast %14 : vector<1x128x128xbf16> to vector<128x128xbf16>
    %cst_13 = arith.constant dense<0.000000e+00> : vector<64x128xf32>
    %16 = tpu.matmul %13, %15, %cst_13 {dimension_numbers = #tpu.dot_dimension_numbers<[1], [0], [0], [1], [0, 0, 1, 1], [], []>} : vector<64x128xbf16>, vector<128x128xbf16>, vector<64x128xf32> -> vector<64x128xf32>
    %17 = arith.addf %8, %16 : vector<64x128xf32>
    %c0_i32_14 = arith.constant 0 : i32
    %18 = arith.addi %0, %c0_i32_14 : i32
    %c0_15 = arith.constant 0 : index
    %c0_16 = arith.constant 0 : index
    %19 = arith.index_cast %18 : i32 to index
    %c2 = arith.constant 2 : index
    %c0_17 = arith.constant 0 : index
    %20 = vector.load %arg2[%c0_15, %c0_16, %19, %c2, %c0_17] : memref<1x1x10x10x128xbf16, #tpu.memory_space<vmem>>, vector<1x1x8x8x128xbf16>
    %21 = vector.shape_cast %20 : vector<1x1x8x8x128xbf16> to vector<8x8x128xbf16>
    %22 = vector.shape_cast %21 : vector<8x8x128xbf16> to vector<64x128xbf16>
    %c2_18 = arith.constant 2 : index
    %c0_19 = arith.constant 0 : index
    %c0_20 = arith.constant 0 : index
    %23 = vector.load %arg3[%c2_18, %c0_19, %c0_20] : memref<9x128x128xbf16, #tpu.memory_space<vmem>>, vector<1x128x128xbf16>
    %24 = vector.shape_cast %23 : vector<1x128x128xbf16> to vector<128x128xbf16>
    %cst_21 = arith.constant dense<0.000000e+00> : vector<64x128xf32>
    %25 = tpu.matmul %22, %24, %cst_21 {dimension_numbers = #tpu.dot_dimension_numbers<[1], [0], [0], [1], [0, 0, 1, 1], [], []>} : vector<64x128xbf16>, vector<128x128xbf16>, vector<64x128xf32> -> vector<64x128xf32>
    %26 = arith.addf %17, %25 : vector<64x128xf32>
    %c1_i32 = arith.constant 1 : i32
    %27 = arith.addi %0, %c1_i32 : i32
    %c0_22 = arith.constant 0 : index
    %c0_23 = arith.constant 0 : index
    %28 = arith.index_cast %27 : i32 to index
    %c0_24 = arith.constant 0 : index
    %c0_25 = arith.constant 0 : index
    %29 = vector.load %arg2[%c0_22, %c0_23, %28, %c0_24, %c0_25] : memref<1x1x10x10x128xbf16, #tpu.memory_space<vmem>>, vector<1x1x8x8x128xbf16>
    %30 = vector.shape_cast %29 : vector<1x1x8x8x128xbf16> to vector<8x8x128xbf16>
    %31 = vector.shape_cast %30 : vector<8x8x128xbf16> to vector<64x128xbf16>
    %c3 = arith.constant 3 : index
    %c0_26 = arith.constant 0 : index
    %c0_27 = arith.constant 0 : index
    %32 = vector.load %arg3[%c3, %c0_26, %c0_27] : memref<9x128x128xbf16, #tpu.memory_space<vmem>>, vector<1x128x128xbf16>
    %33 = vector.shape_cast %32 : vector<1x128x128xbf16> to vector<128x128xbf16>
    %cst_28 = arith.constant dense<0.000000e+00> : vector<64x128xf32>
    %34 = tpu.matmul %31, %33, %cst_28 {dimension_numbers = #tpu.dot_dimension_numbers<[1], [0], [0], [1], [0, 0, 1, 1], [], []>} : vector<64x128xbf16>, vector<128x128xbf16>, vector<64x128xf32> -> vector<64x128xf32>
    %35 = arith.addf %26, %34 : vector<64x128xf32>
    %c1_i32_29 = arith.constant 1 : i32
    %36 = arith.addi %0, %c1_i32_29 : i32
    %c0_30 = arith.constant 0 : index
    %c0_31 = arith.constant 0 : index
    %37 = arith.index_cast %36 : i32 to index
    %c1_32 = arith.constant 1 : index
    %c0_33 = arith.constant 0 : index
    %38 = vector.load %arg2[%c0_30, %c0_31, %37, %c1_32, %c0_33] : memref<1x1x10x10x128xbf16, #tpu.memory_space<vmem>>, vector<1x1x8x8x128xbf16>
    %39 = vector.shape_cast %38 : vector<1x1x8x8x128xbf16> to vector<8x8x128xbf16>
    %40 = vector.shape_cast %39 : vector<8x8x128xbf16> to vector<64x128xbf16>
    %c4 = arith.constant 4 : index
    %c0_34 = arith.constant 0 : index
    %c0_35 = arith.constant 0 : index
    %41 = vector.load %arg3[%c4, %c0_34, %c0_35] : memref<9x128x128xbf16, #tpu.memory_space<vmem>>, vector<1x128x128xbf16>
    %42 = vector.shape_cast %41 : vector<1x128x128xbf16> to vector<128x128xbf16>
    %cst_36 = arith.constant dense<0.000000e+00> : vector<64x128xf32>
    %43 = tpu.matmul %40, %42, %cst_36 {dimension_numbers = #tpu.dot_dimension_numbers<[1], [0], [0], [1], [0, 0, 1, 1], [], []>} : vector<64x128xbf16>, vector<128x128xbf16>, vector<64x128xf32> -> vector<64x128xf32>
    %44 = arith.addf %35, %43 : vector<64x128xf32>
    %c1_i32_37 = arith.constant 1 : i32
    %45 = arith.addi %0, %c1_i32_37 : i32
    %c0_38 = arith.constant 0 : index
    %c0_39 = arith.constant 0 : index
    %46 = arith.index_cast %45 : i32 to index
    %c2_40 = arith.constant 2 : index
    %c0_41 = arith.constant 0 : index
    %47 = vector.load %arg2[%c0_38, %c0_39, %46, %c2_40, %c0_41] : memref<1x1x10x10x128xbf16, #tpu.memory_space<vmem>>, vector<1x1x8x8x128xbf16>
    %48 = vector.shape_cast %47 : vector<1x1x8x8x128xbf16> to vector<8x8x128xbf16>
    %49 = vector.shape_cast %48 : vector<8x8x128xbf16> to vector<64x128xbf16>
    %c5 = arith.constant 5 : index
    %c0_42 = arith.constant 0 : index
    %c0_43 = arith.constant 0 : index
    %50 = vector.load %arg3[%c5, %c0_42, %c0_43] : memref<9x128x128xbf16, #tpu.memory_space<vmem>>, vector<1x128x128xbf16>
    %51 = vector.shape_cast %50 : vector<1x128x128xbf16> to vector<128x128xbf16>
    %cst_44 = arith.constant dense<0.000000e+00> : vector<64x128xf32>
    %52 = tpu.matmul %49, %51, %cst_44 {dimension_numbers = #tpu.dot_dimension_numbers<[1], [0], [0], [1], [0, 0, 1, 1], [], []>} : vector<64x128xbf16>, vector<128x128xbf16>, vector<64x128xf32> -> vector<64x128xf32>
    %53 = arith.addf %44, %52 : vector<64x128xf32>
    %c2_i32 = arith.constant 2 : i32
    %54 = arith.addi %0, %c2_i32 : i32
    %c0_45 = arith.constant 0 : index
    %c0_46 = arith.constant 0 : index
    %55 = arith.index_cast %54 : i32 to index
    %c0_47 = arith.constant 0 : index
    %c0_48 = arith.constant 0 : index
    %56 = vector.load %arg2[%c0_45, %c0_46, %55, %c0_47, %c0_48] : memref<1x1x10x10x128xbf16, #tpu.memory_space<vmem>>, vector<1x1x8x8x128xbf16>
    %57 = vector.shape_cast %56 : vector<1x1x8x8x128xbf16> to vector<8x8x128xbf16>
    %58 = vector.shape_cast %57 : vector<8x8x128xbf16> to vector<64x128xbf16>
    %c6 = arith.constant 6 : index
    %c0_49 = arith.constant 0 : index
    %c0_50 = arith.constant 0 : index
    %59 = vector.load %arg3[%c6, %c0_49, %c0_50] : memref<9x128x128xbf16, #tpu.memory_space<vmem>>, vector<1x128x128xbf16>
    %60 = vector.shape_cast %59 : vector<1x128x128xbf16> to vector<128x128xbf16>
    %cst_51 = arith.constant dense<0.000000e+00> : vector<64x128xf32>
    %61 = tpu.matmul %58, %60, %cst_51 {dimension_numbers = #tpu.dot_dimension_numbers<[1], [0], [0], [1], [0, 0, 1, 1], [], []>} : vector<64x128xbf16>, vector<128x128xbf16>, vector<64x128xf32> -> vector<64x128xf32>
    %62 = arith.addf %53, %61 : vector<64x128xf32>
    %c2_i32_52 = arith.constant 2 : i32
    %63 = arith.addi %0, %c2_i32_52 : i32
    %c0_53 = arith.constant 0 : index
    %c0_54 = arith.constant 0 : index
    %64 = arith.index_cast %63 : i32 to index
    %c1_55 = arith.constant 1 : index
    %c0_56 = arith.constant 0 : index
    %65 = vector.load %arg2[%c0_53, %c0_54, %64, %c1_55, %c0_56] : memref<1x1x10x10x128xbf16, #tpu.memory_space<vmem>>, vector<1x1x8x8x128xbf16>
    %66 = vector.shape_cast %65 : vector<1x1x8x8x128xbf16> to vector<8x8x128xbf16>
    %67 = vector.shape_cast %66 : vector<8x8x128xbf16> to vector<64x128xbf16>
    %c7 = arith.constant 7 : index
    %c0_57 = arith.constant 0 : index
    %c0_58 = arith.constant 0 : index
    %68 = vector.load %arg3[%c7, %c0_57, %c0_58] : memref<9x128x128xbf16, #tpu.memory_space<vmem>>, vector<1x128x128xbf16>
    %69 = vector.shape_cast %68 : vector<1x128x128xbf16> to vector<128x128xbf16>
    %cst_59 = arith.constant dense<0.000000e+00> : vector<64x128xf32>
    %70 = tpu.matmul %67, %69, %cst_59 {dimension_numbers = #tpu.dot_dimension_numbers<[1], [0], [0], [1], [0, 0, 1, 1], [], []>} : vector<64x128xbf16>, vector<128x128xbf16>, vector<64x128xf32> -> vector<64x128xf32>
    %71 = arith.addf %62, %70 : vector<64x128xf32>
    %c2_i32_60 = arith.constant 2 : i32
    %72 = arith.addi %0, %c2_i32_60 : i32
    %c0_61 = arith.constant 0 : index
    %c0_62 = arith.constant 0 : index
    %73 = arith.index_cast %72 : i32 to index
    %c2_63 = arith.constant 2 : index
    %c0_64 = arith.constant 0 : index
    %74 = vector.load %arg2[%c0_61, %c0_62, %73, %c2_63, %c0_64] : memref<1x1x10x10x128xbf16, #tpu.memory_space<vmem>>, vector<1x1x8x8x128xbf16>
    %75 = vector.shape_cast %74 : vector<1x1x8x8x128xbf16> to vector<8x8x128xbf16>
    %76 = vector.shape_cast %75 : vector<8x8x128xbf16> to vector<64x128xbf16>
    %c8 = arith.constant 8 : index
    %c0_65 = arith.constant 0 : index
    %c0_66 = arith.constant 0 : index
    %77 = vector.load %arg3[%c8, %c0_65, %c0_66] : memref<9x128x128xbf16, #tpu.memory_space<vmem>>, vector<1x128x128xbf16>
    %78 = vector.shape_cast %77 : vector<1x128x128xbf16> to vector<128x128xbf16>
    %cst_67 = arith.constant dense<0.000000e+00> : vector<64x128xf32>
    %79 = tpu.matmul %76, %78, %cst_67 {dimension_numbers = #tpu.dot_dimension_numbers<[1], [0], [0], [1], [0, 0, 1, 1], [], []>} : vector<64x128xbf16>, vector<128x128xbf16>, vector<64x128xf32> -> vector<64x128xf32>
    %80 = arith.addf %71, %79 : vector<64x128xf32>
    %81 = vector.shape_cast %80 : vector<64x128xf32> to vector<8x8x128xf32>
    %82 = arith.truncf %81 : vector<8x8x128xf32> to vector<8x8x128xbf16>
    %c0_68 = arith.constant 0 : index
    %c0_69 = arith.constant 0 : index
    %c0_70 = arith.constant 0 : index
    %c0_71 = arith.constant 0 : index
    %83 = vector.load %arg4[%c0_68, %c0_69, %c0_70, %c0_71] : memref<1x8x8x128xbf16, #tpu.memory_space<vmem>>, vector<1x8x8x128xbf16>
    %84 = vector.shape_cast %83 : vector<1x8x8x128xbf16> to vector<8x8x128xbf16>
    %85 = vector.shape_cast %82 : vector<8x8x128xbf16> to vector<1x8x8x128xbf16>
    tpu.vector_store %arg4[%c0_68, %c0_69, %c0_70, %c0_71], %85 {strides = array<i32>} : memref<1x8x8x128xbf16, #tpu.memory_space<vmem>>, vector<1x8x8x128xbf16>,
    %cst_72 = arith.constant dense<0.000000e+00> : vector<128xf32>
    %86 = vector.multi_reduction <add>, %80, %cst_72 [0] : vector<64x128xf32> to vector<128xf32>
    %87 = vector.shape_cast %86 : vector<128xf32> to vector<1x128xf32>
    %cst_73 = arith.constant 1.562500e-02 : f32
    %88 = vector.broadcast %cst_73 : f32 to vector<1x128xf32>
    %89 = arith.mulf %87, %88 : vector<1x128xf32>
    %90 = vector.broadcast %89 : vector<1x128xf32> to vector<64x128xf32>
    %91 = arith.subf %80, %90 : vector<64x128xf32>
    %92 = arith.mulf %91, %91 : vector<64x128xf32>
    %cst_74 = arith.constant dense<0.000000e+00> : vector<128xf32>
    %93 = vector.multi_reduction <add>, %92, %cst_74 [0] : vector<64x128xf32> to vector<128xf32>
    %94 = vector.shape_cast %93 : vector<128xf32> to vector<1x128xf32>
    %95 = tpu.concatenate %87, %94 in 0 : vector<1x128xf32>, vector<1x128xf32> -> vector<2x128xf32>
    %c0_75 = arith.constant 0 : index
    %c0_76 = arith.constant 0 : index
    %c0_77 = arith.constant 0 : index
    %c0_78 = arith.constant 0 : index
    %96 = vector.load %arg5[%c0_75, %c0_76, %c0_77, %c0_78] : memref<1x1x2x128xf32, #tpu.memory_space<vmem>>, vector<1x1x2x128xf32>
    %97 = vector.shape_cast %96 : vector<1x1x2x128xf32> to vector<2x128xf32>
    %98 = vector.shape_cast %95 : vector<2x128xf32> to vector<1x1x2x128xf32>
    tpu.vector_store %arg5[%c0_75, %c0_76, %c0_77, %c0_78], %98 {strides = array<i32>} : memref<1x1x2x128xf32, #tpu.memory_space<vmem>>, vector<1x1x2x128xf32>,
    return
  }
  func.func @transform_0(%arg0: i32, %arg1: i32) -> (i32, i32, i32, i32, i32) {
    %c0_i32 = arith.constant 0 : i32
    %c0_i32_0 = arith.constant 0 : i32
    %c0_i32_1 = arith.constant 0 : i32
    %c0_i32_2 = arith.constant 0 : i32
    %c0_i32_3 = arith.constant 0 : i32
    return %c0_i32, %arg0, %c0_i32_0, %c0_i32_1, %c0_i32_2 : i32, i32, i32, i32, i32
  }
  func.func @transform_1(%arg0: i32, %arg1: i32) -> (i32, i32, i32) {
    %c0_i32 = arith.constant 0 : i32
    %c0_i32_0 = arith.constant 0 : i32
    %c0_i32_1 = arith.constant 0 : i32
    %c0_i32_2 = arith.constant 0 : i32
    return %c0_i32, %c0_i32_0, %c0_i32_1 : i32, i32, i32
  }
  func.func @transform_2(%arg0: i32, %arg1: i32) -> (i32, i32, i32, i32) {
    %c0_i32 = arith.constant 0 : i32
    %c0_i32_0 = arith.constant 0 : i32
    %c0_i32_1 = arith.constant 0 : i32
    return %arg0, %arg1, %c0_i32, %c0_i32_0 : i32, i32, i32, i32
  }
  func.func @transform_3(%arg0: i32, %arg1: i32) -> (i32, i32, i32, i32) {
    %c0_i32 = arith.constant 0 : i32
    %c0_i32_0 = arith.constant 0 : i32
    %c0_i32_1 = arith.constant 0 : i32
    return %arg0, %arg1, %c0_i32, %c0_i32_0 : i32, i32, i32, i32
  }
}

module attributes {stable_mosaic.version = 11 : i64} {
  func.func @bn_act_res_kernel(%arg0: i32, %arg1: memref<128x128xbf16, #tpu.memory_space<vmem>>, %arg2: memref<1x128xf32, #tpu.memory_space<vmem>>, %arg3: memref<1x128xf32, #tpu.memory_space<vmem>>, %arg4: memref<128x128xbf16, #tpu.memory_space<vmem>>, %arg5: memref<128x128xbf16, #tpu.memory_space<vmem>>) attributes {dimension_semantics = [#tpu.dimension_semantics<parallel>], iteration_bounds = array<i64: 1>, scalar_prefetch = 0 : i64, scratch_operands = 0 : i64, tpu.core_type = #tpu.core_type<tc>, window_params = [{transform_indices = @transform_0, window_bounds = array<i64: 128, 128>}, {pipeline_mode = #tpu.pipeline_mode<synchronous>, transform_indices = @transform_1, window_bounds = array<i64: 1, 128>}, {pipeline_mode = #tpu.pipeline_mode<synchronous>, transform_indices = @transform_2, window_bounds = array<i64: 1, 128>}, {transform_indices = @transform_3, window_bounds = array<i64: 128, 128>}, {transform_indices = @transform_4, window_bounds = array<i64: 128, 128>}]} {
    %c0 = arith.constant 0 : index
    %c0_0 = arith.constant 0 : index
    %0 = vector.load %arg1[%c0, %c0_0] : memref<128x128xbf16, #tpu.memory_space<vmem>>, vector<128x128xbf16>
    %1 = arith.extf %0 : vector<128x128xbf16> to vector<128x128xf32>
    %c0_1 = arith.constant 0 : index
    %c0_2 = arith.constant 0 : index
    %2 = vector.load %arg2[%c0_1, %c0_2] : memref<1x128xf32, #tpu.memory_space<vmem>>, vector<1x128xf32>
    %3 = vector.broadcast %2 : vector<1x128xf32> to vector<128x128xf32>
    %4 = arith.mulf %1, %3 : vector<128x128xf32>
    %c0_3 = arith.constant 0 : index
    %c0_4 = arith.constant 0 : index
    %5 = vector.load %arg3[%c0_3, %c0_4] : memref<1x128xf32, #tpu.memory_space<vmem>>, vector<1x128xf32>
    %6 = vector.broadcast %5 : vector<1x128xf32> to vector<128x128xf32>
    %7 = arith.addf %4, %6 : vector<128x128xf32>
    %cst = arith.constant 0.000000e+00 : f32
    %8 = vector.broadcast %cst : f32 to vector<128x128xf32>
    %9 = arith.cmpf oge, %7, %8 : vector<128x128xf32>
    %cst_5 = arith.constant 1.000000e-01 : f32
    %10 = vector.broadcast %cst_5 : f32 to vector<128x128xf32>
    %11 = arith.mulf %10, %7 : vector<128x128xf32>
    %12 = arith.select %9, %7, %11 : vector<128x128xi1>, vector<128x128xf32>
    %c0_6 = arith.constant 0 : index
    %c0_7 = arith.constant 0 : index
    %13 = vector.load %arg4[%c0_6, %c0_7] : memref<128x128xbf16, #tpu.memory_space<vmem>>, vector<128x128xbf16>
    %14 = arith.extf %13 : vector<128x128xbf16> to vector<128x128xf32>
    %15 = arith.addf %12, %14 : vector<128x128xf32>
    %16 = arith.truncf %15 : vector<128x128xf32> to vector<128x128xbf16>
    %c0_8 = arith.constant 0 : index
    %c0_9 = arith.constant 0 : index
    %17 = vector.load %arg5[%c0_8, %c0_9] : memref<128x128xbf16, #tpu.memory_space<vmem>>, vector<128x128xbf16>
    tpu.vector_store %arg5[%c0_8, %c0_9], %16 {strides = array<i32>} : memref<128x128xbf16, #tpu.memory_space<vmem>>, vector<128x128xbf16>,
    return
  }
  func.func @transform_0(%arg0: i32) -> (i32, i32) {
    %c0_i32 = arith.constant 0 : i32
    %c0_i32_0 = arith.constant 0 : i32
    return %arg0, %c0_i32 : i32, i32
  }
  func.func @transform_1(%arg0: i32) -> (i32, i32) {
    %c0_i32 = arith.constant 0 : i32
    %c0_i32_0 = arith.constant 0 : i32
    %c0_i32_1 = arith.constant 0 : i32
    return %c0_i32, %c0_i32_0 : i32, i32
  }
  func.func @transform_2(%arg0: i32) -> (i32, i32) {
    %c0_i32 = arith.constant 0 : i32
    %c0_i32_0 = arith.constant 0 : i32
    %c0_i32_1 = arith.constant 0 : i32
    return %c0_i32, %c0_i32_0 : i32, i32
  }
  func.func @transform_3(%arg0: i32) -> (i32, i32) {
    %c0_i32 = arith.constant 0 : i32
    %c0_i32_0 = arith.constant 0 : i32
    return %arg0, %c0_i32 : i32, i32
  }
  func.func @transform_4(%arg0: i32) -> (i32, i32) {
    %c0_i32 = arith.constant 0 : i32
    %c0_i32_0 = arith.constant 0 : i32
    return %arg0, %c0_i32 : i32, i32
  }
}

</mosaic_0001>

<llo_original>
// kernel: res_block_forward.7
$region0: #{res_block_forward.7}
  #allocation0 [shape = 'u32[]', space=smem, size = 0x4, offset = 0x4, fixed_abs, tag = 'smem constant byte address 0x4 - core index']
  #allocation1 [shape = 'u32[144,128]{1,0:T(1,128)}', space=vmem, size = 0x12000, scoped, tag = 'internal scratch']
  %s0 = inlined_call_operand.vmem [shape: bf16[128,128], index: 0, kind: input, shape index: {}]
  %s1 = inlined_call_operand.vmem [shape: f32[1,128], index: 1, kind: input, shape index: {}]
  %s2 = inlined_call_operand.vmem [shape: f32[1,128], index: 2, kind: input, shape index: {}]
  %s3 = inlined_call_operand.vmem [shape: bf16[128,128], index: 3, kind: output, shape index: {}]
  %s4 = sld [smem:[#allocation0]]
  $region22: #{res_block_forward.7} parent=0
    _
  %s6 = ssub.s32 1, %s4
  %s7 = scalar_select 0, %s6, %s4
  // Predicated region
  $region2: #{res_block_forward.7} parent=0 // pred_check
    _
  $region3: #{res_block_forward.7} parent=0 // pred_check_branch
    %9 = sbr.rel (0) target = $region5
  $region4: #{res_block_forward.7} parent=0 // pred_region
    _
  $region5: #{res_block_forward.7} parent=0 // pred_fallthru
    _
  // Predicated region
  $region6: #{res_block_forward.7} parent=0 // pred_check
    _
  $region7: #{res_block_forward.7} parent=0 // pred_check_branch
    %11 = sbr.rel (0) target = $region9
  $region8: #{res_block_forward.7} parent=0 // pred_region
    _
  $region9: #{res_block_forward.7} parent=0 // pred_fallthru
    _
  // Predicated region
  $region10: #{res_block_forward.7} parent=0 // pred_check
    _
  $region11: #{res_block_forward.7} parent=0 // pred_check_branch
    %13 = sbr.rel (0) target = $region13
  $region12: #{res_block_forward.7} parent=0 // pred_region
    _
  $region13: #{res_block_forward.7} parent=0 // pred_fallthru
    _
  %v14 = vld [vmem:[%s0] sm:$0xf]
  %v15 = vld [vmem:[%s0 + $0x4] sm:$0xf]
  %v16 = vld [vmem:[%s0 + $0x8] sm:$0xf]
  %v17 = vld [vmem:[%s0 + $0xc] sm:$0xf]
  %v18 = vld [vmem:[%s0 + $0x10] sm:$0xf]
  %v19 = vld [vmem:[%s0 + $0x14] sm:$0xf]
  %v20 = vld [vmem:[%s0 + $0x18] sm:$0xf]
  %v21 = vld [vmem:[%s0 + $0x1c] sm:$0xf]
  %v22 = vld [vmem:[%s0 + $0x20] sm:$0xf]
  %v23 = vld [vmem:[%s0 + $0x24] sm:$0xf]
  %v24 = vld [vmem:[%s0 + $0x28] sm:$0xf]
  %v25 = vld [vmem:[%s0 + $0x2c] sm:$0xf]
  %v26 = vld [vmem:[%s0 + $0x30] sm:$0xf]
  %v27 = vld [vmem:[%s0 + $0x34] sm:$0xf]
  %v28 = vld [vmem:[%s0 + $0x38] sm:$0xf]
  %v29 = vld [vmem:[%s0 + $0x3c] sm:$0xf]
  %v30 = vunpack.c.l.bf16 %v14
  %v31 = vunpack.c.l.bf16 %v15
  %v32 = vunpack.c.l.bf16 %v16
  %v33 = vunpack.c.l.bf16 %v17
  %v34 = vunpack.c.l.bf16 %v18
  %v35 = vunpack.c.l.bf16 %v19
  %v36 = vunpack.c.l.bf16 %v20
  %v37 = vunpack.c.l.bf16 %v21
  %v38 = vunpack.c.l.bf16 %v22
  %v39 = vunpack.c.l.bf16 %v23
  %v40 = vunpack.c.l.bf16 %v24
  %v41 = vunpack.c.l.bf16 %v25
  %v42 = vunpack.c.l.bf16 %v26
  %v43 = vunpack.c.l.bf16 %v27
  %v44 = vunpack.c.l.bf16 %v28
  %v45 = vunpack.c.l.bf16 %v29
  %v46 = vld [vmem:[%s1] sm:$0x1]
  %v48 = vlaneseq
  %v49 = vshrl.u32 %v48, 7
  %v50 = vsub.s32 0, %v49
  %v51 = vrot.slane %v46, %v50
  %v53 = vmul.f32 %v30, %v51
  %v54 = vmul.f32 %v31, %v51
  %v55 = vmul.f32 %v32, %v51
  %v56 = vmul.f32 %v33, %v51
  %v57 = vmul.f32 %v34, %v51
  %v58 = vmul.f32 %v35, %v51
  %v59 = vmul.f32 %v36, %v51
  %v60 = vmul.f32 %v37, %v51
  %v61 = vmul.f32 %v38, %v51
  %v62 = vmul.f32 %v39, %v51
  %v63 = vmul.f32 %v40, %v51
  %v64 = vmul.f32 %v41, %v51
  %v65 = vmul.f32 %v42, %v51
  %v66 = vmul.f32 %v43, %v51
  %v67 = vmul.f32 %v44, %v51
  %v68 = vmul.f32 %v45, %v51
  %v69 = vld [vmem:[%s2] sm:$0x1]
  %v71 = vlaneseq
  %v72 = vshrl.u32 %v71, 7
  %v73 = vsub.s32 0, %v72
  %v74 = vrot.slane %v69, %v73
  %v76 = vadd.f32 %v53, %v74
  %v77 = vadd.f32 %v54, %v74
  %v78 = vadd.f32 %v55, %v74
  %v79 = vadd.f32 %v56, %v74
  %v80 = vadd.f32 %v57, %v74
  %v81 = vadd.f32 %v58, %v74
  %v82 = vadd.f32 %v59, %v74
  %v83 = vadd.f32 %v60, %v74
  %v84 = vadd.f32 %v61, %v74
  %v85 = vadd.f32 %v62, %v74
  %v86 = vadd.f32 %v63, %v74
  %v87 = vadd.f32 %v64, %v74
  %v88 = vadd.f32 %v65, %v74
  %v89 = vadd.f32 %v66, %v74
  %v90 = vadd.f32 %v67, %v74
  %v91 = vadd.f32 %v68, %v74
  %vm92 = vcmp.ge.f32.partialorder %v76, 0.0
  %vm93 = vcmp.ge.f32.partialorder %v77, 0.0
  %vm94 = vcmp.ge.f32.partialorder %v78, 0.0
  %vm95 = vcmp.ge.f32.partialorder %v79, 0.0
  %vm96 = vcmp.ge.f32.partialorder %v80, 0.0
  %vm97 = vcmp.ge.f32.partialorder %v81, 0.0
  %vm98 = vcmp.ge.f32.partialorder %v82, 0.0
  %vm99 = vcmp.ge.f32.partialorder %v83, 0.0
  %vm100 = vcmp.ge.f32.partialorder %v84, 0.0
  %vm101 = vcmp.ge.f32.partialorder %v85, 0.0
  %vm102 = vcmp.ge.f32.partialorder %v86, 0.0
  %vm103 = vcmp.ge.f32.partialorder %v87, 0.0
  %vm104 = vcmp.ge.f32.partialorder %v88, 0.0
  %vm105 = vcmp.ge.f32.partialorder %v89, 0.0
  %vm106 = vcmp.ge.f32.partialorder %v90, 0.0
  %vm107 = vcmp.ge.f32.partialorder %v91, 0.0
  %v108 = vmul.f32 %v76, 0.1
  %v109 = vmul.f32 %v77, 0.1
  %v110 = vmul.f32 %v78, 0.1
  %v111 = vmul.f32 %v79, 0.1
  %v112 = vmul.f32 %v80, 0.1
  %v113 = vmul.f32 %v81, 0.1
  %v114 = vmul.f32 %v82, 0.1
  %v115 = vmul.f32 %v83, 0.1
  %v116 = vmul.f32 %v84, 0.1
  %v117 = vmul.f32 %v85, 0.1
  %v118 = vmul.f32 %v86, 0.1
  %v119 = vmul.f32 %v87, 0.1
  %v120 = vmul.f32 %v88, 0.1
  %v121 = vmul.f32 %v89, 0.1
  %v122 = vmul.f32 %v90, 0.1
  %v123 = vmul.f32 %v91, 0.1
  %v124 = vsel %vm92, %v76, %v108
  %v125 = vsel %vm93, %v77, %v109
  %v126 = vsel %vm94, %v78, %v110
  %v127 = vsel %vm95, %v79, %v111
  %v128 = vsel %vm96, %v80, %v112
  %v129 = vsel %vm97, %v81, %v113
  %v130 = vsel %vm98, %v82, %v114
  %v131 = vsel %vm99, %v83, %v115
  %v132 = vsel %vm100, %v84, %v116
  %v133 = vsel %vm101, %v85, %v117
  %v134 = vsel %vm102, %v86, %v118
  %v135 = vsel %vm103, %v87, %v119
  %v136 = vsel %vm104, %v88, %v120
  %v137 = vsel %vm105, %v89, %v121
  %v138 = vsel %vm106, %v90, %v122
  %v139 = vsel %vm107, %v91, %v123
  %v140 = vpack.c.bf16 %v125, %v124
  %v141 = vpack.c.bf16 %v127, %v126
  %v142 = vpack.c.bf16 %v129, %v128
  %v143 = vpack.c.bf16 %v131, %v130
  %v144 = vpack.c.bf16 %v133, %v132
  %v145 = vpack.c.bf16 %v135, %v134
  %v146 = vpack.c.bf16 %v137, %v136
  %v147 = vpack.c.bf16 %v139, %v138
  %v156 = vunpack.c.l.b16 %v140
  %v157 = vunpack.c.h.b16 %v140
  %v158 = vunpack.c.l.b16 %v141
  %v159 = vunpack.c.h.b16 %v141
  %v160 = vunpack.c.l.b16 %v142
  %v161 = vunpack.c.h.b16 %v142
  %v162 = vunpack.c.l.b16 %v143
  %v163 = vunpack.c.h.b16 %v143
  %v164 = vunpack.c.l.b16 %v144
  %v165 = vunpack.c.h.b16 %v144
  %v166 = vunpack.c.l.b16 %v145
  %v167 = vunpack.c.h.b16 %v145
  %v168 = vunpack.c.l.b16 %v146
  %v169 = vunpack.c.h.b16 %v146
  %v170 = vunpack.c.l.b16 %v147
  %v171 = vunpack.c.h.b16 %v147
  %v172 = vpack.c.b16 %v156, %v156
  %v173 = vpack.c.b16 %v157, %v157
  %v174 = vpack.c.b16 %v158, %v158
  %v175 = vpack.c.b16 %v159, %v159
  %v176 = vpack.c.b16 %v160, %v160
  %v177 = vpack.c.b16 %v161, %v161
  %v178 = vpack.c.b16 %v162, %v162
  %v179 = vpack.c.b16 %v163, %v163
  %v180 = vpack.c.b16 %v164, %v164
  %v181 = vpack.c.b16 %v165, %v165
  %v182 = vpack.c.b16 %v166, %v166
  %v183 = vpack.c.b16 %v167, %v167
  %v184 = vpack.c.b16 %v168, %v168
  %v185 = vpack.c.b16 %v169, %v169
  %v186 = vpack.c.b16 %v170, %v170
  %v187 = vpack.c.b16 %v171, %v171
  %204 = vst [vmem:[%s3] sm:$0xf] %v172
  %205 = vst [vmem:[%s3 + $0x4] sm:$0xf] %v173
  %206 = vst [vmem:[%s3 + $0x8] sm:$0xf] %v174
  %207 = vst [vmem:[%s3 + $0xc] sm:$0xf] %v175
  %208 = vst [vmem:[%s3 + $0x10] sm:$0xf] %v176
  %209 = vst [vmem:[%s3 + $0x14] sm:$0xf] %v177
  %210 = vst [vmem:[%s3 + $0x18] sm:$0xf] %v178
  %211 = vst [vmem:[%s3 + $0x1c] sm:$0xf] %v179
  %212 = vst [vmem:[%s3 + $0x20] sm:$0xf] %v180
  %213 = vst [vmem:[%s3 + $0x24] sm:$0xf] %v181
  %214 = vst [vmem:[%s3 + $0x28] sm:$0xf] %v182
  %215 = vst [vmem:[%s3 + $0x2c] sm:$0xf] %v183
  %216 = vst [vmem:[%s3 + $0x30] sm:$0xf] %v184
  %217 = vst [vmem:[%s3 + $0x34] sm:$0xf] %v185
  %218 = vst [vmem:[%s3 + $0x38] sm:$0xf] %v186
  %219 = vst [vmem:[%s3 + $0x3c] sm:$0xf] %v187
  // Predicated region
  $region14: #{res_block_forward.7} parent=0 // pred_check
    _
  $region15: #{res_block_forward.7} parent=0 // pred_check_branch
    %221 = sbr.rel (0) target = $region17
  $region16: #{res_block_forward.7} parent=0 // pred_region
    _
  $region17: #{res_block_forward.7} parent=0 // pred_fallthru
    _
  // Predicated region
  $region18: #{res_block_forward.7} parent=0 // pred_check
    _
  $region19: #{res_block_forward.7} parent=0 // pred_check_branch
    %223 = sbr.rel (0) target = $region21
  $region20: #{res_block_forward.7} parent=0 // pred_region
    _
  $region21: #{res_block_forward.7} parent=0 // pred_fallthru
    _

// kernel: res_block_forward.8
$region0: #{res_block_forward.8}
  #allocation0 [shape = 'u32[]', space=smem, size = 0x4, offset = 0x4, fixed_abs, tag = 'smem constant byte address 0x4 - core index']
  #allocation1 [shape = 'u32[144,128]{1,0:T(1,128)}', space=vmem, size = 0x12000, scoped, tag = 'internal scratch']
  %s0 = inlined_call_operand.vmem [shape: bf16[128,128], index: 0, kind: input, shape index: {}]
  %s1 = inlined_call_operand.vmem [shape: bf16[128,128], index: 1, kind: input, shape index: {}]
  %s2 = inlined_call_operand.vmem [shape: bf16[128,128], index: 2, kind: output, shape index: {0}]
  %s3 = inlined_call_operand.vmem [shape: f32[1,2,128], index: 3, kind: output, shape index: {1}]
  %4 = xla_tuple %s2, %s3
  %s5 = sld [smem:[#allocation0]]
  $region26: #{res_block_forward.8} parent=0
    _
  %s7 = ssub.s32 1, %s5
  %s8 = scalar_select 0, %s7, %s5
  // Predicated region
  $region2: #{res_block_forward.8} parent=0 // pred_check
    _
  $region3: #{res_block_forward.8} parent=0 // pred_check_branch
    %10 = sbr.rel (0) target = $region5
  $region4: #{res_block_forward.8} parent=0 // pred_region
    _
  $region5: #{res_block_forward.8} parent=0 // pred_fallthru
    _
  // Predicated region
  $region6: #{res_block_forward.8} parent=0 // pred_check
    _
  $region7: #{res_block_forward.8} parent=0 // pred_check_branch
    %12 = sbr.rel (0) target = $region9
  $region8: #{res_block_forward.8} parent=0 // pred_region
    _
  $region9: #{res_block_forward.8} parent=0 // pred_fallthru
    _
  %v14 = vld [vmem:[%s0] sm:$0xf]
  %v15 = vld [vmem:[%s0 + $0x4] sm:$0xf]
  %v16 = vld [vmem:[%s0 + $0x8] sm:$0xf]
  %v17 = vld [vmem:[%s0 + $0xc] sm:$0xf]
  %v18 = vld [vmem:[%s0 + $0x10] sm:$0xf]
  %v19 = vld [vmem:[%s0 + $0x14] sm:$0xf]
  %v20 = vld [vmem:[%s0 + $0x18] sm:$0xf]
  %v21 = vld [vmem:[%s0 + $0x1c] sm:$0xf]
  %v22 = vld [vmem:[%s0 + $0x20] sm:$0xf]
  %v23 = vld [vmem:[%s0 + $0x24] sm:$0xf]
  %v24 = vld [vmem:[%s0 + $0x28] sm:$0xf]
  %v25 = vld [vmem:[%s0 + $0x2c] sm:$0xf]
  %v26 = vld [vmem:[%s0 + $0x30] sm:$0xf]
  %v27 = vld [vmem:[%s0 + $0x34] sm:$0xf]
  %v28 = vld [vmem:[%s0 + $0x38] sm:$0xf]
  %v29 = vld [vmem:[%s0 + $0x3c] sm:$0xf]
  %v30 = vld [vmem:[%s1] sm:$0xf]
  %v31 = vld [vmem:[%s1 + $0x4] sm:$0xf]
  %v32 = vld [vmem:[%s1 + $0x8] sm:$0xf]
  %v33 = vld [vmem:[%s1 + $0xc] sm:$0xf]
  %v34 = vld [vmem:[%s1 + $0x10] sm:$0xf]
  %v35 = vld [vmem:[%s1 + $0x14] sm:$0xf]
  %v36 = vld [vmem:[%s1 + $0x18] sm:$0xf]
  %v37 = vld [vmem:[%s1 + $0x1c] sm:$0xf]
  %v38 = vld [vmem:[%s1 + $0x20] sm:$0xf]
  %v39 = vld [vmem:[%s1 + $0x24] sm:$0xf]
  %v40 = vld [vmem:[%s1 + $0x28] sm:$0xf]
  %v41 = vld [vmem:[%s1 + $0x2c] sm:$0xf]
  %v42 = vld [vmem:[%s1 + $0x30] sm:$0xf]
  %v43 = vld [vmem:[%s1 + $0x34] sm:$0xf]
  %v44 = vld [vmem:[%s1 + $0x38] sm:$0xf]
  %v45 = vld [vmem:[%s1 + $0x3c] sm:$0xf]
  %v62 = vunpack.c.l.b16 %v14
  %v63 = vunpack.c.l.b16 %v15
  %v64 = vunpack.c.l.b16 %v16
  %v65 = vunpack.c.l.b16 %v17
  %v66 = vunpack.c.l.b16 %v18
  %v67 = vunpack.c.l.b16 %v19
  %v68 = vunpack.c.l.b16 %v20
  %v69 = vunpack.c.l.b16 %v21
  %v70 = vunpack.c.l.b16 %v22
  %v71 = vunpack.c.l.b16 %v23
  %v72 = vunpack.c.l.b16 %v24
  %v73 = vunpack.c.l.b16 %v25
  %v74 = vunpack.c.l.b16 %v26
  %v75 = vunpack.c.l.b16 %v27
  %v76 = vunpack.c.l.b16 %v28
  %v77 = vunpack.c.l.b16 %v29
  %v78 = vpack.c.b16 %v63, %v62
  %v79 = vpack.c.b16 %v65, %v64
  %v80 = vpack.c.b16 %v67, %v66
  %v81 = vpack.c.b16 %v69, %v68
  %v82 = vpack.c.b16 %v71, %v70
  %v83 = vpack.c.b16 %v73, %v72
  %v84 = vpack.c.b16 %v75, %v74
  %v85 = vpack.c.b16 %v77, %v76
  %v110 = vunpack.c.l.b16 %v30
  %v111 = vunpack.c.l.b16 %v31
  %v112 = vunpack.c.l.b16 %v32
  %v113 = vunpack.c.l.b16 %v33
  %v114 = vunpack.c.l.b16 %v34
  %v115 = vunpack.c.l.b16 %v35
  %v116 = vunpack.c.l.b16 %v36
  %v117 = vunpack.c.l.b16 %v37
  %v118 = vunpack.c.l.b16 %v38
  %v119 = vunpack.c.l.b16 %v39
  %v120 = vunpack.c.l.b16 %v40
  %v121 = vunpack.c.l.b16 %v41
  %v122 = vunpack.c.l.b16 %v42
  %v123 = vunpack.c.l.b16 %v43
  %v124 = vunpack.c.l.b16 %v44
  %v125 = vunpack.c.l.b16 %v45
  %v126 = vpack.c.b16 %v111, %v110
  %v127 = vpack.c.b16 %v113, %v112
  %v128 = vpack.c.b16 %v115, %v114
  %v129 = vpack.c.b16 %v117, %v116
  %v130 = vpack.c.b16 %v119, %v118
  %v131 = vpack.c.b16 %v121, %v120
  %v132 = vpack.c.b16 %v123, %v122
  %v133 = vpack.c.b16 %v125, %v124
  %142 = vmatprep.subr.bf16.mxu0 0
  %143 = vmatpush1.bf16.msra.mxu0 %v126
  %144 = vmatprep.subr.bf16.mxu0 0
  %145 = vmatpush1.bf16.msra.mxu0 %v127
  %146 = vmatprep.subr.bf16.mxu0 0
  %147 = vmatpush1.bf16.msra.mxu0 %v128
  %148 = vmatprep.subr.bf16.mxu0 0
  %149 = vmatpush1.bf16.msra.mxu0 %v129
  %150 = vmatprep.subr.bf16.mxu0 0
  %151 = vmatpush1.bf16.msra.mxu0 %v130
  %152 = vmatprep.subr.bf16.mxu0 0
  %153 = vmatpush1.bf16.msra.mxu0 %v131
  %154 = vmatprep.subr.bf16.mxu0 0
  %155 = vmatpush1.bf16.msra.mxu0 %v132
  %156 = vmatprep.subr.bf16.mxu0 0
  %157 = vmatpush1.bf16.msra.mxu0 %v133
  %158 = vmatprep.subr.bf16.mxu0 0
  %159 = vmatpush1.bf16.msra.mxu0 0
  %160 = vmatprep.subr.bf16.mxu0 0
  %161 = vmatpush1.bf16.msra.mxu0 0
  %162 = vmatprep.subr.bf16.mxu0 0
  %163 = vmatpush1.bf16.msra.mxu0 0
  %164 = vmatprep.subr.bf16.mxu0 0
  %165 = vmatpush1.bf16.msra.mxu0 0
  %166 = vmatprep.subr.bf16.mxu0 0
  %167 = vmatpush1.bf16.msra.mxu0 0
  %168 = vmatprep.subr.bf16.mxu0 0
  %169 = vmatpush1.bf16.msra.mxu0 0
  %170 = vmatprep.subr.bf16.mxu0 0
  %171 = vmatpush1.bf16.msra.mxu0 0
  %172 = vmatprep.subr.bf16.mxu0 0
  %173 = vmatpush1.bf16.msra.mxu0 0
  %174 = vmatprep.mubr.bf16.mxu0 0
  %175 = vmatmul.mubr.bf16.gmra.mrb[0].mxu0 %v78
  %v176 = vpop.f32.mrb[0].mxu0
  %v177 = vadd.f32 0.0, %v176
  %v178 = vpop.f32.mrb[0].mxu0
  %v179 = vpop.f32.mrb[0].mxu0
  %v180 = vadd.f32 0.0, %v179
  %v181 = vpop.f32.mrb[0].mxu0
  %182 = vmatprep.mubr.bf16.mxu0 0
  %183 = vmatmul.mubr.bf16.gmra.mrb[0].mxu0 %v79
  %v184 = vpop.f32.mrb[0].mxu0
  %v185 = vadd.f32 0.0, %v184
  %v186 = vpop.f32.mrb[0].mxu0
  %v187 = vpop.f32.mrb[0].mxu0
  %v188 = vadd.f32 0.0, %v187
  %v189 = vpop.f32.mrb[0].mxu0
  %190 = vmatprep.mubr.bf16.mxu0 0
  %191 = vmatmul.mubr.bf16.gmra.mrb[0].mxu0 %v80
  %v192 = vpop.f32.mrb[0].mxu0
  %v193 = vadd.f32 0.0, %v192
  %v194 = vpop.f32.mrb[0].mxu0
  %v195 = vpop.f32.mrb[0].mxu0
  %v196 = vadd.f32 0.0, %v195
  %v197 = vpop.f32.mrb[0].mxu0
  %198 = vmatprep.mubr.bf16.mxu0 0
  %199 = vmatmul.mubr.bf16.gmra.mrb[0].mxu0 %v81
  %v200 = vpop.f32.mrb[0].mxu0
  %v201 = vadd.f32 0.0, %v200
  %v202 = vpop.f32.mrb[0].mxu0
  %v203 = vpop.f32.mrb[0].mxu0
  %v204 = vadd.f32 0.0, %v203
  %v205 = vpop.f32.mrb[0].mxu0
  %206 = vmatprep.mubr.bf16.mxu0 0
  %207 = vmatmul.mubr.bf16.gmra.mrb[0].mxu0 %v82
  %v208 = vpop.f32.mrb[0].mxu0
  %v209 = vadd.f32 0.0, %v208
  %v210 = vpop.f32.mrb[0].mxu0
  %v211 = vpop.f32.mrb[0].mxu0
  %v212 = vadd.f32 0.0, %v211
  %v213 = vpop.f32.mrb[0].mxu0
  %214 = vmatprep.mubr.bf16.mxu0 0
  %215 = vmatmul.mubr.bf16.gmra.mrb[0].mxu0 %v83
  %v216 = vpop.f32.mrb[0].mxu0
  %v217 = vadd.f32 0.0, %v216
  %v218 = vpop.f32.mrb[0].mxu0
  %v219 = vpop.f32.mrb[0].mxu0
  %v220 = vadd.f32 0.0, %v219
  %v221 = vpop.f32.mrb[0].mxu0
  %222 = vmatprep.mubr.bf16.mxu0 0
  %223 = vmatmul.mubr.bf16.gmra.mrb[0].mxu0 %v84
  %v224 = vpop.f32.mrb[0].mxu0
  %v225 = vadd.f32 0.0, %v224
  %v226 = vpop.f32.mrb[0].mxu0
  %v227 = vpop.f32.mrb[0].mxu0
  %v228 = vadd.f32 0.0, %v227
  %v229 = vpop.f32.mrb[0].mxu0
  %230 = vmatprep.mubr.bf16.mxu0 0
  %231 = vmatmul.mubr.bf16.gmra.mrb[0].mxu0 %v85
  %v232 = vpop.f32.mrb[0].mxu0
  %v233 = vadd.f32 0.0, %v232
  %v234 = vpop.f32.mrb[0].mxu0
  %v235 = vpop.f32.mrb[0].mxu0
  %v236 = vadd.f32 0.0, %v235
  %v237 = vpop.f32.mrb[0].mxu0
  %238 = vdwg.mxu0
  %v239 = vpack.c.bf16 %v180, %v177
  %v240 = vpack.c.bf16 %v188, %v185
  %v241 = vpack.c.bf16 %v196, %v193
  %v242 = vpack.c.bf16 %v204, %v201
  %v243 = vpack.c.bf16 %v212, %v209
  %v244 = vpack.c.bf16 %v220, %v217
  %v245 = vpack.c.bf16 %v228, %v225
  %v246 = vpack.c.bf16 %v236, %v233
  %v255 = vunpack.c.l.b16 %v239
  %v256 = vunpack.c.h.b16 %v239
  %v257 = vunpack.c.l.b16 %v240
  %v258 = vunpack.c.h.b16 %v240
  %v259 = vunpack.c.l.b16 %v241
  %v260 = vunpack.c.h.b16 %v241
  %v261 = vunpack.c.l.b16 %v242
  %v262 = vunpack.c.h.b16 %v242
  %v263 = vunpack.c.l.b16 %v243
  %v264 = vunpack.c.h.b16 %v243
  %v265 = vunpack.c.l.b16 %v244
  %v266 = vunpack.c.h.b16 %v244
  %v267 = vunpack.c.l.b16 %v245
  %v268 = vunpack.c.h.b16 %v245
  %v269 = vunpack.c.l.b16 %v246
  %v270 = vunpack.c.h.b16 %v246
  %v271 = vpack.c.b16 %v255, %v255
  %v272 = vpack.c.b16 %v256, %v256
  %v273 = vpack.c.b16 %v257, %v257
  %v274 = vpack.c.b16 %v258, %v258
  %v275 = vpack.c.b16 %v259, %v259
  %v276 = vpack.c.b16 %v260, %v260
  %v277 = vpack.c.b16 %v261, %v261
  %v278 = vpack.c.b16 %v262, %v262
  %v279 = vpack.c.b16 %v263, %v263
  %v280 = vpack.c.b16 %v264, %v264
  %v281 = vpack.c.b16 %v265, %v265
  %v282 = vpack.c.b16 %v266, %v266
  %v283 = vpack.c.b16 %v267, %v267
  %v284 = vpack.c.b16 %v268, %v268
  %v285 = vpack.c.b16 %v269, %v269
  %v286 = vpack.c.b16 %v270, %v270
  %303 = vst [vmem:[%s2] sm:$0xf] %v271
  %304 = vst [vmem:[%s2 + $0x4] sm:$0xf] %v272
  %305 = vst [vmem:[%s2 + $0x8] sm:$0xf] %v273
  %306 = vst [vmem:[%s2 + $0xc] sm:$0xf] %v274
  %307 = vst [vmem:[%s2 + $0x10] sm:$0xf] %v275
  %308 = vst [vmem:[%s2 + $0x14] sm:$0xf] %v276
  %309 = vst [vmem:[%s2 + $0x18] sm:$0xf] %v277
  %310 = vst [vmem:[%s2 + $0x1c] sm:$0xf] %v278
  %311 = vst [vmem:[%s2 + $0x20] sm:$0xf] %v279
  %312 = vst [vmem:[%s2 + $0x24] sm:$0xf] %v280
  %313 = vst [vmem:[%s2 + $0x28] sm:$0xf] %v281
  %314 = vst [vmem:[%s2 + $0x2c] sm:$0xf] %v282
  %315 = vst [vmem:[%s2 + $0x30] sm:$0xf] %v283
  %316 = vst [vmem:[%s2 + $0x34] sm:$0xf] %v284
  %317 = vst [vmem:[%s2 + $0x38] sm:$0xf] %v285
  %318 = vst [vmem:[%s2 + $0x3c] sm:$0xf] %v286
  %v319 = vadd.f32 %v177, %v180
  %v320 = vadd.f32 %v319, %v185
  %v321 = vadd.f32 %v320, %v188
  %v322 = vadd.f32 %v321, %v193
  %v323 = vadd.f32 %v322, %v196
  %v324 = vadd.f32 %v323, %v201
  %v325 = vadd.f32 %v324, %v204
  %v326 = vadd.f32 %v325, %v209
  %v327 = vadd.f32 %v326, %v212
  %v328 = vadd.f32 %v327, %v217
  %v329 = vadd.f32 %v328, %v220
  %v330 = vadd.f32 %v329, %v225
  %v331 = vadd.f32 %v330, %v228
  %v332 = vadd.f32 %v331, %v233
  %v333 = vadd.f32 %v332, %v236
  %v334 = vrot.slane %v333, 4
  %v335 = vadd.f32 %v333, %v334
  %v336 = vrot.slane %v335, 2
  %v337 = vadd.f32 %v335, %v336
  %v338 = vrot.slane %v337, 1
  %v339 = vadd.f32 %v337, %v338
  %v340 = vmul.f32 %v339, 0.0078125
  %v341 = vsub.f32 %v177, %v340
  %v342 = vsub.f32 %v180, %v340
  %v343 = vsub.f32 %v185, %v340
  %v344 = vsub.f32 %v188, %v340
  %v345 = vsub.f32 %v193, %v340
  %v346 = vsub.f32 %v196, %v340
  %v347 = vsub.f32 %v201, %v340
  %v348 = vsub.f32 %v204, %v340
  %v349 = vsub.f32 %v209, %v340
  %v350 = vsub.f32 %v212, %v340
  %v351 = vsub.f32 %v217, %v340
  %v352 = vsub.f32 %v220, %v340
  %v353 = vsub.f32 %v225, %v340
  %v354 = vsub.f32 %v228, %v340
  %v355 = vsub.f32 %v233, %v340
  %v356 = vsub.f32 %v236, %v340
  %v357 = vmul.f32 %v341, %v341
  %v358 = vmul.f32 %v342, %v342
  %v359 = vmul.f32 %v343, %v343
  %v360 = vmul.f32 %v344, %v344
  %v361 = vmul.f32 %v345, %v345
  %v362 = vmul.f32 %v346, %v346
  %v363 = vmul.f32 %v347, %v347
  %v364 = vmul.f32 %v348, %v348
  %v365 = vmul.f32 %v349, %v349
  %v366 = vmul.f32 %v350, %v350
  %v367 = vmul.f32 %v351, %v351
  %v368 = vmul.f32 %v352, %v352
  %v369 = vmul.f32 %v353, %v353
  %v370 = vmul.f32 %v354, %v354
  %v371 = vmul.f32 %v355, %v355
  %v372 = vmul.f32 %v356, %v356
  %v373 = vadd.f32 %v357, %v358
  %v374 = vadd.f32 %v373, %v359
  %v375 = vadd.f32 %v374, %v360
  %v376 = vadd.f32 %v375, %v361
  %v377 = vadd.f32 %v376, %v362
  %v378 = vadd.f32 %v377, %v363
  %v379 = vadd.f32 %v378, %v364
  %v380 = vadd.f32 %v379, %v365
  %v381 = vadd.f32 %v380, %v366
  %v382 = vadd.f32 %v381, %v367
  %v383 = vadd.f32 %v382, %v368
  %v384 = vadd.f32 %v383, %v369
  %v385 = vadd.f32 %v384, %v370
  %v386 = vadd.f32 %v385, %v371
  %v387 = vadd.f32 %v386, %v372
  %v388 = vrot.slane %v387, 4
  %v389 = vadd.f32 %v387, %v388
  %v390 = vrot.slane %v389, 2
  %v391 = vadd.f32 %v389, %v390
  %v392 = vrot.slane %v391, 1
  %v393 = vadd.f32 %v391, %v392
  %vm394 = vcmask 1040384
  %v395 = vsel %vm394, %v339, %v393
  %396 = vst [vmem:[%s3] sm:$0x3] %v395
  // Predicated region
  $region10: #{res_block_forward.8} parent=0 // pred_check
    _
  $region11: #{res_block_forward.8} parent=0 // pred_check_branch
    %398 = sbr.rel (0) target = $region13
  $region12: #{res_block_forward.8} parent=0 // pred_region
    _
  $region13: #{res_block_forward.8} parent=0 // pred_fallthru
    _
  // Predicated region
  $region14: #{res_block_forward.8} parent=0 // pred_check
    _
  $region15: #{res_block_forward.8} parent=0 // pred_check_branch
    %400 = sbr.rel (0) target = $region17
  $region16: #{res_block_forward.8} parent=0 // pred_region
    _
  $region17: #{res_block_forward.8} parent=0 // pred_fallthru
    _
  // Predicated region
  $region18: #{res_block_forward.8} parent=0 // pred_check
    _
  $region19: #{res_block_forward.8} parent=0 // pred_check_branch
    %402 = sbr.rel (0) target = $region21
  $region20: #{res_block_forward.8} parent=0 // pred_region
    _
  $region21: #{res_block_forward.8} parent=0 // pred_fallthru
    _
  // Predicated region
  $region22: #{res_block_forward.8} parent=0 // pred_check
    _
  $region23: #{res_block_forward.8} parent=0 // pred_check_branch
    %404 = sbr.rel (0) target = $region25
  $region24: #{res_block_forward.8} parent=0 // pred_region
    _
  $region25: #{res_block_forward.8} parent=0 // pred_fallthru
    _

// kernel: res_block_forward.11
$region0: #{res_block_forward.11}
  #allocation0 [shape = 'u32[]', space=smem, size = 0x4, offset = 0x4, fixed_abs, tag = 'smem constant byte address 0x4 - core index']
  #allocation1 [shape = 'u32[144,128]{1,0:T(1,128)}', space=vmem, size = 0x12000, scoped, tag = 'internal scratch']
  %s0 = inlined_call_operand.vmem [shape: bf16[128,128], index: 0, kind: input, shape index: {}]
  %s1 = inlined_call_operand.vmem [shape: f32[1,128], index: 1, kind: input, shape index: {}]
  %s2 = inlined_call_operand.vmem [shape: f32[1,128], index: 2, kind: input, shape index: {}]
  %s3 = inlined_call_operand.vmem [shape: bf16[128,128], index: 3, kind: input, shape index: {}, may-alias: {3,4}]
  %s4 = inlined_call_operand.vmem [shape: bf16[128,128], index: 4, kind: output, shape index: {}, may-alias: {3,4}]
  %s5 = sld [smem:[#allocation0]]
  $region26: #{res_block_forward.11} parent=0
    _
  %s7 = ssub.s32 1, %s5
  %s8 = scalar_select 0, %s7, %s5
  // Predicated region
  $region2: #{res_block_forward.11} parent=0 // pred_check
    _
  $region3: #{res_block_forward.11} parent=0 // pred_check_branch
    %10 = sbr.rel (0) target = $region5
  $region4: #{res_block_forward.11} parent=0 // pred_region
    _
  $region5: #{res_block_forward.11} parent=0 // pred_fallthru
    _
  // Predicated region
  $region6: #{res_block_forward.11} parent=0 // pred_check
    _
  $region7: #{res_block_forward.11} parent=0 // pred_check_branch
    %12 = sbr.rel (0) target = $region9
  $region8: #{res_block_forward.11} parent=0 // pred_region
    _
  $region9: #{res_block_forward.11} parent=0 // pred_fallthru
    _
  // Predicated region
  $region10: #{res_block_forward.11} parent=0 // pred_check
    _
  $region11: #{res_block_forward.11} parent=0 // pred_check_branch
    %14 = sbr.rel (0) target = $region13
  $region12: #{res_block_forward.11} parent=0 // pred_region
    _
  $region13: #{res_block_forward.11} parent=0 // pred_fallthru
    _
  // Predicated region
  $region14: #{res_block_forward.11} parent=0 // pred_check
    _
  $region15: #{res_block_forward.11} parent=0 // pred_check_branch
    %16 = sbr.rel (0) target = $region17
  $region16: #{res_block_forward.11} parent=0 // pred_region
    _
  $region17: #{res_block_forward.11} parent=0 // pred_fallthru
    _
  %v17 = vld [vmem:[%s0] sm:$0xf]
  %v18 = vld [vmem:[%s0 + $0x4] sm:$0xf]
  %v19 = vld [vmem:[%s0 + $0x8] sm:$0xf]
  %v20 = vld [vmem:[%s0 + $0xc] sm:$0xf]
  %v21 = vld [vmem:[%s0 + $0x10] sm:$0xf]
  %v22 = vld [vmem:[%s0 + $0x14] sm:$0xf]
  %v23 = vld [vmem:[%s0 + $0x18] sm:$0xf]
  %v24 = vld [vmem:[%s0 + $0x1c] sm:$0xf]
  %v25 = vld [vmem:[%s0 + $0x20] sm:$0xf]
  %v26 = vld [vmem:[%s0 + $0x24] sm:$0xf]
  %v27 = vld [vmem:[%s0 + $0x28] sm:$0xf]
  %v28 = vld [vmem:[%s0 + $0x2c] sm:$0xf]
  %v29 = vld [vmem:[%s0 + $0x30] sm:$0xf]
  %v30 = vld [vmem:[%s0 + $0x34] sm:$0xf]
  %v31 = vld [vmem:[%s0 + $0x38] sm:$0xf]
  %v32 = vld [vmem:[%s0 + $0x3c] sm:$0xf]
  %v33 = vunpack.c.l.bf16 %v17
  %v34 = vunpack.c.l.bf16 %v18
  %v35 = vunpack.c.l.bf16 %v19
  %v36 = vunpack.c.l.bf16 %v20
  %v37 = vunpack.c.l.bf16 %v21
  %v38 = vunpack.c.l.bf16 %v22
  %v39 = vunpack.c.l.bf16 %v23
  %v40 = vunpack.c.l.bf16 %v24
  %v41 = vunpack.c.l.bf16 %v25
  %v42 = vunpack.c.l.bf16 %v26
  %v43 = vunpack.c.l.bf16 %v27
  %v44 = vunpack.c.l.bf16 %v28
  %v45 = vunpack.c.l.bf16 %v29
  %v46 = vunpack.c.l.bf16 %v30
  %v47 = vunpack.c.l.bf16 %v31
  %v48 = vunpack.c.l.bf16 %v32
  %v49 = vld [vmem:[%s1] sm:$0x1]
  %v51 = vlaneseq
  %v52 = vshrl.u32 %v51, 7
  %v53 = vsub.s32 0, %v52
  %v54 = vrot.slane %v49, %v53
  %v56 = vmul.f32 %v33, %v54
  %v57 = vmul.f32 %v34, %v54
  %v58 = vmul.f32 %v35, %v54
  %v59 = vmul.f32 %v36, %v54
  %v60 = vmul.f32 %v37, %v54
  %v61 = vmul.f32 %v38, %v54
  %v62 = vmul.f32 %v39, %v54
  %v63 = vmul.f32 %v40, %v54
  %v64 = vmul.f32 %v41, %v54
  %v65 = vmul.f32 %v42, %v54
  %v66 = vmul.f32 %v43, %v54
  %v67 = vmul.f32 %v44, %v54
  %v68 = vmul.f32 %v45, %v54
  %v69 = vmul.f32 %v46, %v54
  %v70 = vmul.f32 %v47, %v54
  %v71 = vmul.f32 %v48, %v54
  %v72 = vld [vmem:[%s2] sm:$0x1]
  %v74 = vlaneseq
  %v75 = vshrl.u32 %v74, 7
  %v76 = vsub.s32 0, %v75
  %v77 = vrot.slane %v72, %v76
  %v79 = vadd.f32 %v56, %v77
  %v80 = vadd.f32 %v57, %v77
  %v81 = vadd.f32 %v58, %v77
  %v82 = vadd.f32 %v59, %v77
  %v83 = vadd.f32 %v60, %v77
  %v84 = vadd.f32 %v61, %v77
  %v85 = vadd.f32 %v62, %v77
  %v86 = vadd.f32 %v63, %v77
  %v87 = vadd.f32 %v64, %v77
  %v88 = vadd.f32 %v65, %v77
  %v89 = vadd.f32 %v66, %v77
  %v90 = vadd.f32 %v67, %v77
  %v91 = vadd.f32 %v68, %v77
  %v92 = vadd.f32 %v69, %v77
  %v93 = vadd.f32 %v70, %v77
  %v94 = vadd.f32 %v71, %v77
  %vm95 = vcmp.ge.f32.partialorder %v79, 0.0
  %vm96 = vcmp.ge.f32.partialorder %v80, 0.0
  %vm97 = vcmp.ge.f32.partialorder %v81, 0.0
  %vm98 = vcmp.ge.f32.partialorder %v82, 0.0
  %vm99 = vcmp.ge.f32.partialorder %v83, 0.0
  %vm100 = vcmp.ge.f32.partialorder %v84, 0.0
  %vm101 = vcmp.ge.f32.partialorder %v85, 0.0
  %vm102 = vcmp.ge.f32.partialorder %v86, 0.0
  %vm103 = vcmp.ge.f32.partialorder %v87, 0.0
  %vm104 = vcmp.ge.f32.partialorder %v88, 0.0
  %vm105 = vcmp.ge.f32.partialorder %v89, 0.0
  %vm106 = vcmp.ge.f32.partialorder %v90, 0.0
  %vm107 = vcmp.ge.f32.partialorder %v91, 0.0
  %vm108 = vcmp.ge.f32.partialorder %v92, 0.0
  %vm109 = vcmp.ge.f32.partialorder %v93, 0.0
  %vm110 = vcmp.ge.f32.partialorder %v94, 0.0
  %v111 = vmul.f32 %v79, 0.1
  %v112 = vmul.f32 %v80, 0.1
  %v113 = vmul.f32 %v81, 0.1
  %v114 = vmul.f32 %v82, 0.1
  %v115 = vmul.f32 %v83, 0.1
  %v116 = vmul.f32 %v84, 0.1
  %v117 = vmul.f32 %v85, 0.1
  %v118 = vmul.f32 %v86, 0.1
  %v119 = vmul.f32 %v87, 0.1
  %v120 = vmul.f32 %v88, 0.1
  %v121 = vmul.f32 %v89, 0.1
  %v122 = vmul.f32 %v90, 0.1
  %v123 = vmul.f32 %v91, 0.1
  %v124 = vmul.f32 %v92, 0.1
  %v125 = vmul.f32 %v93, 0.1
  %v126 = vmul.f32 %v94, 0.1
  %v127 = vsel %vm95, %v79, %v111
  %v128 = vsel %vm96, %v80, %v112
  %v129 = vsel %vm97, %v81, %v113
  %v130 = vsel %vm98, %v82, %v114
  %v131 = vsel %vm99, %v83, %v115
  %v132 = vsel %vm100, %v84, %v116
  %v133 = vsel %vm101, %v85, %v117
  %v134 = vsel %vm102, %v86, %v118
  %v135 = vsel %vm103, %v87, %v119
  %v136 = vsel %vm104, %v88, %v120
  %v137 = vsel %vm105, %v89, %v121
  %v138 = vsel %vm106, %v90, %v122
  %v139 = vsel %vm107, %v91, %v123
  %v140 = vsel %vm108, %v92, %v124
  %v141 = vsel %vm109, %v93, %v125
  %v142 = vsel %vm110, %v94, %v126
  %v143 = vld [vmem:[%s3] sm:$0xf]
  %v144 = vld [vmem:[%s3 + $0x4] sm:$0xf]
  %v145 = vld [vmem:[%s3 + $0x8] sm:$0xf]
  %v146 = vld [vmem:[%s3 + $0xc] sm:$0xf]
  %v147 = vld [vmem:[%s3 + $0x10] sm:$0xf]
  %v148 = vld [vmem:[%s3 + $0x14] sm:$0xf]
  %v149 = vld [vmem:[%s3 + $0x18] sm:$0xf]
  %v150 = vld [vmem:[%s3 + $0x1c] sm:$0xf]
  %v151 = vld [vmem:[%s3 + $0x20] sm:$0xf]
  %v152 = vld [vmem:[%s3 + $0x24] sm:$0xf]
  %v153 = vld [vmem:[%s3 + $0x28] sm:$0xf]
  %v154 = vld [vmem:[%s3 + $0x2c] sm:$0xf]
  %v155 = vld [vmem:[%s3 + $0x30] sm:$0xf]
  %v156 = vld [vmem:[%s3 + $0x34] sm:$0xf]
  %v157 = vld [vmem:[%s3 + $0x38] sm:$0xf]
  %v158 = vld [vmem:[%s3 + $0x3c] sm:$0xf]
  %v159 = vunpack.c.l.bf16 %v143
  %v160 = vunpack.c.l.bf16 %v144
  %v161 = vunpack.c.l.bf16 %v145
  %v162 = vunpack.c.l.bf16 %v146
  %v163 = vunpack.c.l.bf16 %v147
  %v164 = vunpack.c.l.bf16 %v148
  %v165 = vunpack.c.l.bf16 %v149
  %v166 = vunpack.c.l.bf16 %v150
  %v167 = vunpack.c.l.bf16 %v151
  %v168 = vunpack.c.l.bf16 %v152
  %v169 = vunpack.c.l.bf16 %v153
  %v170 = vunpack.c.l.bf16 %v154
  %v171 = vunpack.c.l.bf16 %v155
  %v172 = vunpack.c.l.bf16 %v156
  %v173 = vunpack.c.l.bf16 %v157
  %v174 = vunpack.c.l.bf16 %v158
  %v175 = vadd.f32 %v127, %v159
  %v176 = vadd.f32 %v128, %v160
  %v177 = vadd.f32 %v129, %v161
  %v178 = vadd.f32 %v130, %v162
  %v179 = vadd.f32 %v131, %v163
  %v180 = vadd.f32 %v132, %v164
  %v181 = vadd.f32 %v133, %v165
  %v182 = vadd.f32 %v134, %v166
  %v183 = vadd.f32 %v135, %v167
  %v184 = vadd.f32 %v136, %v168
  %v185 = vadd.f32 %v137, %v169
  %v186 = vadd.f32 %v138, %v170
  %v187 = vadd.f32 %v139, %v171
  %v188 = vadd.f32 %v140, %v172
  %v189 = vadd.f32 %v141, %v173
  %v190 = vadd.f32 %v142, %v174
  %v191 = vpack.c.bf16 %v176, %v175
  %v192 = vpack.c.bf16 %v178, %v177
  %v193 = vpack.c.bf16 %v180, %v179
  %v194 = vpack.c.bf16 %v182, %v181
  %v195 = vpack.c.bf16 %v184, %v183
  %v196 = vpack.c.bf16 %v186, %v185
  %v197 = vpack.c.bf16 %v188, %v187
  %v198 = vpack.c.bf16 %v190, %v189
  %v207 = vunpack.c.l.b16 %v191
  %v208 = vunpack.c.h.b16 %v191
  %v209 = vunpack.c.l.b16 %v192
  %v210 = vunpack.c.h.b16 %v192
  %v211 = vunpack.c.l.b16 %v193
  %v212 = vunpack.c.h.b16 %v193
  %v213 = vunpack.c.l.b16 %v194
  %v214 = vunpack.c.h.b16 %v194
  %v215 = vunpack.c.l.b16 %v195
  %v216 = vunpack.c.h.b16 %v195
  %v217 = vunpack.c.l.b16 %v196
  %v218 = vunpack.c.h.b16 %v196
  %v219 = vunpack.c.l.b16 %v197
  %v220 = vunpack.c.h.b16 %v197
  %v221 = vunpack.c.l.b16 %v198
  %v222 = vunpack.c.h.b16 %v198
  %v223 = vpack.c.b16 %v207, %v207
  %v224 = vpack.c.b16 %v208, %v208
  %v225 = vpack.c.b16 %v209, %v209
  %v226 = vpack.c.b16 %v210, %v210
  %v227 = vpack.c.b16 %v211, %v211
  %v228 = vpack.c.b16 %v212, %v212
  %v229 = vpack.c.b16 %v213, %v213
  %v230 = vpack.c.b16 %v214, %v214
  %v231 = vpack.c.b16 %v215, %v215
  %v232 = vpack.c.b16 %v216, %v216
  %v233 = vpack.c.b16 %v217, %v217
  %v234 = vpack.c.b16 %v218, %v218
  %v235 = vpack.c.b16 %v219, %v219
  %v236 = vpack.c.b16 %v220, %v220
  %v237 = vpack.c.b16 %v221, %v221
  %v238 = vpack.c.b16 %v222, %v222
  %255 = vst [vmem:[%s4] sm:$0xf] %v223
  %256 = vst [vmem:[%s4 + $0x4] sm:$0xf] %v224
  %257 = vst [vmem:[%s4 + $0x8] sm:$0xf] %v225
  %258 = vst [vmem:[%s4 + $0xc] sm:$0xf] %v226
  %259 = vst [vmem:[%s4 + $0x10] sm:$0xf] %v227
  %260 = vst [vmem:[%s4 + $0x14] sm:$0xf] %v228
  %261 = vst [vmem:[%s4 + $0x18] sm:$0xf] %v229
  %262 = vst [vmem:[%s4 + $0x1c] sm:$0xf] %v230
  %263 = vst [vmem:[%s4 + $0x20] sm:$0xf] %v231
  %264 = vst [vmem:[%s4 + $0x24] sm:$0xf] %v232
  %265 = vst [vmem:[%s4 + $0x28] sm:$0xf] %v233
  %266 = vst [vmem:[%s4 + $0x2c] sm:$0xf] %v234
  %267 = vst [vmem:[%s4 + $0x30] sm:$0xf] %v235
  %268 = vst [vmem:[%s4 + $0x34] sm:$0xf] %v236
  %269 = vst [vmem:[%s4 + $0x38] sm:$0xf] %v237
  %270 = vst [vmem:[%s4 + $0x3c] sm:$0xf] %v238
  // Predicated region
  $region18: #{res_block_forward.11} parent=0 // pred_check
    _
  $region19: #{res_block_forward.11} parent=0 // pred_check_branch
    %272 = sbr.rel (0) target = $region21
  $region20: #{res_block_forward.11} parent=0 // pred_region
    _
  $region21: #{res_block_forward.11} parent=0 // pred_fallthru
    _
  // Predicated region
  $region22: #{res_block_forward.11} parent=0 // pred_check
    _
  $region23: #{res_block_forward.11} parent=0 // pred_check_branch
    %274 = sbr.rel (0) target = $region25
  $region24: #{res_block_forward.11} parent=0 // pred_region
    _
  $region25: #{res_block_forward.11} parent=0 // pred_fallthru
    _

// kernel: res_block_forward.6
$region0: #{res_block_forward.6}
  #allocation0 [shape = 'u32[]', space=smem, size = 0x4, offset = 0x4, fixed_abs, tag = 'smem constant byte address 0x4 - core index']
  #allocation1 [shape = 'u32[144,128]{1,0:T(1,128)}', space=vmem, size = 0x12000, scoped, tag = 'internal scratch']
  %s0 = inlined_call_operand.vmem [shape: bf16[4,2,9,9,128], index: 0, kind: input, shape index: {}]
  %s1 = inlined_call_operand.vmem [shape: bf16[9,128,128], index: 1, kind: input, shape index: {}]
  %s2 = inlined_call_operand.vmem [shape: bf16[2,8,8,128], index: 2, kind: output, shape index: {0}]
  %s3 = inlined_call_operand.vmem [shape: f32[2,1,2,128], index: 3, kind: output, shape index: {1}]
  %4 = xla_tuple %s2, %s3
  %s5 = sld [smem:[#allocation0]]
  $region90: #{res_block_forward.6} parent=0
    _
  %s7 = ssub.s32 1, %s5
  %s8 = scalar_select 0, %s7, %s5
  $region1: #{res_block_forward.6} parent=0
    #allocation2 [shape = 'u8[294912]{0}', space=vmem, size = 0x48000, scoped, tag = 'input window, operand 0']
    loop: start=0, step=1, limit=4
    $region2: #{res_block_forward.6} parent=1 // loop_pre_header
      _
    $region3: #{res_block_forward.6} parent=1 // loop_header
      %s10 = sphi 0, %s14
      %p11 = scmp.ge.s32.totalorder %s10, 4
      %s17 = sphi 0, %s29
      %s18 = sphi 0, %s25
      %s19 = sphi 0, %s17
      %s20 = sphi 0, %s18
      %s21 = sphi 0, %s19
      %s22 = sphi 0, %s20
      %s32 = sphi 0, %s34
      %s35 = sphi 0, %s32
      %s36 = sphi 0, %s35
      %s52 = sphi 0, %s36
      %s56 = sphi 0, %s56
      %s58 = sphi 0, %s56
      %s59 = sphi 0, %s58
      %s73 = sphi 0, %s59
      %s81 = sphi 0, %s83
      %s84 = sphi 0, %s81
      %s85 = sphi 0, %s84
      %s101 = sphi 0, %s85
      %s109 = sphi 0, %s111
      %s112 = sphi 0, %s109
      %s113 = sphi 0, %s112
      %s129 = sphi 0, %s113
    $region4: #{res_block_forward.6} parent=1 // loop_header_branch
      %13 = sbr.rel (%p11) target = $region8
    $region5: #{res_block_forward.6} parent=1 // loop_body
      %s15 = ssub.s32 %s10, 1
      %s16 = ssub.s32 %s10, 2
      %s23 = sadd.s32 1, %s18
      %p24 = scmp.ge.s32.totalorder %s23, 1
      %s25 = scalar_select %p24, 0, %s23
      %s26 = sadd.s32 1, %s17
      %s27 = scalar_select %p24, %s26, %s17
      %p28 = scmp.ge.s32.totalorder %s27, 2
      %s29 = scalar_select %p28, 0, %s27
      %s30 = ssub.s32 %s17, %s29
      %p31 = scmp.eq.s32.totalorder %s30, 0
      %s33 = sadd.s32 %s32, 1
      %s34 = scalar_select %p31, %s32, %s33
      %p37 = pneg %p31
      %p38 = scmp.eq.s32.totalorder %s10, 1
      %p39 = por %p37, %p38
      %p40 = scmp.ne.s32.totalorder %s32, %s35
      %p41 = scmp.eq.s32.totalorder %s10, 0
      %p42 = por %p40, %p41
      %p43 = scmp.ne.s32.totalorder %s32, %s35
      %p44 = scmp.eq.s32.totalorder %s15, 1
      %p45 = por %p43, %p44
      %p46 = scmp.ne.s32.totalorder %s35, %s36
      %p47 = scmp.eq.s32.totalorder %s15, 0
      %p48 = por %p46, %p47
      %p49 = scmp.ne.s32.totalorder %s35, %s36
      %p50 = scmp.eq.s32.totalorder %s16, 1
      %p51 = por %p49, %p50
      %p53 = scmp.ne.s32.totalorder %s36, %s52
      %p54 = scmp.eq.s32.totalorder %s16, 0
      %p55 = por %p53, %p54
      %s57 = sadd.s32 %s56, 1
      %p60 = scmp.eq.s32.totalorder %s10, 1
      %p61 = scmp.ne.s32.totalorder %s56, %s58
      %p62 = scmp.eq.s32.totalorder %s10, 0
      %p63 = por %p61, %p62
      %p64 = scmp.ne.s32.totalorder %s56, %s58
      %p65 = scmp.eq.s32.totalorder %s15, 1
      %p66 = por %p64, %p65
      %p67 = scmp.ne.s32.totalorder %s58, %s59
      %p68 = scmp.eq.s32.totalorder %s15, 0
      %p69 = por %p67, %p68
      %p70 = scmp.ne.s32.totalorder %s58, %s59
      %p71 = scmp.eq.s32.totalorder %s16, 1
      %p72 = por %p70, %p71
      %p74 = scmp.ne.s32.totalorder %s59, %s73
      %p75 = scmp.eq.s32.totalorder %s16, 0
      %p76 = por %p74, %p75
      %s77 = ssub.s32 %s17, %s29
      %s78 = ssub.s32 %s18, %s25
      %s79 = sor.u32 %s77, %s78
      %p80 = scmp.eq.s32.totalorder %s79, 0
      %s82 = sadd.s32 %s81, 1
      %s83 = scalar_select %p80, %s81, %s82
      %p86 = pneg %p80
      %p87 = scmp.eq.s32.totalorder %s10, 1
      %p88 = por %p86, %p87
      %p89 = scmp.ne.s32.totalorder %s81, %s84
      %p90 = scmp.eq.s32.totalorder %s10, 0
      %p91 = por %p89, %p90
      %p92 = scmp.ne.s32.totalorder %s81, %s84
      %p93 = scmp.eq.s32.totalorder %s15, 1
      %p94 = por %p92, %p93
      %p95 = scmp.ne.s32.totalorder %s84, %s85
      %p96 = scmp.eq.s32.totalorder %s15, 0
      %p97 = por %p95, %p96
      %p98 = scmp.ne.s32.totalorder %s84, %s85
      %p99 = scmp.eq.s32.totalorder %s16, 1
      %p100 = por %p98, %p99
      %p102 = scmp.ne.s32.totalorder %s85, %s101
      %p103 = scmp.eq.s32.totalorder %s16, 0
      %p104 = por %p102, %p103
      %s105 = ssub.s32 %s17, %s29
      %s106 = ssub.s32 %s18, %s25
      %s107 = sor.u32 %s105, %s106
      %p108 = scmp.eq.s32.totalorder %s107, 0
      %s110 = sadd.s32 %s109, 1
      %s111 = scalar_select %p108, %s109, %s110
      %p114 = pneg %p108
      %p115 = scmp.eq.s32.totalorder %s10, 1
      %p116 = por %p114, %p115
      %p117 = scmp.ne.s32.totalorder %s109, %s112
      %p118 = scmp.eq.s32.totalorder %s10, 0
      %p119 = por %p117, %p118
      %p120 = scmp.ne.s32.totalorder %s109, %s112
      %p121 = scmp.eq.s32.totalorder %s15, 1
      %p122 = por %p120, %p121
      %p123 = scmp.ne.s32.totalorder %s112, %s113
      %p124 = scmp.eq.s32.totalorder %s15, 0
      %p125 = por %p123, %p124
      %p126 = scmp.ne.s32.totalorder %s112, %s113
      %p127 = scmp.eq.s32.totalorder %s16, 1
      %p128 = por %p126, %p127
      %p130 = scmp.ne.s32.totalorder %s113, %s129
      %p131 = scmp.eq.s32.totalorder %s16, 0
      %p132 = por %p130, %p131
      %p133 = scmp.le.s32.totalorder 1, %s10
      %p134 = scmp.lt.s32.totalorder %s10, 3
      %p135 = pnand %p133, %p134
      %p136 = pneg %p135
      // Predicated region
      $region9: #{res_block_forward.6} parent=5 // pred_check
        _
      $region10: #{res_block_forward.6} parent=5 // pred_check_branch
        %138 = sbr.rel (%p135) target = $region12
      $region11: #{res_block_forward.6} parent=5 // pred_region
        %s139 = ssub.s32 %s10, 1
        // Predicated region
        $region13: #{res_block_forward.6} parent=11 // pred_check
          %p140 = pneg %p69
        $region14: #{res_block_forward.6} parent=11 // pred_check_branch
          %142 = sbr.rel (%p140) target = $region16
        $region15: #{res_block_forward.6} parent=11 // pred_region
          _
        $region16: #{res_block_forward.6} parent=11 // pred_fallthru
          _
      $region12: #{res_block_forward.6} parent=5 // pred_fallthru
        _
      %p143 = scmp.lt.s32.totalorder %s10, 2
      // Predicated region
      $region17: #{res_block_forward.6} parent=5 // pred_check
        %p144 = pneg %p143
      $region18: #{res_block_forward.6} parent=5 // pred_check_branch
        %146 = sbr.rel (%p144) target = $region20
      $region19: #{res_block_forward.6} parent=5 // pred_region
        // Predicated region
        $region21: #{res_block_forward.6} parent=19 // pred_check
          %p147 = pneg %p42
        $region22: #{res_block_forward.6} parent=19 // pred_check_branch
          %149 = sbr.rel (%p147) target = $region24
        $region23: #{res_block_forward.6} parent=19 // pred_region
          %s150 = sand.u32 %s32, 1
          %s151 = sand.u32 %s32, 1
          %s152 = smul.addr %s151, 288
          %s153 = scalar_lea.vmem [#allocation2], %s152
          %s154 = smul.addr %s17, 18
          %s155 = smul.addr %s154, 4
          %s156 = scalar_lea.vmem %s0, %s155
          // Predicated region
          $region25: #{res_block_forward.6} parent=23 // pred_check
            _
          $region26: #{res_block_forward.6} parent=23 // pred_check_branch
            %158 = sbr.rel (0) target = $region28
          $region27: #{res_block_forward.6} parent=23 // pred_region
            // Predicated region
            $region29: #{res_block_forward.6} parent=27 // pred_check
              _
            $region30: #{res_block_forward.6} parent=27 // pred_check_branch
              %160 = sbr.rel target = $region32
            $region31: #{res_block_forward.6} parent=27 // pred_region
              // Predicated region
              $region44: #{res_block_forward.6} parent=31 // pred_check
                _
              $region45: #{res_block_forward.6} parent=31 // pred_check_branch
                %317 = sbr.rel (0) target = $region47
              $region46: #{res_block_forward.6} parent=31 // pred_region
                loop: start=0, step=1, limit=1
                $region48: #{res_block_forward.6} parent=46 // loop_pre_header
                  _
                $region49: #{res_block_forward.6} parent=46 // loop_header
                  %s319 = sphi 0, %s323
                  %p320 = scmp.ge.s32.totalorder %s319, 1
                  %s324 = sphi %s156, %s156
                  %s325 = sphi %s153, %s153
                $region50: #{res_block_forward.6} parent=46 // loop_header_branch
                  %322 = sbr.rel (%p320) target = $region54
                $region51: #{res_block_forward.6} parent=46 // loop_body
                  _
                $region52: #{res_block_forward.6} parent=46 // loop_footer
                  %s323 = sadd.s32 1, %s319
                $region53: #{res_block_forward.6} parent=46 // loop_footer_branch
                  %318 = sbr.rel target = $region49
                $region54: #{res_block_forward.6} parent=46 // loop_exit
                  _
                loop: start=0, step=1, limit=1
                $region55: #{res_block_forward.6} parent=46 // loop_pre_header
                  _
                $region56: #{res_block_forward.6} parent=46 // loop_header
                  %s328 = sphi 0, %s332
                  %p329 = scmp.ge.s32.totalorder %s328, 1
                  %s333 = sphi %s156, %s156
                  %s334 = sphi %s153, %s153
                $region57: #{res_block_forward.6} parent=46 // loop_header_branch
                  %331 = sbr.rel (%p329) target = $region61
                $region58: #{res_block_forward.6} parent=46 // loop_body
                  %v335 = vld [vmem:[%s333] sm:$0xf]
                  %336 = vst [vmem:[%s334] sm:$0xf] %v335
                  %v337 = vld [vmem:[%s333 + $0x4] sm:$0xf]
                  %338 = vst [vmem:[%s334 + $0x4] sm:$0xf] %v337
                  %v339 = vld [vmem:[%s333 + $0x8] sm:$0xf]
                  %340 = vst [vmem:[%s334 + $0x8] sm:$0xf] %v339
                  %v341 = vld [vmem:[%s333 + $0xc] sm:$0xf]
                  %342 = vst [vmem:[%s334 + $0xc] sm:$0xf] %v341
                  %v343 = vld [vmem:[%s333 + $0x10] sm:$0xf]
                  %344 = vst [vmem:[%s334 + $0x10] sm:$0xf] %v343
                  %v345 = vld [vmem:[%s333 + $0x14] sm:$0xf]
                  %346 = vst [vmem:[%s334 + $0x14] sm:$0xf] %v345
                  %v347 = vld [vmem:[%s333 + $0x18] sm:$0xf]
                  %348 = vst [vmem:[%s334 + $0x18] sm:$0xf] %v347
                  %v349 = vld [vmem:[%s333 + $0x1c] sm:$0xf]
                  %350 = vst [vmem:[%s334 + $0x1c] sm:$0xf] %v349
                  %v351 = vld [vmem:[%s333 + $0x20] sm:$0xf]
                  %352 = vst [vmem:[%s334 + $0x20] sm:$0xf] %v351
                  %v353 = vld [vmem:[%s333 + $0x24] sm:$0xf]
                  %354 = vst [vmem:[%s334 + $0x24] sm:$0xf] %v353
                  %v355 = vld [vmem:[%s333 + $0x28] sm:$0xf]
                  %356 = vst [vmem:[%s334 + $0x28] sm:$0xf] %v355
                  %v357 = vld [vmem:[%s333 + $0x2c] sm:$0xf]
                  %358 = vst [vmem:[%s334 + $0x2c] sm:$0xf] %v357
                  %v359 = vld [vmem:[%s333 + $0x30] sm:$0xf]
                  %360 = vst [vmem:[%s334 + $0x30] sm:$0xf] %v359
                  %v361 = vld [vmem:[%s333 + $0x34] sm:$0xf]
                  %362 = vst [vmem:[%s334 + $0x34] sm:$0xf] %v361
                  %v363 = vld [vmem:[%s333 + $0x38] sm:$0xf]
                  %364 = vst [vmem:[%s334 + $0x38] sm:$0xf] %v363
                  %v365 = vld [vmem:[%s333 + $0x3c] sm:$0xf]
                  %366 = vst [vmem:[%s334 + $0x3c] sm:$0xf] %v365
                  %v367 = vld [vmem:[%s333 + $0x40] sm:$0xf]
                  %368 = vst [vmem:[%s334 + $0x40] sm:$0xf] %v367
                  %v369 = vld [vmem:[%s333 + $0x44] sm:$0xf]
                  %370 = vst [vmem:[%s334 + $0x44] sm:$0xf] %v369
                  %v371 = vld [vmem:[%s333 + $0x90] sm:$0xf]
                  %372 = vst [vmem:[%s334 + $0x48] sm:$0xf] %v371
                  %v373 = vld [vmem:[%s333 + $0x94] sm:$0xf]
                  %374 = vst [vmem:[%s334 + $0x4c] sm:$0xf] %v373
                  %v375 = vld [vmem:[%s333 + $0x98] sm:$0xf]
                  %376 = vst [vmem:[%s334 + $0x50] sm:$0xf] %v375
                  %v377 = vld [vmem:[%s333 + $0x9c] sm:$0xf]
                  %378 = vst [vmem:[%s334 + $0x54] sm:$0xf] %v377
                  %v379 = vld [vmem:[%s333 + $0xa0] sm:$0xf]
                  %380 = vst [vmem:[%s334 + $0x58] sm:$0xf] %v379
                  %v381 = vld [vmem:[%s333 + $0xa4] sm:$0xf]
                  %382 = vst [vmem:[%s334 + $0x5c] sm:$0xf] %v381
                  %v383 = vld [vmem:[%s333 + $0xa8] sm:$0xf]
                  %384 = vst [vmem:[%s334 + $0x60] sm:$0xf] %v383
                  %v385 = vld [vmem:[%s333 + $0xac] sm:$0xf]
                  %386 = vst [vmem:[%s334 + $0x64] sm:$0xf] %v385
                  %v387 = vld [vmem:[%s333 + $0xb0] sm:$0xf]
                  %388 = vst [vmem:[%s334 + $0x68] sm:$0xf] %v387
                  %v389 = vld [vmem:[%s333 + $0xb4] sm:$0xf]
                  %390 = vst [vmem:[%s334 + $0x6c] sm:$0xf] %v389
                  %v391 = vld [vmem:[%s333 + $0xb8] sm:$0xf]
                  %392 = vst [vmem:[%s334 + $0x70] sm:$0xf] %v391
                  %v393 = vld [vmem:[%s333 + $0xbc] sm:$0xf]
                  %394 = vst [vmem:[%s334 + $0x74] sm:$0xf] %v393
                  %v395 = vld [vmem:[%s333 + $0xc0] sm:$0xf]
                  %396 = vst [vmem:[%s334 + $0x78] sm:$0xf] %v395
                  %v397 = vld [vmem:[%s333 + $0xc4] sm:$0xf]
                  %398 = vst [vmem:[%s334 + $0x7c] sm:$0xf] %v397
                  %v399 = vld [vmem:[%s333 + $0xc8] sm:$0xf]
                  %400 = vst [vmem:[%s334 + $0x80] sm:$0xf] %v399
                  %v401 = vld [vmem:[%s333 + $0xcc] sm:$0xf]
                  %402 = vst [vmem:[%s334 + $0x84] sm:$0xf] %v401
                  %v403 = vld [vmem:[%s333 + $0xd0] sm:$0xf]
                  %404 = vst [vmem:[%s334 + $0x88] sm:$0xf] %v403
                  %v405 = vld [vmem:[%s333 + $0xd4] sm:$0xf]
                  %406 = vst [vmem:[%s334 + $0x8c] sm:$0xf] %v405
                  %v407 = vld [vmem:[%s333 + $0x120] sm:$0xf]
                  %408 = vst [vmem:[%s334 + $0x90] sm:$0xf] %v407
                  %v409 = vld [vmem:[%s333 + $0x124] sm:$0xf]
                  %410 = vst [vmem:[%s334 + $0x94] sm:$0xf] %v409
                  %v411 = vld [vmem:[%s333 + $0x128] sm:$0xf]
                  %412 = vst [vmem:[%s334 + $0x98] sm:$0xf] %v411
                  %v413 = vld [vmem:[%s333 + $0x12c] sm:$0xf]
                  %414 = vst [vmem:[%s334 + $0x9c] sm:$0xf] %v413
                  %v415 = vld [vmem:[%s333 + $0x130] sm:$0xf]
                  %416 = vst [vmem:[%s334 + $0xa0] sm:$0xf] %v415
                  %v417 = vld [vmem:[%s333 + $0x134] sm:$0xf]
                  %418 = vst [vmem:[%s334 + $0xa4] sm:$0xf] %v417
                  %v419 = vld [vmem:[%s333 + $0x138] sm:$0xf]
                  %420 = vst [vmem:[%s334 + $0xa8] sm:$0xf] %v419
                  %v421 = vld [vmem:[%s333 + $0x13c] sm:$0xf]
                  %422 = vst [vmem:[%s334 + $0xac] sm:$0xf] %v421
                  %v423 = vld [vmem:[%s333 + $0x140] sm:$0xf]
                  %424 = vst [vmem:[%s334 + $0xb0] sm:$0xf] %v423
                  %v425 = vld [vmem:[%s333 + $0x144] sm:$0xf]
                  %426 = vst [vmem:[%s334 + $0xb4] sm:$0xf] %v425
                  %v427 = vld [vmem:[%s333 + $0x148] sm:$0xf]
                  %428 = vst [vmem:[%s334 + $0xb8] sm:$0xf] %v427
                  %v429 = vld [vmem:[%s333 + $0x14c] sm:$0xf]
                  %430 = vst [vmem:[%s334 + $0xbc] sm:$0xf] %v429
                  %v431 = vld [vmem:[%s333 + $0x150] sm:$0xf]
                  %432 = vst [vmem:[%s334 + $0xc0] sm:$0xf] %v431
                  %v433 = vld [vmem:[%s333 + $0x154] sm:$0xf]
                  %434 = vst [vmem:[%s334 + $0xc4] sm:$0xf] %v433
                  %v435 = vld [vmem:[%s333 + $0x158] sm:$0xf]
                  %436 = vst [vmem:[%s334 + $0xc8] sm:$0xf] %v435
                  %v437 = vld [vmem:[%s333 + $0x15c] sm:$0xf]
                  %438 = vst [vmem:[%s334 + $0xcc] sm:$0xf] %v437
                  %v439 = vld [vmem:[%s333 + $0x160] sm:$0xf]
                  %440 = vst [vmem:[%s334 + $0xd0] sm:$0xf] %v439
                  %v441 = vld [vmem:[%s333 + $0x164] sm:$0xf]
                  %442 = vst [vmem:[%s334 + $0xd4] sm:$0xf] %v441
                  %v443 = vld [vmem:[%s333 + $0x1b0] sm:$0xf]
                  %444 = vst [vmem:[%s334 + $0xd8] sm:$0xf] %v443
                  %v445 = vld [vmem:[%s333 + $0x1b4] sm:$0xf]
                  %446 = vst [vmem:[%s334 + $0xdc] sm:$0xf] %v445
                  %v447 = vld [vmem:[%s333 + $0x1b8] sm:$0xf]
                  %448 = vst [vmem:[%s334 + $0xe0] sm:$0xf] %v447
                  %v449 = vld [vmem:[%s333 + $0x1bc] sm:$0xf]
                  %450 = vst [vmem:[%s334 + $0xe4] sm:$0xf] %v449
                  %v451 = vld [vmem:[%s333 + $0x1c0] sm:$0xf]
                  %452 = vst [vmem:[%s334 + $0xe8] sm:$0xf] %v451
                  %v453 = vld [vmem:[%s333 + $0x1c4] sm:$0xf]
                  %454 = vst [vmem:[%s334 + $0xec] sm:$0xf] %v453
                  %v455 = vld [vmem:[%s333 + $0x1c8] sm:$0xf]
                  %456 = vst [vmem:[%s334 + $0xf0] sm:$0xf] %v455
                  %v457 = vld [vmem:[%s333 + $0x1cc] sm:$0xf]
                  %458 = vst [vmem:[%s334 + $0xf4] sm:$0xf] %v457
                  %v459 = vld [vmem:[%s333 + $0x1d0] sm:$0xf]
                  %460 = vst [vmem:[%s334 + $0xf8] sm:$0xf] %v459
                  %v461 = vld [vmem:[%s333 + $0x1d4] sm:$0xf]
                  %462 = vst [vmem:[%s334 + $0xfc] sm:$0xf] %v461
                  %v463 = vld [vmem:[%s333 + $0x1d8] sm:$0xf]
                  %464 = vst [vmem:[%s334 + $0x100] sm:$0xf] %v463
                  %v465 = vld [vmem:[%s333 + $0x1dc] sm:$0xf]
                  %466 = vst [vmem:[%s334 + $0x104] sm:$0xf] %v465
                  %v467 = vld [vmem:[%s333 + $0x1e0] sm:$0xf]
                  %468 = vst [vmem:[%s334 + $0x108] sm:$0xf] %v467
                  %v469 = vld [vmem:[%s333 + $0x1e4] sm:$0xf]
                  %470 = vst [vmem:[%s334 + $0x10c] sm:$0xf] %v469
                  %v471 = vld [vmem:[%s333 + $0x1e8] sm:$0xf]
                  %472 = vst [vmem:[%s334 + $0x110] sm:$0xf] %v471
                  %v473 = vld [vmem:[%s333 + $0x1ec] sm:$0xf]
                  %474 = vst [vmem:[%s334 + $0x114] sm:$0xf] %v473
                  %v475 = vld [vmem:[%s333 + $0x1f0] sm:$0xf]
                  %476 = vst [vmem:[%s334 + $0x118] sm:$0xf] %v475
                  %v477 = vld [vmem:[%s333 + $0x1f4] sm:$0xf]
                  %478 = vst [vmem:[%s334 + $0x11c] sm:$0xf] %v477
                $region59: #{res_block_forward.6} parent=46 // loop_footer
                  %s332 = sadd.s32 1, %s328
                $region60: #{res_block_forward.6} parent=46 // loop_footer_branch
                  %327 = sbr.rel target = $region56
                $region61: #{res_block_forward.6} parent=46 // loop_exit
                  _
              $region47: #{res_block_forward.6} parent=31 // pred_fallthru
                _
            $region32: #{res_block_forward.6} parent=27 // pred_fallthru
              _
            // Predicated region
            $region33: #{res_block_forward.6} parent=27 // pred_check
              _
            $region34: #{res_block_forward.6} parent=27 // pred_check_branch
              %162 = sbr.rel (0) target = $region36
            $region35: #{res_block_forward.6} parent=27 // pred_region
              loop: start=0, step=1, limit=1
              $region37: #{res_block_forward.6} parent=35 // loop_pre_header
                _
              $region38: #{res_block_forward.6} parent=35 // loop_header
                %s165 = sphi 0, %s169
                %p166 = scmp.ge.s32.totalorder %s165, 1
                %s170 = sphi %s156, %s156
                %s171 = sphi %s153, %s153
              $region39: #{res_block_forward.6} parent=35 // loop_header_branch
                %168 = sbr.rel (%p166) target = $region43
              $region40: #{res_block_forward.6} parent=35 // loop_body
                %v172 = vld [vmem:[%s170] sm:$0xf]
                %173 = vst [vmem:[%s171] sm:$0xf] %v172
                %v174 = vld [vmem:[%s170 + $0x4] sm:$0xf]
                %175 = vst [vmem:[%s171 + $0x4] sm:$0xf] %v174
                %v176 = vld [vmem:[%s170 + $0x8] sm:$0xf]
                %177 = vst [vmem:[%s171 + $0x8] sm:$0xf] %v176
                %v178 = vld [vmem:[%s170 + $0xc] sm:$0xf]
                %179 = vst [vmem:[%s171 + $0xc] sm:$0xf] %v178
                %v180 = vld [vmem:[%s170 + $0x10] sm:$0xf]
                %181 = vst [vmem:[%s171 + $0x10] sm:$0xf] %v180
                %v182 = vld [vmem:[%s170 + $0x14] sm:$0xf]
                %183 = vst [vmem:[%s171 + $0x14] sm:$0xf] %v182
                %v184 = vld [vmem:[%s170 + $0x18] sm:$0xf]
                %185 = vst [vmem:[%s171 + $0x18] sm:$0xf] %v184
                %v186 = vld [vmem:[%s170 + $0x1c] sm:$0xf]
                %187 = vst [vmem:[%s171 + $0x1c] sm:$0xf] %v186
                %v188 = vld [vmem:[%s170 + $0x20] sm:$0xf]
                %189 = vst [vmem:[%s171 + $0x20] sm:$0xf] %v188
                %v190 = vld [vmem:[%s170 + $0x24] sm:$0xf]
                %191 = vst [vmem:[%s171 + $0x24] sm:$0xf] %v190
                %v192 = vld [vmem:[%s170 + $0x28] sm:$0xf]
                %193 = vst [vmem:[%s171 + $0x28] sm:$0xf] %v192
                %v194 = vld [vmem:[%s170 + $0x2c] sm:$0xf]
                %195 = vst [vmem:[%s171 + $0x2c] sm:$0xf] %v194
                %v196 = vld [vmem:[%s170 + $0x30] sm:$0xf]
                %197 = vst [vmem:[%s171 + $0x30] sm:$0xf] %v196
                %v198 = vld [vmem:[%s170 + $0x34] sm:$0xf]
                %199 = vst [vmem:[%s171 + $0x34] sm:$0xf] %v198
                %v200 = vld [vmem:[%s170 + $0x38] sm:$0xf]
                %201 = vst [vmem:[%s171 + $0x38] sm:$0xf] %v200
                %v202 = vld [vmem:[%s170 + $0x3c] sm:$0xf]
                %203 = vst [vmem:[%s171 + $0x3c] sm:$0xf] %v202
                %v204 = vld [vmem:[%s170 + $0x40] sm:$0xf]
                %205 = vst [vmem:[%s171 + $0x40] sm:$0xf] %v204
                %v206 = vld [vmem:[%s170 + $0x44] sm:$0xf]
                %207 = vst [vmem:[%s171 + $0x44] sm:$0xf] %v206
                %v208 = vld [vmem:[%s170 + $0x90] sm:$0xf]
                %209 = vst [vmem:[%s171 + $0x48] sm:$0xf] %v208
                %v210 = vld [vmem:[%s170 + $0x94] sm:$0xf]
                %211 = vst [vmem:[%s171 + $0x4c] sm:$0xf] %v210
                %v212 = vld [vmem:[%s170 + $0x98] sm:$0xf]
                %213 = vst [vmem:[%s171 + $0x50] sm:$0xf] %v212
                %v214 = vld [vmem:[%s170 + $0x9c] sm:$0xf]
                %215 = vst [vmem:[%s171 + $0x54] sm:$0xf] %v214
                %v216 = vld [vmem:[%s170 + $0xa0] sm:$0xf]
                %217 = vst [vmem:[%s171 + $0x58] sm:$0xf] %v216
                %v218 = vld [vmem:[%s170 + $0xa4] sm:$0xf]
                %219 = vst [vmem:[%s171 + $0x5c] sm:$0xf] %v218
                %v220 = vld [vmem:[%s170 + $0xa8] sm:$0xf]
                %221 = vst [vmem:[%s171 + $0x60] sm:$0xf] %v220
                %v222 = vld [vmem:[%s170 + $0xac] sm:$0xf]
                %223 = vst [vmem:[%s171 + $0x64] sm:$0xf] %v222
                %v224 = vld [vmem:[%s170 + $0xb0] sm:$0xf]
                %225 = vst [vmem:[%s171 + $0x68] sm:$0xf] %v224
                %v226 = vld [vmem:[%s170 + $0xb4] sm:$0xf]
                %227 = vst [vmem:[%s171 + $0x6c] sm:$0xf] %v226
                %v228 = vld [vmem:[%s170 + $0xb8] sm:$0xf]
                %229 = vst [vmem:[%s171 + $0x70] sm:$0xf] %v228
                %v230 = vld [vmem:[%s170 + $0xbc] sm:$0xf]
                %231 = vst [vmem:[%s171 + $0x74] sm:$0xf] %v230
                %v232 = vld [vmem:[%s170 + $0xc0] sm:$0xf]
                %233 = vst [vmem:[%s171 + $0x78] sm:$0xf] %v232
                %v234 = vld [vmem:[%s170 + $0xc4] sm:$0xf]
                %235 = vst [vmem:[%s171 + $0x7c] sm:$0xf] %v234
                %v236 = vld [vmem:[%s170 + $0xc8] sm:$0xf]
                %237 = vst [vmem:[%s171 + $0x80] sm:$0xf] %v236
                %v238 = vld [vmem:[%s170 + $0xcc] sm:$0xf]
                %239 = vst [vmem:[%s171 + $0x84] sm:$0xf] %v238
                %v240 = vld [vmem:[%s170 + $0xd0] sm:$0xf]
                %241 = vst [vmem:[%s171 + $0x88] sm:$0xf] %v240
                %v242 = vld [vmem:[%s170 + $0xd4] sm:$0xf]
                %243 = vst [vmem:[%s171 + $0x8c] sm:$0xf] %v242
                %v244 = vld [vmem:[%s170 + $0x120] sm:$0xf]
                %245 = vst [vmem:[%s171 + $0x90] sm:$0xf] %v244
                %v246 = vld [vmem:[%s170 + $0x124] sm:$0xf]
                %247 = vst [vmem:[%s171 + $0x94] sm:$0xf] %v246
                %v248 = vld [vmem:[%s170 + $0x128] sm:$0xf]
                %249 = vst [vmem:[%s171 + $0x98] sm:$0xf] %v248
                %v250 = vld [vmem:[%s170 + $0x12c] sm:$0xf]
                %251 = vst [vmem:[%s171 + $0x9c] sm:$0xf] %v250
                %v252 = vld [vmem:[%s170 + $0x130] sm:$0xf]
                %253 = vst [vmem:[%s171 + $0xa0] sm:$0xf] %v252
                %v254 = vld [vmem:[%s170 + $0x134] sm:$0xf]
                %255 = vst [vmem:[%s171 + $0xa4] sm:$0xf] %v254
                %v256 = vld [vmem:[%s170 + $0x138] sm:$0xf]
                %257 = vst [vmem:[%s171 + $0xa8] sm:$0xf] %v256
                %v258 = vld [vmem:[%s170 + $0x13c] sm:$0xf]
                %259 = vst [vmem:[%s171 + $0xac] sm:$0xf] %v258
                %v260 = vld [vmem:[%s170 + $0x140] sm:$0xf]
                %261 = vst [vmem:[%s171 + $0xb0] sm:$0xf] %v260
                %v262 = vld [vmem:[%s170 + $0x144] sm:$0xf]
                %263 = vst [vmem:[%s171 + $0xb4] sm:$0xf] %v262
                %v264 = vld [vmem:[%s170 + $0x148] sm:$0xf]
                %265 = vst [vmem:[%s171 + $0xb8] sm:$0xf] %v264
                %v266 = vld [vmem:[%s170 + $0x14c] sm:$0xf]
                %267 = vst [vmem:[%s171 + $0xbc] sm:$0xf] %v266
                %v268 = vld [vmem:[%s170 + $0x150] sm:$0xf]
                %269 = vst [vmem:[%s171 + $0xc0] sm:$0xf] %v268
                %v270 = vld [vmem:[%s170 + $0x154] sm:$0xf]
                %271 = vst [vmem:[%s171 + $0xc4] sm:$0xf] %v270
                %v272 = vld [vmem:[%s170 + $0x158] sm:$0xf]
                %273 = vst [vmem:[%s171 + $0xc8] sm:$0xf] %v272
                %v274 = vld [vmem:[%s170 + $0x15c] sm:$0xf]
                %275 = vst [vmem:[%s171 + $0xcc] sm:$0xf] %v274
                %v276 = vld [vmem:[%s170 + $0x160] sm:$0xf]
                %277 = vst [vmem:[%s171 + $0xd0] sm:$0xf] %v276
                %v278 = vld [vmem:[%s170 + $0x164] sm:$0xf]
                %279 = vst [vmem:[%s171 + $0xd4] sm:$0xf] %v278
                %v280 = vld [vmem:[%s170 + $0x1b0] sm:$0xf]
                %281 = vst [vmem:[%s171 + $0xd8] sm:$0xf] %v280
                %v282 = vld [vmem:[%s170 + $0x1b4] sm:$0xf]
                %283 = vst [vmem:[%s171 + $0xdc] sm:$0xf] %v282
                %v284 = vld [vmem:[%s170 + $0x1b8] sm:$0xf]
                %285 = vst [vmem:[%s171 + $0xe0] sm:$0xf] %v284
                %v286 = vld [vmem:[%s170 + $0x1bc] sm:$0xf]
                %287 = vst [vmem:[%s171 + $0xe4] sm:$0xf] %v286
                %v288 = vld [vmem:[%s170 + $0x1c0] sm:$0xf]
                %289 = vst [vmem:[%s171 + $0xe8] sm:$0xf] %v288
                %v290 = vld [vmem:[%s170 + $0x1c4] sm:$0xf]
                %291 = vst [vmem:[%s171 + $0xec] sm:$0xf] %v290
                %v292 = vld [vmem:[%s170 + $0x1c8] sm:$0xf]
                %293 = vst [vmem:[%s171 + $0xf0] sm:$0xf] %v292
                %v294 = vld [vmem:[%s170 + $0x1cc] sm:$0xf]
                %295 = vst [vmem:[%s171 + $0xf4] sm:$0xf] %v294
                %v296 = vld [vmem:[%s170 + $0x1d0] sm:$0xf]
                %297 = vst [vmem:[%s171 + $0xf8] sm:$0xf] %v296
                %v298 = vld [vmem:[%s170 + $0x1d4] sm:$0xf]
                %299 = vst [vmem:[%s171 + $0xfc] sm:$0xf] %v298
                %v300 = vld [vmem:[%s170 + $0x1d8] sm:$0xf]
                %301 = vst [vmem:[%s171 + $0x100] sm:$0xf] %v300
                %v302 = vld [vmem:[%s170 + $0x1dc] sm:$0xf]
                %303 = vst [vmem:[%s171 + $0x104] sm:$0xf] %v302
                %v304 = vld [vmem:[%s170 + $0x1e0] sm:$0xf]
                %305 = vst [vmem:[%s171 + $0x108] sm:$0xf] %v304
                %v306 = vld [vmem:[%s170 + $0x1e4] sm:$0xf]
                %307 = vst [vmem:[%s171 + $0x10c] sm:$0xf] %v306
                %v308 = vld [vmem:[%s170 + $0x1e8] sm:$0xf]
                %309 = vst [vmem:[%s171 + $0x110] sm:$0xf] %v308
                %v310 = vld [vmem:[%s170 + $0x1ec] sm:$0xf]
                %311 = vst [vmem:[%s171 + $0x114] sm:$0xf] %v310
                %v312 = vld [vmem:[%s170 + $0x1f0] sm:$0xf]
                %313 = vst [vmem:[%s171 + $0x118] sm:$0xf] %v312
                %v314 = vld [vmem:[%s170 + $0x1f4] sm:$0xf]
                %315 = vst [vmem:[%s171 + $0x11c] sm:$0xf] %v314
              $region41: #{res_block_forward.6} parent=35 // loop_footer
                %s169 = sadd.s32 1, %s165
              $region42: #{res_block_forward.6} parent=35 // loop_footer_branch
                %164 = sbr.rel target = $region38
              $region43: #{res_block_forward.6} parent=35 // loop_exit
                _
            $region36: #{res_block_forward.6} parent=27 // pred_fallthru
              _
          $region28: #{res_block_forward.6} parent=23 // pred_fallthru
            _
          %479 = vnop
        $region24: #{res_block_forward.6} parent=19 // pred_fallthru
          _
      $region20: #{res_block_forward.6} parent=5 // pred_fallthru
        _
      %p480 = scmp.le.s32.totalorder 1, %s10
      %p481 = scmp.lt.s32.totalorder %s10, 3
      %p482 = pnand %p480, %p481
      %p483 = pneg %p482
      // Predicated region
      $region62: #{res_block_forward.6} parent=5 // pred_check
        _
      $region63: #{res_block_forward.6} parent=5 // pred_check_branch
        %485 = sbr.rel (%p482) target = $region65
      $region64: #{res_block_forward.6} parent=5 // pred_region
        %s486 = ssub.s32 %s10, 1
        %s487 = sand.u32 %s35, 1
        %s488 = sand.u32 %s35, 1
        %s489 = smul.addr %s488, 288
        %s490 = scalar_lea.vmem [#allocation2], %s489
        // Predicated region
        $region66: #{res_block_forward.6} parent=64 // pred_check
          %p491 = pneg %p48
        $region67: #{res_block_forward.6} parent=64 // pred_check_branch
          %493 = sbr.rel (%p491) target = $region69
        $region68: #{res_block_forward.6} parent=64 // pred_region
          _
        $region69: #{res_block_forward.6} parent=64 // pred_fallthru
          _
        %s494 = sand.u32 %s35, 1
        %s495 = sand.u32 %s35, 1
        %s496 = smul.addr %s495, 288
        %s497 = scalar_lea.vmem [#allocation2], %s496
        %p498 = pneg %p48
        %p499 = pneg %p45
        %p500 = pneg %p69
        %p501 = pneg %p66
        %p502 = pneg %p97
        %p503 = pneg %p94
        %s504 = smul.u32 8, %s20
        %p505 = scmp.lt.s32.totalorder %s19, 1
        %s506 = scalar_select %p505, %s19, 1
        %p507 = scmp.lt.s32.totalorder %s504, 7
        %s508 = scalar_select %p507, %s504, 7
        %s509 = smul.addr %s506, 8
        %s510 = sadd.s32 %s508, %s509
        %s511 = smul.addr %s510, 4
        %s512 = scalar_lea.vmem %s2, %s511
        %p513 = pneg %p125
        %p514 = pneg %p122
        %p515 = scmp.lt.s32.totalorder %s19, 1
        %s516 = scalar_select %p515, %s19, 1
        %p517 = scmp.lt.s32.totalorder %s20, 0
        %s518 = scalar_select %p517, %s20, 0
        %s519 = sadd.s32 %s518, %s516
        %s520 = smul.addr %s519, 2
        %s521 = scalar_lea.vmem %s3, %s520
        %s522 = smul.u32 8, %s20
        %p523 = scmp.lt.s32.totalorder %s19, 1
        %s524 = scalar_select %p523, %s19, 1
        %p525 = scmp.lt.s32.totalorder %s522, 7
        %s526 = scalar_select %p525, %s522, 7
        %s527 = smul.addr %s524, 8
        %s528 = sadd.s32 %s526, %s527
        %s529 = smul.addr %s528, 4
        %s530 = scalar_lea.vmem %s2, %s529
        %s531 = smul.u32 8, %s20
        %p532 = scmp.lt.s32.totalorder %s19, 1
        %s533 = scalar_select %p532, %s19, 1
        %p534 = scmp.lt.s32.totalorder %s20, 0
        %s535 = scalar_select %p534, %s20, 0
        %s536 = sadd.s32 %s535, %s533
        %s537 = smul.addr %s536, 2
        %s538 = scalar_lea.vmem %s3, %s537
        %s540 = smul.u32 %s20, 8
        %s541 = smul.u32 %s540, 2
        %s542 = smul.addr %s541, 4
        %s543 = scalar_lea.vmem %s490, %s542 [#allocation2]
        %v544 = vld [vmem:[%s543] sm:$0xf]
        %v545 = vld [vmem:[%s543 + $0x8] sm:$0xf]
        %v546 = vld [vmem:[%s543 + $0x10] sm:$0xf]
        %v547 = vld [vmem:[%s543 + $0x18] sm:$0xf]
        %v548 = vld [vmem:[%s543 + $0x20] sm:$0xf]
        %v549 = vld [vmem:[%s543 + $0x28] sm:$0xf]
        %v550 = vld [vmem:[%s543 + $0x30] sm:$0xf]
        %v551 = vld [vmem:[%s543 + $0x38] sm:$0xf]
        %v552 = vld [vmem:[%s1] sm:$0xf]
        %v553 = vld [vmem:[%s1 + $0x4] sm:$0xf]
        %v554 = vld [vmem:[%s1 + $0x8] sm:$0xf]
        %v555 = vld [vmem:[%s1 + $0xc] sm:$0xf]
        %v556 = vld [vmem:[%s1 + $0x10] sm:$0xf]
        %v557 = vld [vmem:[%s1 + $0x14] sm:$0xf]
        %v558 = vld [vmem:[%s1 + $0x18] sm:$0xf]
        %v559 = vld [vmem:[%s1 + $0x1c] sm:$0xf]
        %v560 = vld [vmem:[%s1 + $0x20] sm:$0xf]
        %v561 = vld [vmem:[%s1 + $0x24] sm:$0xf]
        %v562 = vld [vmem:[%s1 + $0x28] sm:$0xf]
        %v563 = vld [vmem:[%s1 + $0x2c] sm:$0xf]
        %v564 = vld [vmem:[%s1 + $0x30] sm:$0xf]
        %v565 = vld [vmem:[%s1 + $0x34] sm:$0xf]
        %v566 = vld [vmem:[%s1 + $0x38] sm:$0xf]
        %v567 = vld [vmem:[%s1 + $0x3c] sm:$0xf]
        %s568 = sadd.s32 %s541, 18
        %s569 = smul.addr %s568, 4
        %s570 = scalar_lea.vmem %s490, %s569 [#allocation2]
        %v571 = vld [vmem:[%s570] sm:$0xf]
        %v572 = vld [vmem:[%s570 + $0x8] sm:$0xf]
        %v573 = vld [vmem:[%s570 + $0x10] sm:$0xf]
        %v574 = vld [vmem:[%s570 + $0x18] sm:$0xf]
        %v575 = vld [vmem:[%s570 + $0x20] sm:$0xf]
        %v576 = vld [vmem:[%s570 + $0x28] sm:$0xf]
        %v577 = vld [vmem:[%s570 + $0x30] sm:$0xf]
        %v578 = vld [vmem:[%s570 + $0x38] sm:$0xf]
        %s579 = scalar_lea.vmem %s1, 64
        %v580 = vld [vmem:[%s579] sm:$0xf]
        %v581 = vld [vmem:[%s579 + $0x4] sm:$0xf]
        %v582 = vld [vmem:[%s579 + $0x8] sm:$0xf]
        %v583 = vld [vmem:[%s579 + $0xc] sm:$0xf]
        %v584 = vld [vmem:[%s579 + $0x10] sm:$0xf]
        %v585 = vld [vmem:[%s579 + $0x14] sm:$0xf]
        %v586 = vld [vmem:[%s579 + $0x18] sm:$0xf]
        %v587 = vld [vmem:[%s579 + $0x1c] sm:$0xf]
        %v588 = vld [vmem:[%s579 + $0x20] sm:$0xf]
        %v589 = vld [vmem:[%s579 + $0x24] sm:$0xf]
        %v590 = vld [vmem:[%s579 + $0x28] sm:$0xf]
        %v591 = vld [vmem:[%s579 + $0x2c] sm:$0xf]
        %v592 = vld [vmem:[%s579 + $0x30] sm:$0xf]
        %v593 = vld [vmem:[%s579 + $0x34] sm:$0xf]
        %v594 = vld [vmem:[%s579 + $0x38] sm:$0xf]
        %v595 = vld [vmem:[%s579 + $0x3c] sm:$0xf]
        %v604 = vunpack.c.l.b16 %v571
        %v605 = vunpack.c.l.b16 %v572
        %v606 = vunpack.c.l.b16 %v573
        %v607 = vunpack.c.l.b16 %v574
        %v608 = vunpack.c.l.b16 %v575
        %v609 = vunpack.c.l.b16 %v576
        %v610 = vunpack.c.l.b16 %v577
        %v611 = vunpack.c.l.b16 %v578
        %v612 = vpack.c.b16 %v605, %v604
        %v613 = vpack.c.b16 %v607, %v606
        %v614 = vpack.c.b16 %v609, %v608
        %v615 = vpack.c.b16 %v611, %v610
        %v636 = vunpack.c.l.b16 %v580
        %v637 = vunpack.c.l.b16 %v581
        %v638 = vunpack.c.l.b16 %v582
        %v639 = vunpack.c.l.b16 %v583
        %v640 = vunpack.c.l.b16 %v584
        %v641 = vunpack.c.l.b16 %v585
        %v642 = vunpack.c.l.b16 %v586
        %v643 = vunpack.c.l.b16 %v587
        %v644 = vunpack.c.l.b16 %v588
        %v645 = vunpack.c.l.b16 %v589
        %v646 = vunpack.c.l.b16 %v590
        %v647 = vunpack.c.l.b16 %v591
        %v648 = vunpack.c.l.b16 %v592
        %v649 = vunpack.c.l.b16 %v593
        %v650 = vunpack.c.l.b16 %v594
        %v651 = vunpack.c.l.b16 %v595
        %v652 = vpack.c.b16 %v637, %v636
        %v653 = vpack.c.b16 %v639, %v638
        %v654 = vpack.c.b16 %v641, %v640
        %v655 = vpack.c.b16 %v643, %v642
        %v656 = vpack.c.b16 %v645, %v644
        %v657 = vpack.c.b16 %v647, %v646
        %v658 = vpack.c.b16 %v649, %v648
        %v659 = vpack.c.b16 %v651, %v650
        %668 = vmatprep.subr.bf16.mxu0 0
        %669 = vmatpush1.bf16.msra.mxu0 %v652
        %670 = vmatprep.subr.bf16.mxu0 0
        %671 = vmatpush1.bf16.msra.mxu0 %v653
        %672 = vmatprep.subr.bf16.mxu0 0
        %673 = vmatpush1.bf16.msra.mxu0 %v654
        %674 = vmatprep.subr.bf16.mxu0 0
        %675 = vmatpush1.bf16.msra.mxu0 %v655
        %676 = vmatprep.subr.bf16.mxu0 0
        %677 = vmatpush1.bf16.msra.mxu0 %v656
        %678 = vmatprep.subr.bf16.mxu0 0
        %679 = vmatpush1.bf16.msra.mxu0 %v657
        %680 = vmatprep.subr.bf16.mxu0 0
        %681 = vmatpush1.bf16.msra.mxu0 %v658
        %682 = vmatprep.subr.bf16.mxu0 0
        %683 = vmatpush1.bf16.msra.mxu0 %v659
        %684 = vmatprep.subr.bf16.mxu0 0
        %685 = vmatpush1.bf16.msra.mxu0 0
        %686 = vmatprep.subr.bf16.mxu0 0
        %687 = vmatpush1.bf16.msra.mxu0 0
        %688 = vmatprep.subr.bf16.mxu0 0
        %689 = vmatpush1.bf16.msra.mxu0 0
        %690 = vmatprep.subr.bf16.mxu0 0
        %691 = vmatpush1.bf16.msra.mxu0 0
        %692 = vmatprep.subr.bf16.mxu0 0
        %693 = vmatpush1.bf16.msra.mxu0 0
        %694 = vmatprep.subr.bf16.mxu0 0
        %695 = vmatpush1.bf16.msra.mxu0 0
        %696 = vmatprep.subr.bf16.mxu0 0
        %697 = vmatpush1.bf16.msra.mxu0 0
        %698 = vmatprep.subr.bf16.mxu0 0
        %699 = vmatpush1.bf16.msra.mxu0 0
        %700 = vmatprep.mubr.bf16.mxu0 0
        %701 = vmatmul.mubr.bf16.gmra.mrb[0].mxu0 %v612
        %v702 = vpop.f32.mrb[0].mxu0
        %v703 = vadd.f32 0.0, %v702
        %v704 = vpop.f32.mrb[0].mxu0
        %v705 = vpop.f32.mrb[0].mxu0
        %v706 = vadd.f32 0.0, %v705
        %v707 = vpop.f32.mrb[0].mxu0
        %708 = vmatprep.mubr.bf16.mxu0 0
        %709 = vmatmul.mubr.bf16.gmra.mrb[0].mxu0 %v613
        %v710 = vpop.f32.mrb[0].mxu0
        %v711 = vadd.f32 0.0, %v710
        %v712 = vpop.f32.mrb[0].mxu0
        %v713 = vpop.f32.mrb[0].mxu0
        %v714 = vadd.f32 0.0, %v713
        %v715 = vpop.f32.mrb[0].mxu0
        %716 = vmatprep.mubr.bf16.mxu0 0
        %717 = vmatmul.mubr.bf16.gmra.mrb[0].mxu0 %v614
        %v718 = vpop.f32.mrb[0].mxu0
        %v719 = vadd.f32 0.0, %v718
        %v720 = vpop.f32.mrb[0].mxu0
        %v721 = vpop.f32.mrb[0].mxu0
        %v722 = vadd.f32 0.0, %v721
        %v723 = vpop.f32.mrb[0].mxu0
        %724 = vmatprep.mubr.bf16.mxu0 0
        %725 = vmatmul.mubr.bf16.gmra.mrb[0].mxu0 %v615
        %v726 = vpop.f32.mrb[0].mxu0
        %v727 = vadd.f32 0.0, %v726
        %v728 = vpop.f32.mrb[0].mxu0
        %v729 = vpop.f32.mrb[0].mxu0
        %v730 = vadd.f32 0.0, %v729
        %v731 = vpop.f32.mrb[0].mxu0
        %732 = vdwg.mxu0
        %v741 = vunpack.c.l.b16 %v544
        %v742 = vunpack.c.l.b16 %v545
        %v743 = vunpack.c.l.b16 %v546
        %v744 = vunpack.c.l.b16 %v547
        %v745 = vunpack.c.l.b16 %v548
        %v746 = vunpack.c.l.b16 %v549
        %v747 = vunpack.c.l.b16 %v550
        %v748 = vunpack.c.l.b16 %v551
        %v749 = vpack.c.b16 %v742, %v741
        %v750 = vpack.c.b16 %v744, %v743
        %v751 = vpack.c.b16 %v746, %v745
        %v752 = vpack.c.b16 %v748, %v747
        %v773 = vunpack.c.l.b16 %v552
        %v774 = vunpack.c.l.b16 %v553
        %v775 = vunpack.c.l.b16 %v554
        %v776 = vunpack.c.l.b16 %v555
        %v777 = vunpack.c.l.b16 %v556
        %v778 = vunpack.c.l.b16 %v557
        %v779 = vunpack.c.l.b16 %v558
        %v780 = vunpack.c.l.b16 %v559
        %v781 = vunpack.c.l.b16 %v560
        %v782 = vunpack.c.l.b16 %v561
        %v783 = vunpack.c.l.b16 %v562
        %v784 = vunpack.c.l.b16 %v563
        %v785 = vunpack.c.l.b16 %v564
        %v786 = vunpack.c.l.b16 %v565
        %v787 = vunpack.c.l.b16 %v566
        %v788 = vunpack.c.l.b16 %v567
        %v789 = vpack.c.b16 %v774, %v773
        %v790 = vpack.c.b16 %v776, %v775
        %v791 = vpack.c.b16 %v778, %v777
        %v792 = vpack.c.b16 %v780, %v779
        %v793 = vpack.c.b16 %v782, %v781
        %v794 = vpack.c.b16 %v784, %v783
        %v795 = vpack.c.b16 %v786, %v785
        %v796 = vpack.c.b16 %v788, %v787
        %805 = vmatprep.subr.bf16.mxu0 0
        %806 = vmatpush1.bf16.msra.mxu0 %v789
        %807 = vmatprep.subr.bf16.mxu0 0
        %808 = vmatpush1.bf16.msra.mxu0 %v790
        %809 = vmatprep.subr.bf16.mxu0 0
        %810 = vmatpush1.bf16.msra.mxu0 %v791
        %811 = vmatprep.subr.bf16.mxu0 0
        %812 = vmatpush1.bf16.msra.mxu0 %v792
        %813 = vmatprep.subr.bf16.mxu0 0
        %814 = vmatpush1.bf16.msra.mxu0 %v793
        %815 = vmatprep.subr.bf16.mxu0 0
        %816 = vmatpush1.bf16.msra.mxu0 %v794
        %817 = vmatprep.subr.bf16.mxu0 0
        %818 = vmatpush1.bf16.msra.mxu0 %v795
        %819 = vmatprep.subr.bf16.mxu0 0
        %820 = vmatpush1.bf16.msra.mxu0 %v796
        %821 = vmatprep.subr.bf16.mxu0 0
        %822 = vmatpush1.bf16.msra.mxu0 0
        %823 = vmatprep.subr.bf16.mxu0 0
        %824 = vmatpush1.bf16.msra.mxu0 0
        %825 = vmatprep.subr.bf16.mxu0 0
        %826 = vmatpush1.bf16.msra.mxu0 0
        %827 = vmatprep.subr.bf16.mxu0 0
        %828 = vmatpush1.bf16.msra.mxu0 0
        %829 = vmatprep.subr.bf16.mxu0 0
        %830 = vmatpush1.bf16.msra.mxu0 0
        %831 = vmatprep.subr.bf16.mxu0 0
        %832 = vmatpush1.bf16.msra.mxu0 0
        %833 = vmatprep.subr.bf16.mxu0 0
        %834 = vmatpush1.bf16.msra.mxu0 0
        %835 = vmatprep.subr.bf16.mxu0 0
        %836 = vmatpush1.bf16.msra.mxu0 0
        %837 = vmatprep.mubr.bf16.mxu0 0
        %838 = vmatmul.mubr.bf16.gmra.mrb[0].mxu0 %v749
        %v839 = vpop.f32.mrb[0].mxu0
        %v840 = vadd.f32 %v703, %v839
        %v841 = vpop.f32.mrb[0].mxu0
        %v842 = vpop.f32.mrb[0].mxu0
        %v843 = vadd.f32 %v706, %v842
        %v844 = vpop.f32.mrb[0].mxu0
        %845 = vmatprep.mubr.bf16.mxu0 0
        %846 = vmatmul.mubr.bf16.gmra.mrb[0].mxu0 %v750
        %v847 = vpop.f32.mrb[0].mxu0
        %v848 = vadd.f32 %v711, %v847
        %v849 = vpop.f32.mrb[0].mxu0
        %v850 = vpop.f32.mrb[0].mxu0
        %v851 = vadd.f32 %v714, %v850
        %v852 = vpop.f32.mrb[0].mxu0
        %853 = vmatprep.mubr.bf16.mxu0 0
        %854 = vmatmul.mubr.bf16.gmra.mrb[0].mxu0 %v751
        %v855 = vpop.f32.mrb[0].mxu0
        %v856 = vadd.f32 %v719, %v855
        %v857 = vpop.f32.mrb[0].mxu0
        %v858 = vpop.f32.mrb[0].mxu0
        %v859 = vadd.f32 %v722, %v858
        %v860 = vpop.f32.mrb[0].mxu0
        %861 = vmatprep.mubr.bf16.mxu0 0
        %862 = vmatmul.mubr.bf16.gmra.mrb[0].mxu0 %v752
        %v863 = vpop.f32.mrb[0].mxu0
        %v864 = vadd.f32 %v727, %v863
        %v865 = vpop.f32.mrb[0].mxu0
        %v866 = vpop.f32.mrb[0].mxu0
        %v867 = vadd.f32 %v730, %v866
        %v868 = vpop.f32.mrb[0].mxu0
        %869 = vdwg.mxu0
        %v870 = vld [vmem:[%s543] sm:$0xf]
        %v871 = vld [vmem:[%s543 + $0x4] sm:$0x1]
        %v872 = vld [vmem:[%s543 + $0x8] sm:$0xf]
        %v873 = vld [vmem:[%s543 + $0xc] sm:$0x1]
        %v874 = vld [vmem:[%s543 + $0x10] sm:$0xf]
        %v875 = vld [vmem:[%s543 + $0x14] sm:$0x1]
        %v876 = vld [vmem:[%s543 + $0x18] sm:$0xf]
        %v877 = vld [vmem:[%s543 + $0x1c] sm:$0x1]
        %v878 = vld [vmem:[%s543 + $0x20] sm:$0xf]
        %v879 = vld [vmem:[%s543 + $0x24] sm:$0x1]
        %v880 = vld [vmem:[%s543 + $0x28] sm:$0xf]
        %v881 = vld [vmem:[%s543 + $0x2c] sm:$0x1]
        %v882 = vld [vmem:[%s543 + $0x30] sm:$0xf]
        %v883 = vld [vmem:[%s543 + $0x34] sm:$0x1]
        %v884 = vld [vmem:[%s543 + $0x38] sm:$0xf]
        %v885 = vld [vmem:[%s543 + $0x3c] sm:$0x1]
        %vm886 = vsmask.f32 3328
        %vm887 = vsmask.f32 7440
        %vm888 = vmor %vm886, %vm887
        %v890 = vshrl.u32 %v870, 16
        %v892 = vrot.slane %v890, 4
        %v893 = vshll.u32 %v870, 16
        %v895 = vrot.slane %v893, 5
        %v896 = vor.u32 %v892, %v895
        %v897 = vrot.slane %v896, 4
        %v899 = vshll.u32 %v871, 16
        %v901 = vrot.slane %v899, 5
        %v902 = vsel %vm888, %v897, %v901
        %v904 = vshrl.u32 %v872, 16
        %v906 = vrot.slane %v904, 4
        %v907 = vshll.u32 %v872, 16
        %v909 = vrot.slane %v907, 5
        %v910 = vor.u32 %v906, %v909
        %v911 = vrot.slane %v910, 4
        %v913 = vshll.u32 %v873, 16
        %v915 = vrot.slane %v913, 5
        %v916 = vsel %vm888, %v911, %v915
        %v918 = vshrl.u32 %v874, 16
        %v920 = vrot.slane %v918, 4
        %v921 = vshll.u32 %v874, 16
        %v923 = vrot.slane %v921, 5
        %v924 = vor.u32 %v920, %v923
        %v925 = vrot.slane %v924, 4
        %v927 = vshll.u32 %v875, 16
        %v929 = vrot.slane %v927, 5
        %v930 = vsel %vm888, %v925, %v929
        %v932 = vshrl.u32 %v876, 16
        %v934 = vrot.slane %v932, 4
        %v935 = vshll.u32 %v876, 16
        %v937 = vrot.slane %v935, 5
        %v938 = vor.u32 %v934, %v937
        %v939 = vrot.slane %v938, 4
        %v941 = vshll.u32 %v877, 16
        %v943 = vrot.slane %v941, 5
        %v944 = vsel %vm888, %v939, %v943
        %v946 = vshrl.u32 %v878, 16
        %v948 = vrot.slane %v946, 4
        %v949 = vshll.u32 %v878, 16
        %v951 = vrot.slane %v949, 5
        %v952 = vor.u32 %v948, %v951
        %v953 = vrot.slane %v952, 4
        %v955 = vshll.u32 %v879, 16
        %v957 = vrot.slane %v955, 5
        %v958 = vsel %vm888, %v953, %v957
        %v960 = vshrl.u32 %v880, 16
        %v962 = vrot.slane %v960, 4
        %v963 = vshll.u32 %v880, 16
        %v965 = vrot.slane %v963, 5
        %v966 = vor.u32 %v962, %v965
        %v967 = vrot.slane %v966, 4
        %v969 = vshll.u32 %v881, 16
        %v971 = vrot.slane %v969, 5
        %v972 = vsel %vm888, %v967, %v971
        %v974 = vshrl.u32 %v882, 16
        %v976 = vrot.slane %v974, 4
        %v977 = vshll.u32 %v882, 16
        %v979 = vrot.slane %v977, 5
        %v980 = vor.u32 %v976, %v979
        %v981 = vrot.slane %v980, 4
        %v983 = vshll.u32 %v883, 16
        %v985 = vrot.slane %v983, 5
        %v986 = vsel %vm888, %v981, %v985
        %v988 = vshrl.u32 %v884, 16
        %v990 = vrot.slane %v988, 4
        %v991 = vshll.u32 %v884, 16
        %v993 = vrot.slane %v991, 5
        %v994 = vor.u32 %v990, %v993
        %v995 = vrot.slane %v994, 4
        %v997 = vshll.u32 %v885, 16
        %v999 = vrot.slane %v997, 5
        %v1000 = vsel %vm888, %v995, %v999
        %s1001 = scalar_lea.vmem %s1, 128
        %v1002 = vld [vmem:[%s1001] sm:$0xf]
        %v1003 = vld [vmem:[%s1001 + $0x4] sm:$0xf]
        %v1004 = vld [vmem:[%s1001 + $0x8] sm:$0xf]
        %v1005 = vld [vmem:[%s1001 + $0xc] sm:$0xf]
        %v1006 = vld [vmem:[%s1001 + $0x10] sm:$0xf]
        %v1007 = vld [vmem:[%s1001 + $0x14] sm:$0xf]
        %v1008 = vld [vmem:[%s1001 + $0x18] sm:$0xf]
        %v1009 = vld [vmem:[%s1001 + $0x1c] sm:$0xf]
        %v1010 = vld [vmem:[%s1001 + $0x20] sm:$0xf]
        %v1011 = vld [vmem:[%s1001 + $0x24] sm:$0xf]
        %v1012 = vld [vmem:[%s1001 + $0x28] sm:$0xf]
        %v1013 = vld [vmem:[%s1001 + $0x2c] sm:$0xf]
        %v1014 = vld [vmem:[%s1001 + $0x30] sm:$0xf]
        %v1015 = vld [vmem:[%s1001 + $0x34] sm:$0xf]
        %v1016 = vld [vmem:[%s1001 + $0x38] sm:$0xf]
        %v1017 = vld [vmem:[%s1001 + $0x3c] sm:$0xf]
        %v1018 = vunpack.c.l.b16 %v902
        %v1019 = vunpack.c.l.b16 %v916
        %v1020 = vunpack.c.l.b16 %v930
        %v1021 = vunpack.c.l.b16 %v944
        %v1022 = vunpack.c.l.b16 %v958
        %v1023 = vunpack.c.l.b16 %v972
        %v1024 = vunpack.c.l.b16 %v986
        %v1025 = vunpack.c.l.b16 %v1000
        %v1026 = vpack.c.b16 %v1019, %v1018
        %v1027 = vpack.c.b16 %v1021, %v1020
        %v1028 = vpack.c.b16 %v1023, %v1022
        %v1029 = vpack.c.b16 %v1025, %v1024
        %v1050 = vunpack.c.l.b16 %v1002
        %v1051 = vunpack.c.l.b16 %v1003
        %v1052 = vunpack.c.l.b16 %v1004
        %v1053 = vunpack.c.l.b16 %v1005
        %v1054 = vunpack.c.l.b16 %v1006
        %v1055 = vunpack.c.l.b16 %v1007
        %v1056 = vunpack.c.l.b16 %v1008
        %v1057 = vunpack.c.l.b16 %v1009
        %v1058 = vunpack.c.l.b16 %v1010
        %v1059 = vunpack.c.l.b16 %v1011
        %v1060 = vunpack.c.l.b16 %v1012
        %v1061 = vunpack.c.l.b16 %v1013
        %v1062 = vunpack.c.l.b16 %v1014
        %v1063 = vunpack.c.l.b16 %v1015
        %v1064 = vunpack.c.l.b16 %v1016
        %v1065 = vunpack.c.l.b16 %v1017
        %v1066 = vpack.c.b16 %v1051, %v1050
        %v1067 = vpack.c.b16 %v1053, %v1052
        %v1068 = vpack.c.b16 %v1055, %v1054
        %v1069 = vpack.c.b16 %v1057, %v1056
        %v1070 = vpack.c.b16 %v1059, %v1058
        %v1071 = vpack.c.b16 %v1061, %v1060
        %v1072 = vpack.c.b16 %v1063, %v1062
        %v1073 = vpack.c.b16 %v1065, %v1064
        %1082 = vmatprep.subr.bf16.mxu0 0
        %1083 = vmatpush1.bf16.msra.mxu0 %v1066
        %1084 = vmatprep.subr.bf16.mxu0 0
        %1085 = vmatpush1.bf16.msra.mxu0 %v1067
        %1086 = vmatprep.subr.bf16.mxu0 0
        %1087 = vmatpush1.bf16.msra.mxu0 %v1068
        %1088 = vmatprep.subr.bf16.mxu0 0
        %1089 = vmatpush1.bf16.msra.mxu0 %v1069
        %1090 = vmatprep.subr.bf16.mxu0 0
        %1091 = vmatpush1.bf16.msra.mxu0 %v1070
        %1092 = vmatprep.subr.bf16.mxu0 0
        %1093 = vmatpush1.bf16.msra.mxu0 %v1071
        %1094 = vmatprep.subr.bf16.mxu0 0
        %1095 = vmatpush1.bf16.msra.mxu0 %v1072
        %1096 = vmatprep.subr.bf16.mxu0 0
        %1097 = vmatpush1.bf16.msra.mxu0 %v1073
        %1098 = vmatprep.subr.bf16.mxu0 0
        %1099 = vmatpush1.bf16.msra.mxu0 0
        %1100 = vmatprep.subr.bf16.mxu0 0
        %1101 = vmatpush1.bf16.msra.mxu0 0
        %1102 = vmatprep.subr.bf16.mxu0 0
        %1103 = vmatpush1.bf16.msra.mxu0 0
        %1104 = vmatprep.subr.bf16.mxu0 0
        %1105 = vmatpush1.bf16.msra.mxu0 0
        %1106 = vmatprep.subr.bf16.mxu0 0
        %1107 = vmatpush1.bf16.msra.mxu0 0
        %1108 = vmatprep.subr.bf16.mxu0 0
        %1109 = vmatpush1.bf16.msra.mxu0 0
        %1110 = vmatprep.subr.bf16.mxu0 0
        %1111 = vmatpush1.bf16.msra.mxu0 0
        %1112 = vmatprep.subr.bf16.mxu0 0
        %1113 = vmatpush1.bf16.msra.mxu0 0
        %1114 = vmatprep.mubr.bf16.mxu0 0
        %1115 = vmatmul.mubr.bf16.gmra.mrb[0].mxu0 %v1026
        %v1116 = vpop.f32.mrb[0].mxu0
        %v1117 = vadd.f32 0.0, %v1116
        %v1118 = vpop.f32.mrb[0].mxu0
        %v1119 = vpop.f32.mrb[0].mxu0
        %v1120 = vadd.f32 0.0, %v1119
        %v1121 = vpop.f32.mrb[0].mxu0
        %1122 = vmatprep.mubr.bf16.mxu0 0
        %1123 = vmatmul.mubr.bf16.gmra.mrb[0].mxu0 %v1027
        %v1124 = vpop.f32.mrb[0].mxu0
        %v1125 = vadd.f32 0.0, %v1124
        %v1126 = vpop.f32.mrb[0].mxu0
        %v1127 = vpop.f32.mrb[0].mxu0
        %v1128 = vadd.f32 0.0, %v1127
        %v1129 = vpop.f32.mrb[0].mxu0
        %1130 = vmatprep.mubr.bf16.mxu0 0
        %1131 = vmatmul.mubr.bf16.gmra.mrb[0].mxu0 %v1028
        %v1132 = vpop.f32.mrb[0].mxu0
        %v1133 = vadd.f32 0.0, %v1132
        %v1134 = vpop.f32.mrb[0].mxu0
        %v1135 = vpop.f32.mrb[0].mxu0
        %v1136 = vadd.f32 0.0, %v1135
        %v1137 = vpop.f32.mrb[0].mxu0
        %1138 = vmatprep.mubr.bf16.mxu0 0
        %1139 = vmatmul.mubr.bf16.gmra.mrb[0].mxu0 %v1029
        %v1140 = vpop.f32.mrb[0].mxu0
        %v1141 = vadd.f32 0.0, %v1140
        %v1142 = vpop.f32.mrb[0].mxu0
        %v1143 = vpop.f32.mrb[0].mxu0
        %v1144 = vadd.f32 0.0, %v1143
        %v1145 = vpop.f32.mrb[0].mxu0
        %1146 = vdwg.mxu0
        %v1147 = vadd.f32 %v840, %v1117
        %v1148 = vadd.f32 %v843, %v1120
        %v1149 = vadd.f32 %v848, %v1125
        %v1150 = vadd.f32 %v851, %v1128
        %v1151 = vadd.f32 %v856, %v1133
        %v1152 = vadd.f32 %v859, %v1136
        %v1153 = vadd.f32 %v864, %v1141
        %v1154 = vadd.f32 %v867, %v1144
        %s1155 = sadd.s32 %s541, 36
        %s1156 = smul.addr %s1155, 4
        %s1157 = scalar_lea.vmem %s490, %s1156 [#allocation2]
        %v1158 = vld [vmem:[%s1157] sm:$0xf]
        %v1159 = vld [vmem:[%s1157 + $0x8] sm:$0xf]
        %v1160 = vld [vmem:[%s1157 + $0x10] sm:$0xf]
        %v1161 = vld [vmem:[%s1157 + $0x18] sm:$0xf]
        %v1162 = vld [vmem:[%s1157 + $0x20] sm:$0xf]
        %v1163 = vld [vmem:[%s1157 + $0x28] sm:$0xf]
        %v1164 = vld [vmem:[%s1157 + $0x30] sm:$0xf]
        %v1165 = vld [vmem:[%s1157 + $0x38] sm:$0xf]
        %s1166 = scalar_lea.vmem %s1, 192
        %v1167 = vld [vmem:[%s1166] sm:$0xf]
        %v1168 = vld [vmem:[%s1166 + $0x4] sm:$0xf]
        %v1169 = vld [vmem:[%s1166 + $0x8] sm:$0xf]
        %v1170 = vld [vmem:[%s1166 + $0xc] sm:$0xf]
        %v1171 = vld [vmem:[%s1166 + $0x10] sm:$0xf]
        %v1172 = vld [vmem:[%s1166 + $0x14] sm:$0xf]
        %v1173 = vld [vmem:[%s1166 + $0x18] sm:$0xf]
        %v1174 = vld [vmem:[%s1166 + $0x1c] sm:$0xf]
        %v1175 = vld [vmem:[%s1166 + $0x20] sm:$0xf]
        %v1176 = vld [vmem:[%s1166 + $0x24] sm:$0xf]
        %v1177 = vld [vmem:[%s1166 + $0x28] sm:$0xf]
        %v1178 = vld [vmem:[%s1166 + $0x2c] sm:$0xf]
        %v1179 = vld [vmem:[%s1166 + $0x30] sm:$0xf]
        %v1180 = vld [vmem:[%s1166 + $0x34] sm:$0xf]
        %v1181 = vld [vmem:[%s1166 + $0x38] sm:$0xf]
        %v1182 = vld [vmem:[%s1166 + $0x3c] sm:$0xf]
        %v1191 = vunpack.c.l.b16 %v1158
        %v1192 = vunpack.c.l.b16 %v1159
        %v1193 = vunpack.c.l.b16 %v1160
        %v1194 = vunpack.c.l.b16 %v1161
        %v1195 = vunpack.c.l.b16 %v1162
        %v1196 = vunpack.c.l.b16 %v1163
        %v1197 = vunpack.c.l.b16 %v1164
        %v1198 = vunpack.c.l.b16 %v1165
        %v1199 = vpack.c.b16 %v1192, %v1191
        %v1200 = vpack.c.b16 %v1194, %v1193
        %v1201 = vpack.c.b16 %v1196, %v1195
        %v1202 = vpack.c.b16 %v1198, %v1197
        %v1223 = vunpack.c.l.b16 %v1167
        %v1224 = vunpack.c.l.b16 %v1168
        %v1225 = vunpack.c.l.b16 %v1169
        %v1226 = vunpack.c.l.b16 %v1170
        %v1227 = vunpack.c.l.b16 %v1171
        %v1228 = vunpack.c.l.b16 %v1172
        %v1229 = vunpack.c.l.b16 %v1173
        %v1230 = vunpack.c.l.b16 %v1174
        %v1231 = vunpack.c.l.b16 %v1175
        %v1232 = vunpack.c.l.b16 %v1176
        %v1233 = vunpack.c.l.b16 %v1177
        %v1234 = vunpack.c.l.b16 %v1178
        %v1235 = vunpack.c.l.b16 %v1179
        %v1236 = vunpack.c.l.b16 %v1180
        %v1237 = vunpack.c.l.b16 %v1181
        %v1238 = vunpack.c.l.b16 %v1182
        %v1239 = vpack.c.b16 %v1224, %v1223
        %v1240 = vpack.c.b16 %v1226, %v1225
        %v1241 = vpack.c.b16 %v1228, %v1227
        %v1242 = vpack.c.b16 %v1230, %v1229
        %v1243 = vpack.c.b16 %v1232, %v1231
        %v1244 = vpack.c.b16 %v1234, %v1233
        %v1245 = vpack.c.b16 %v1236, %v1235
        %v1246 = vpack.c.b16 %v1238, %v1237
        %1255 = vmatprep.subr.bf16.mxu0 0
        %1256 = vmatpush1.bf16.msra.mxu0 %v1239
        %1257 = vmatprep.subr.bf16.mxu0 0
        %1258 = vmatpush1.bf16.msra.mxu0 %v1240
        %1259 = vmatprep.subr.bf16.mxu0 0
        %1260 = vmatpush1.bf16.msra.mxu0 %v1241
        %1261 = vmatprep.subr.bf16.mxu0 0
        %1262 = vmatpush1.bf16.msra.mxu0 %v1242
        %1263 = vmatprep.subr.bf16.mxu0 0
        %1264 = vmatpush1.bf16.msra.mxu0 %v1243
        %1265 = vmatprep.subr.bf16.mxu0 0
        %1266 = vmatpush1.bf16.msra.mxu0 %v1244
        %1267 = vmatprep.subr.bf16.mxu0 0
        %1268 = vmatpush1.bf16.msra.mxu0 %v1245
        %1269 = vmatprep.subr.bf16.mxu0 0
        %1270 = vmatpush1.bf16.msra.mxu0 %v1246
        %1271 = vmatprep.subr.bf16.mxu0 0
        %1272 = vmatpush1.bf16.msra.mxu0 0
        %1273 = vmatprep.subr.bf16.mxu0 0
        %1274 = vmatpush1.bf16.msra.mxu0 0
        %1275 = vmatprep.subr.bf16.mxu0 0
        %1276 = vmatpush1.bf16.msra.mxu0 0
        %1277 = vmatprep.subr.bf16.mxu0 0
        %1278 = vmatpush1.bf16.msra.mxu0 0
        %1279 = vmatprep.subr.bf16.mxu0 0
        %1280 = vmatpush1.bf16.msra.mxu0 0
        %1281 = vmatprep.subr.bf16.mxu0 0
        %1282 = vmatpush1.bf16.msra.mxu0 0
        %1283 = vmatprep.subr.bf16.mxu0 0
        %1284 = vmatpush1.bf16.msra.mxu0 0
        %1285 = vmatprep.subr.bf16.mxu0 0
        %1286 = vmatpush1.bf16.msra.mxu0 0
        %1287 = vmatprep.mubr.bf16.mxu0 0
        %1288 = vmatmul.mubr.bf16.gmra.mrb[0].mxu0 %v1199
        %v1289 = vpop.f32.mrb[0].mxu0
        %v1290 = vadd.f32 0.0, %v1289
        %v1291 = vpop.f32.mrb[0].mxu0
        %v1292 = vpop.f32.mrb[0].mxu0
        %v1293 = vadd.f32 0.0, %v1292
        %v1294 = vpop.f32.mrb[0].mxu0
        %1295 = vmatprep.mubr.bf16.mxu0 0
        %1296 = vmatmul.mubr.bf16.gmra.mrb[0].mxu0 %v1200
        %v1297 = vpop.f32.mrb[0].mxu0
        %v1298 = vadd.f32 0.0, %v1297
        %v1299 = vpop.f32.mrb[0].mxu0
        %v1300 = vpop.f32.mrb[0].mxu0
        %v1301 = vadd.f32 0.0, %v1300
        %v1302 = vpop.f32.mrb[0].mxu0
        %1303 = vmatprep.mubr.bf16.mxu0 0
        %1304 = vmatmul.mubr.bf16.gmra.mrb[0].mxu0 %v1201
        %v1305 = vpop.f32.mrb[0].mxu0
        %v1306 = vadd.f32 0.0, %v1305
        %v1307 = vpop.f32.mrb[0].mxu0
        %v1308 = vpop.f32.mrb[0].mxu0
        %v1309 = vadd.f32 0.0, %v1308
        %v1310 = vpop.f32.mrb[0].mxu0
        %1311 = vmatprep.mubr.bf16.mxu0 0
        %1312 = vmatmul.mubr.bf16.gmra.mrb[0].mxu0 %v1202
        %v1313 = vpop.f32.mrb[0].mxu0
        %v1314 = vadd.f32 0.0, %v1313
        %v1315 = vpop.f32.mrb[0].mxu0
        %v1316 = vpop.f32.mrb[0].mxu0
        %v1317 = vadd.f32 0.0, %v1316
        %v1318 = vpop.f32.mrb[0].mxu0
        %1319 = vdwg.mxu0
        %v1320 = vadd.f32 %v1147, %v1290
        %v1321 = vadd.f32 %v1148, %v1293
        %v1322 = vadd.f32 %v1149, %v1298
        %v1323 = vadd.f32 %v1150, %v1301
        %v1324 = vadd.f32 %v1151, %v1306
        %v1325 = vadd.f32 %v1152, %v1309
        %v1326 = vadd.f32 %v1153, %v1314
        %v1327 = vadd.f32 %v1154, %v1317
        %s1328 = sadd.s32 %s541, 54
        %s1329 = smul.addr %s1328, 4
        %s1330 = scalar_lea.vmem %s490, %s1329 [#allocation2]
        %v1331 = vld [vmem:[%s1330] sm:$0xf]
        %v1332 = vld [vmem:[%s1330 + $0x8] sm:$0xf]
        %v1333 = vld [vmem:[%s1330 + $0x10] sm:$0xf]
        %v1334 = vld [vmem:[%s1330 + $0x18] sm:$0xf]
        %v1335 = vld [vmem:[%s1330 + $0x20] sm:$0xf]
        %v1336 = vld [vmem:[%s1330 + $0x28] sm:$0xf]
        %v1337 = vld [vmem:[%s1330 + $0x30] sm:$0xf]
        %v1338 = vld [vmem:[%s1330 + $0x38] sm:$0xf]
        %s1339 = scalar_lea.vmem %s1, 256
        %v1340 = vld [vmem:[%s1339] sm:$0xf]
        %v1341 = vld [vmem:[%s1339 + $0x4] sm:$0xf]
        %v1342 = vld [vmem:[%s1339 + $0x8] sm:$0xf]
        %v1343 = vld [vmem:[%s1339 + $0xc] sm:$0xf]
        %v1344 = vld [vmem:[%s1339 + $0x10] sm:$0xf]
        %v1345 = vld [vmem:[%s1339 + $0x14] sm:$0xf]
        %v1346 = vld [vmem:[%s1339 + $0x18] sm:$0xf]
        %v1347 = vld [vmem:[%s1339 + $0x1c] sm:$0xf]
        %v1348 = vld [vmem:[%s1339 + $0x20] sm:$0xf]
        %v1349 = vld [vmem:[%s1339 + $0x24] sm:$0xf]
        %v1350 = vld [vmem:[%s1339 + $0x28] sm:$0xf]
        %v1351 = vld [vmem:[%s1339 + $0x2c] sm:$0xf]
        %v1352 = vld [vmem:[%s1339 + $0x30] sm:$0xf]
        %v1353 = vld [vmem:[%s1339 + $0x34] sm:$0xf]
        %v1354 = vld [vmem:[%s1339 + $0x38] sm:$0xf]
        %v1355 = vld [vmem:[%s1339 + $0x3c] sm:$0xf]
        %v1364 = vunpack.c.l.b16 %v1331
        %v1365 = vunpack.c.l.b16 %v1332
        %v1366 = vunpack.c.l.b16 %v1333
        %v1367 = vunpack.c.l.b16 %v1334
        %v1368 = vunpack.c.l.b16 %v1335
        %v1369 = vunpack.c.l.b16 %v1336
        %v1370 = vunpack.c.l.b16 %v1337
        %v1371 = vunpack.c.l.b16 %v1338
        %v1372 = vpack.c.b16 %v1365, %v1364
        %v1373 = vpack.c.b16 %v1367, %v1366
        %v1374 = vpack.c.b16 %v1369, %v1368
        %v1375 = vpack.c.b16 %v1371, %v1370
        %v1396 = vunpack.c.l.b16 %v1340
        %v1397 = vunpack.c.l.b16 %v1341
        %v1398 = vunpack.c.l.b16 %v1342
        %v1399 = vunpack.c.l.b16 %v1343
        %v1400 = vunpack.c.l.b16 %v1344
        %v1401 = vunpack.c.l.b16 %v1345
        %v1402 = vunpack.c.l.b16 %v1346
        %v1403 = vunpack.c.l.b16 %v1347
        %v1404 = vunpack.c.l.b16 %v1348
        %v1405 = vunpack.c.l.b16 %v1349
        %v1406 = vunpack.c.l.b16 %v1350
        %v1407 = vunpack.c.l.b16 %v1351
        %v1408 = vunpack.c.l.b16 %v1352
        %v1409 = vunpack.c.l.b16 %v1353
        %v1410 = vunpack.c.l.b16 %v1354
        %v1411 = vunpack.c.l.b16 %v1355
        %v1412 = vpack.c.b16 %v1397, %v1396
        %v1413 = vpack.c.b16 %v1399, %v1398
        %v1414 = vpack.c.b16 %v1401, %v1400
        %v1415 = vpack.c.b16 %v1403, %v1402
        %v1416 = vpack.c.b16 %v1405, %v1404
        %v1417 = vpack.c.b16 %v1407, %v1406
        %v1418 = vpack.c.b16 %v1409, %v1408
        %v1419 = vpack.c.b16 %v1411, %v1410
        %1428 = vmatprep.subr.bf16.mxu0 0
        %1429 = vmatpush1.bf16.msra.mxu0 %v1412
        %1430 = vmatprep.subr.bf16.mxu0 0
        %1431 = vmatpush1.bf16.msra.mxu0 %v1413
        %1432 = vmatprep.subr.bf16.mxu0 0
        %1433 = vmatpush1.bf16.msra.mxu0 %v1414
        %1434 = vmatprep.subr.bf16.mxu0 0
        %1435 = vmatpush1.bf16.msra.mxu0 %v1415
        %1436 = vmatprep.subr.bf16.mxu0 0
        %1437 = vmatpush1.bf16.msra.mxu0 %v1416
        %1438 = vmatprep.subr.bf16.mxu0 0
        %1439 = vmatpush1.bf16.msra.mxu0 %v1417
        %1440 = vmatprep.subr.bf16.mxu0 0
        %1441 = vmatpush1.bf16.msra.mxu0 %v1418
        %1442 = vmatprep.subr.bf16.mxu0 0
        %1443 = vmatpush1.bf16.msra.mxu0 %v1419
        %1444 = vmatprep.subr.bf16.mxu0 0
        %1445 = vmatpush1.bf16.msra.mxu0 0
        %1446 = vmatprep.subr.bf16.mxu0 0
        %1447 = vmatpush1.bf16.msra.mxu0 0
        %1448 = vmatprep.subr.bf16.mxu0 0
        %1449 = vmatpush1.bf16.msra.mxu0 0
        %1450 = vmatprep.subr.bf16.mxu0 0
        %1451 = vmatpush1.bf16.msra.mxu0 0
        %1452 = vmatprep.subr.bf16.mxu0 0
        %1453 = vmatpush1.bf16.msra.mxu0 0
        %1454 = vmatprep.subr.bf16.mxu0 0
        %1455 = vmatpush1.bf16.msra.mxu0 0
        %1456 = vmatprep.subr.bf16.mxu0 0
        %1457 = vmatpush1.bf16.msra.mxu0 0
        %1458 = vmatprep.subr.bf16.mxu0 0
        %1459 = vmatpush1.bf16.msra.mxu0 0
        %1460 = vmatprep.mubr.bf16.mxu0 0
        %1461 = vmatmul.mubr.bf16.gmra.mrb[0].mxu0 %v1372
        %v1462 = vpop.f32.mrb[0].mxu0
        %v1463 = vadd.f32 0.0, %v1462
        %v1464 = vpop.f32.mrb[0].mxu0
        %v1465 = vpop.f32.mrb[0].mxu0
        %v1466 = vadd.f32 0.0, %v1465
        %v1467 = vpop.f32.mrb[0].mxu0
        %1468 = vmatprep.mubr.bf16.mxu0 0
        %1469 = vmatmul.mubr.bf16.gmra.mrb[0].mxu0 %v1373
        %v1470 = vpop.f32.mrb[0].mxu0
        %v1471 = vadd.f32 0.0, %v1470
        %v1472 = vpop.f32.mrb[0].mxu0
        %v1473 = vpop.f32.mrb[0].mxu0
        %v1474 = vadd.f32 0.0, %v1473
        %v1475 = vpop.f32.mrb[0].mxu0
        %1476 = vmatprep.mubr.bf16.mxu0 0
        %1477 = vmatmul.mubr.bf16.gmra.mrb[0].mxu0 %v1374
        %v1478 = vpop.f32.mrb[0].mxu0
        %v1479 = vadd.f32 0.0, %v1478
        %v1480 = vpop.f32.mrb[0].mxu0
        %v1481 = vpop.f32.mrb[0].mxu0
        %v1482 = vadd.f32 0.0, %v1481
        %v1483 = vpop.f32.mrb[0].mxu0
        %1484 = vmatprep.mubr.bf16.mxu0 0
        %1485 = vmatmul.mubr.bf16.gmra.mrb[0].mxu0 %v1375
        %v1486 = vpop.f32.mrb[0].mxu0
        %v1487 = vadd.f32 0.0, %v1486
        %v1488 = vpop.f32.mrb[0].mxu0
        %v1489 = vpop.f32.mrb[0].mxu0
        %v1490 = vadd.f32 0.0, %v1489
        %v1491 = vpop.f32.mrb[0].mxu0
        %1492 = vdwg.mxu0
        %v1493 = vadd.f32 %v1320, %v1463
        %v1494 = vadd.f32 %v1321, %v1466
        %v1495 = vadd.f32 %v1322, %v1471
        %v1496 = vadd.f32 %v1323, %v1474
        %v1497 = vadd.f32 %v1324, %v1479
        %v1498 = vadd.f32 %v1325, %v1482
        %v1499 = vadd.f32 %v1326, %v1487
        %v1500 = vadd.f32 %v1327, %v1490
        %v1501 = vld [vmem:[%s1157] sm:$0xf]
        %v1502 = vld [vmem:[%s1157 + $0x4] sm:$0x1]
        %v1503 = vld [vmem:[%s1157 + $0x8] sm:$0xf]
        %v1504 = vld [vmem:[%s1157 + $0xc] sm:$0x1]
        %v1505 = vld [vmem:[%s1157 + $0x10] sm:$0xf]
        %v1506 = vld [vmem:[%s1157 + $0x14] sm:$0x1]
        %v1507 = vld [vmem:[%s1157 + $0x18] sm:$0xf]
        %v1508 = vld [vmem:[%s1157 + $0x1c] sm:$0x1]
        %v1509 = vld [vmem:[%s1157 + $0x20] sm:$0xf]
        %v1510 = vld [vmem:[%s1157 + $0x24] sm:$0x1]
        %v1511 = vld [vmem:[%s1157 + $0x28] sm:$0xf]
        %v1512 = vld [vmem:[%s1157 + $0x2c] sm:$0x1]
        %v1513 = vld [vmem:[%s1157 + $0x30] sm:$0xf]
        %v1514 = vld [vmem:[%s1157 + $0x34] sm:$0x1]
        %v1515 = vld [vmem:[%s1157 + $0x38] sm:$0xf]
        %v1516 = vld [vmem:[%s1157 + $0x3c] sm:$0x1]
        %v1518 = vshrl.u32 %v1501, 16
        %v1520 = vrot.slane %v1518, 4
        %v1521 = vshll.u32 %v1501, 16
        %v1523 = vrot.slane %v1521, 5
        %v1524 = vor.u32 %v1520, %v1523
        %v1525 = vrot.slane %v1524, 4
        %v1527 = vshll.u32 %v1502, 16
        %v1529 = vrot.slane %v1527, 5
        %v1530 = vsel %vm888, %v1525, %v1529
        %v1532 = vshrl.u32 %v1503, 16
        %v1534 = vrot.slane %v1532, 4
        %v1535 = vshll.u32 %v1503, 16
        %v1537 = vrot.slane %v1535, 5
        %v1538 = vor.u32 %v1534, %v1537
        %v1539 = vrot.slane %v1538, 4
        %v1541 = vshll.u32 %v1504, 16
        %v1543 = vrot.slane %v1541, 5
        %v1544 = vsel %vm888, %v1539, %v1543
        %v1546 = vshrl.u32 %v1505, 16
        %v1548 = vrot.slane %v1546, 4
        %v1549 = vshll.u32 %v1505, 16
        %v1551 = vrot.slane %v1549, 5
        %v1552 = vor.u32 %v1548, %v1551
        %v1553 = vrot.slane %v1552, 4
        %v1555 = vshll.u32 %v1506, 16
        %v1557 = vrot.slane %v1555, 5
        %v1558 = vsel %vm888, %v1553, %v1557
        %v1560 = vshrl.u32 %v1507, 16
        %v1562 = vrot.slane %v1560, 4
        %v1563 = vshll.u32 %v1507, 16
        %v1565 = vrot.slane %v1563, 5
        %v1566 = vor.u32 %v1562, %v1565
        %v1567 = vrot.slane %v1566, 4
        %v1569 = vshll.u32 %v1508, 16
        %v1571 = vrot.slane %v1569, 5
        %v1572 = vsel %vm888, %v1567, %v1571
        %v1574 = vshrl.u32 %v1509, 16
        %v1576 = vrot.slane %v1574, 4
        %v1577 = vshll.u32 %v1509, 16
        %v1579 = vrot.slane %v1577, 5
        %v1580 = vor.u32 %v1576, %v1579
        %v1581 = vrot.slane %v1580, 4
        %v1583 = vshll.u32 %v1510, 16
        %v1585 = vrot.slane %v1583, 5
        %v1586 = vsel %vm888, %v1581, %v1585
        %v1588 = vshrl.u32 %v1511, 16
        %v1590 = vrot.slane %v1588, 4
        %v1591 = vshll.u32 %v1511, 16
        %v1593 = vrot.slane %v1591, 5
        %v1594 = vor.u32 %v1590, %v1593
        %v1595 = vrot.slane %v1594, 4
        %v1597 = vshll.u32 %v1512, 16
        %v1599 = vrot.slane %v1597, 5
        %v1600 = vsel %vm888, %v1595, %v1599
        %v1602 = vshrl.u32 %v1513, 16
        %v1604 = vrot.slane %v1602, 4
        %v1605 = vshll.u32 %v1513, 16
        %v1607 = vrot.slane %v1605, 5
        %v1608 = vor.u32 %v1604, %v1607
        %v1609 = vrot.slane %v1608, 4
        %v1611 = vshll.u32 %v1514, 16
        %v1613 = vrot.slane %v1611, 5
        %v1614 = vsel %vm888, %v1609, %v1613
        %v1616 = vshrl.u32 %v1515, 16
        %v1618 = vrot.slane %v1616, 4
        %v1619 = vshll.u32 %v1515, 16
        %v1621 = vrot.slane %v1619, 5
        %v1622 = vor.u32 %v1618, %v1621
        %v1623 = vrot.slane %v1622, 4
        %v1625 = vshll.u32 %v1516, 16
        %v1627 = vrot.slane %v1625, 5
        %v1628 = vsel %vm888, %v1623, %v1627
        %s1629 = scalar_lea.vmem %s1, 320
        %v1630 = vld [vmem:[%s1629] sm:$0xf]
        %v1631 = vld [vmem:[%s1629 + $0x4] sm:$0xf]
        %v1632 = vld [vmem:[%s1629 + $0x8] sm:$0xf]
        %v1633 = vld [vmem:[%s1629 + $0xc] sm:$0xf]
        %v1634 = vld [vmem:[%s1629 + $0x10] sm:$0xf]
        %v1635 = vld [vmem:[%s1629 + $0x14] sm:$0xf]
        %v1636 = vld [vmem:[%s1629 + $0x18] sm:$0xf]
        %v1637 = vld [vmem:[%s1629 + $0x1c] sm:$0xf]
        %v1638 = vld [vmem:[%s1629 + $0x20] sm:$0xf]
        %v1639 = vld [vmem:[%s1629 + $0x24] sm:$0xf]
        %v1640 = vld [vmem:[%s1629 + $0x28] sm:$0xf]
        %v1641 = vld [vmem:[%s1629 + $0x2c] sm:$0xf]
        %v1642 = vld [vmem:[%s1629 + $0x30] sm:$0xf]
        %v1643 = vld [vmem:[%s1629 + $0x34] sm:$0xf]
        %v1644 = vld [vmem:[%s1629 + $0x38] sm:$0xf]
        %v1645 = vld [vmem:[%s1629 + $0x3c] sm:$0xf]
        %v1646 = vunpack.c.l.b16 %v1530
        %v1647 = vunpack.c.l.b16 %v1544
        %v1648 = vunpack.c.l.b16 %v1558
        %v1649 = vunpack.c.l.b16 %v1572
        %v1650 = vunpack.c.l.b16 %v1586
        %v1651 = vunpack.c.l.b16 %v1600
        %v1652 = vunpack.c.l.b16 %v1614
        %v1653 = vunpack.c.l.b16 %v1628
        %v1654 = vpack.c.b16 %v1647, %v1646
        %v1655 = vpack.c.b16 %v1649, %v1648
        %v1656 = vpack.c.b16 %v1651, %v1650
        %v1657 = vpack.c.b16 %v1653, %v1652
        %v1678 = vunpack.c.l.b16 %v1630
        %v1679 = vunpack.c.l.b16 %v1631
        %v1680 = vunpack.c.l.b16 %v1632
        %v1681 = vunpack.c.l.b16 %v1633
        %v1682 = vunpack.c.l.b16 %v1634
        %v1683 = vunpack.c.l.b16 %v1635
        %v1684 = vunpack.c.l.b16 %v1636
        %v1685 = vunpack.c.l.b16 %v1637
        %v1686 = vunpack.c.l.b16 %v1638
        %v1687 = vunpack.c.l.b16 %v1639
        %v1688 = vunpack.c.l.b16 %v1640
        %v1689 = vunpack.c.l.b16 %v1641
        %v1690 = vunpack.c.l.b16 %v1642
        %v1691 = vunpack.c.l.b16 %v1643
        %v1692 = vunpack.c.l.b16 %v1644
        %v1693 = vunpack.c.l.b16 %v1645
        %v1694 = vpack.c.b16 %v1679, %v1678
        %v1695 = vpack.c.b16 %v1681, %v1680
        %v1696 = vpack.c.b16 %v1683, %v1682
        %v1697 = vpack.c.b16 %v1685, %v1684
        %v1698 = vpack.c.b16 %v1687, %v1686
        %v1699 = vpack.c.b16 %v1689, %v1688
        %v1700 = vpack.c.b16 %v1691, %v1690
        %v1701 = vpack.c.b16 %v1693, %v1692
        %1710 = vmatprep.subr.bf16.mxu0 0
        %1711 = vmatpush1.bf16.msra.mxu0 %v1694
        %1712 = vmatprep.subr.bf16.mxu0 0
        %1713 = vmatpush1.bf16.msra.mxu0 %v1695
        %1714 = vmatprep.subr.bf16.mxu0 0
        %1715 = vmatpush1.bf16.msra.mxu0 %v1696
        %1716 = vmatprep.subr.bf16.mxu0 0
        %1717 = vmatpush1.bf16.msra.mxu0 %v1697
        %1718 = vmatprep.subr.bf16.mxu0 0
        %1719 = vmatpush1.bf16.msra.mxu0 %v1698
        %1720 = vmatprep.subr.bf16.mxu0 0
        %1721 = vmatpush1.bf16.msra.mxu0 %v1699
        %1722 = vmatprep.subr.bf16.mxu0 0
        %1723 = vmatpush1.bf16.msra.mxu0 %v1700
        %1724 = vmatprep.subr.bf16.mxu0 0
        %1725 = vmatpush1.bf16.msra.mxu0 %v1701
        %1726 = vmatprep.subr.bf16.mxu0 0
        %1727 = vmatpush1.bf16.msra.mxu0 0
        %1728 = vmatprep.subr.bf16.mxu0 0
        %1729 = vmatpush1.bf16.msra.mxu0 0
        %1730 = vmatprep.subr.bf16.mxu0 0
        %1731 = vmatpush1.bf16.msra.mxu0 0
        %1732 = vmatprep.subr.bf16.mxu0 0
        %1733 = vmatpush1.bf16.msra.mxu0 0
        %1734 = vmatprep.subr.bf16.mxu0 0
        %1735 = vmatpush1.bf16.msra.mxu0 0
        %1736 = vmatprep.subr.bf16.mxu0 0
        %1737 = vmatpush1.bf16.msra.mxu0 0
        %1738 = vmatprep.subr.bf16.mxu0 0
        %1739 = vmatpush1.bf16.msra.mxu0 0
        %1740 = vmatprep.subr.bf16.mxu0 0
        %1741 = vmatpush1.bf16.msra.mxu0 0
        %1742 = vmatprep.mubr.bf16.mxu0 0
        %1743 = vmatmul.mubr.bf16.gmra.mrb[0].mxu0 %v1654
        %v1744 = vpop.f32.mrb[0].mxu0
        %v1745 = vadd.f32 0.0, %v1744
        %v1746 = vpop.f32.mrb[0].mxu0
        %v1747 = vpop.f32.mrb[0].mxu0
        %v1748 = vadd.f32 0.0, %v1747
        %v1749 = vpop.f32.mrb[0].mxu0
        %1750 = vmatprep.mubr.bf16.mxu0 0
        %1751 = vmatmul.mubr.bf16.gmra.mrb[0].mxu0 %v1655
        %v1752 = vpop.f32.mrb[0].mxu0
        %v1753 = vadd.f32 0.0, %v1752
        %v1754 = vpop.f32.mrb[0].mxu0
        %v1755 = vpop.f32.mrb[0].mxu0
        %v1756 = vadd.f32 0.0, %v1755
        %v1757 = vpop.f32.mrb[0].mxu0
        %1758 = vmatprep.mubr.bf16.mxu0 0
        %1759 = vmatmul.mubr.bf16.gmra.mrb[0].mxu0 %v1656
        %v1760 = vpop.f32.mrb[0].mxu0
        %v1761 = vadd.f32 0.0, %v1760
        %v1762 = vpop.f32.mrb[0].mxu0
        %v1763 = vpop.f32.mrb[0].mxu0
        %v1764 = vadd.f32 0.0, %v1763
        %v1765 = vpop.f32.mrb[0].mxu0
        %1766 = vmatprep.mubr.bf16.mxu0 0
        %1767 = vmatmul.mubr.bf16.gmra.mrb[0].mxu0 %v1657
        %v1768 = vpop.f32.mrb[0].mxu0
        %v1769 = vadd.f32 0.0, %v1768
        %v1770 = vpop.f32.mrb[0].mxu0
        %v1771 = vpop.f32.mrb[0].mxu0
        %v1772 = vadd.f32 0.0, %v1771
        %v1773 = vpop.f32.mrb[0].mxu0
        %1774 = vdwg.mxu0
        %v1775 = vadd.f32 %v1493, %v1745
        %v1776 = vadd.f32 %v1494, %v1748
        %v1777 = vadd.f32 %v1495, %v1753
        %v1778 = vadd.f32 %v1496, %v1756
        %v1779 = vadd.f32 %v1497, %v1761
        %v1780 = vadd.f32 %v1498, %v1764
        %v1781 = vadd.f32 %v1499, %v1769
        %v1782 = vadd.f32 %v1500, %v1772
        %s1783 = sadd.s32 %s540, 1
        %s1784 = smul.u32 %s1783, 2
        %s1785 = smul.addr %s1784, 4
        %s1786 = scalar_lea.vmem %s490, %s1785 [#allocation2]
        %v1787 = vld [vmem:[%s1786] sm:$0xf]
        %v1788 = vld [vmem:[%s1786 + $0x8] sm:$0xf]
        %v1789 = vld [vmem:[%s1786 + $0x10] sm:$0xf]
        %v1790 = vld [vmem:[%s1786 + $0x18] sm:$0xf]
        %v1791 = vld [vmem:[%s1786 + $0x20] sm:$0xf]
        %v1792 = vld [vmem:[%s1786 + $0x28] sm:$0xf]
        %v1793 = vld [vmem:[%s1786 + $0x30] sm:$0xf]
        %v1794 = vld [vmem:[%s1786 + $0x38] sm:$0xf]
        %s1795 = scalar_lea.vmem %s1, 384
        %v1796 = vld [vmem:[%s1795] sm:$0xf]
        %v1797 = vld [vmem:[%s1795 + $0x4] sm:$0xf]
        %v1798 = vld [vmem:[%s1795 + $0x8] sm:$0xf]
        %v1799 = vld [vmem:[%s1795 + $0xc] sm:$0xf]
        %v1800 = vld [vmem:[%s1795 + $0x10] sm:$0xf]
        %v1801 = vld [vmem:[%s1795 + $0x14] sm:$0xf]
        %v1802 = vld [vmem:[%s1795 + $0x18] sm:$0xf]
        %v1803 = vld [vmem:[%s1795 + $0x1c] sm:$0xf]
        %v1804 = vld [vmem:[%s1795 + $0x20] sm:$0xf]
        %v1805 = vld [vmem:[%s1795 + $0x24] sm:$0xf]
        %v1806 = vld [vmem:[%s1795 + $0x28] sm:$0xf]
        %v1807 = vld [vmem:[%s1795 + $0x2c] sm:$0xf]
        %v1808 = vld [vmem:[%s1795 + $0x30] sm:$0xf]
        %v1809 = vld [vmem:[%s1795 + $0x34] sm:$0xf]
        %v1810 = vld [vmem:[%s1795 + $0x38] sm:$0xf]
        %v1811 = vld [vmem:[%s1795 + $0x3c] sm:$0xf]
        %v1820 = vunpack.c.l.b16 %v1787
        %v1821 = vunpack.c.l.b16 %v1788
        %v1822 = vunpack.c.l.b16 %v1789
        %v1823 = vunpack.c.l.b16 %v1790
        %v1824 = vunpack.c.l.b16 %v1791
        %v1825 = vunpack.c.l.b16 %v1792
        %v1826 = vunpack.c.l.b16 %v1793
        %v1827 = vunpack.c.l.b16 %v1794
        %v1828 = vpack.c.b16 %v1821, %v1820
        %v1829 = vpack.c.b16 %v1823, %v1822
        %v1830 = vpack.c.b16 %v1825, %v1824
        %v1831 = vpack.c.b16 %v1827, %v1826
        %v1852 = vunpack.c.l.b16 %v1796
        %v1853 = vunpack.c.l.b16 %v1797
        %v1854 = vunpack.c.l.b16 %v1798
        %v1855 = vunpack.c.l.b16 %v1799
        %v1856 = vunpack.c.l.b16 %v1800
        %v1857 = vunpack.c.l.b16 %v1801
        %v1858 = vunpack.c.l.b16 %v1802
        %v1859 = vunpack.c.l.b16 %v1803
        %v1860 = vunpack.c.l.b16 %v1804
        %v1861 = vunpack.c.l.b16 %v1805
        %v1862 = vunpack.c.l.b16 %v1806
        %v1863 = vunpack.c.l.b16 %v1807
        %v1864 = vunpack.c.l.b16 %v1808
        %v1865 = vunpack.c.l.b16 %v1809
        %v1866 = vunpack.c.l.b16 %v1810
        %v1867 = vunpack.c.l.b16 %v1811
        %v1868 = vpack.c.b16 %v1853, %v1852
        %v1869 = vpack.c.b16 %v1855, %v1854
        %v1870 = vpack.c.b16 %v1857, %v1856
        %v1871 = vpack.c.b16 %v1859, %v1858
        %v1872 = vpack.c.b16 %v1861, %v1860
        %v1873 = vpack.c.b16 %v1863, %v1862
        %v1874 = vpack.c.b16 %v1865, %v1864
        %v1875 = vpack.c.b16 %v1867, %v1866
        %1884 = vmatprep.subr.bf16.mxu0 0
        %1885 = vmatpush1.bf16.msra.mxu0 %v1868
        %1886 = vmatprep.subr.bf16.mxu0 0
        %1887 = vmatpush1.bf16.msra.mxu0 %v1869
        %1888 = vmatprep.subr.bf16.mxu0 0
        %1889 = vmatpush1.bf16.msra.mxu0 %v1870
        %1890 = vmatprep.subr.bf16.mxu0 0
        %1891 = vmatpush1.bf16.msra.mxu0 %v1871
        %1892 = vmatprep.subr.bf16.mxu0 0
        %1893 = vmatpush1.bf16.msra.mxu0 %v1872
        %1894 = vmatprep.subr.bf16.mxu0 0
        %1895 = vmatpush1.bf16.msra.mxu0 %v1873
        %1896 = vmatprep.subr.bf16.mxu0 0
        %1897 = vmatpush1.bf16.msra.mxu0 %v1874
        %1898 = vmatprep.subr.bf16.mxu0 0
        %1899 = vmatpush1.bf16.msra.mxu0 %v1875
        %1900 = vmatprep.subr.bf16.mxu0 0
        %1901 = vmatpush1.bf16.msra.mxu0 0
        %1902 = vmatprep.subr.bf16.mxu0 0
        %1903 = vmatpush1.bf16.msra.mxu0 0
        %1904 = vmatprep.subr.bf16.mxu0 0
        %1905 = vmatpush1.bf16.msra.mxu0 0
        %1906 = vmatprep.subr.bf16.mxu0 0
        %1907 = vmatpush1.bf16.msra.mxu0 0
        %1908 = vmatprep.subr.bf16.mxu0 0
        %1909 = vmatpush1.bf16.msra.mxu0 0
        %1910 = vmatprep.subr.bf16.mxu0 0
        %1911 = vmatpush1.bf16.msra.mxu0 0
        %1912 = vmatprep.subr.bf16.mxu0 0
        %1913 = vmatpush1.bf16.msra.mxu0 0
        %1914 = vmatprep.subr.bf16.mxu0 0
        %1915 = vmatpush1.bf16.msra.mxu0 0
        %1916 = vmatprep.mubr.bf16.mxu0 0
        %1917 = vmatmul.mubr.bf16.gmra.mrb[0].mxu0 %v1828
        %v1918 = vpop.f32.mrb[0].mxu0
        %v1919 = vadd.f32 0.0, %v1918
        %v1920 = vpop.f32.mrb[0].mxu0
        %v1921 = vpop.f32.mrb[0].mxu0
        %v1922 = vadd.f32 0.0, %v1921
        %v1923 = vpop.f32.mrb[0].mxu0
        %1924 = vmatprep.mubr.bf16.mxu0 0
        %1925 = vmatmul.mubr.bf16.gmra.mrb[0].mxu0 %v1829
        %v1926 = vpop.f32.mrb[0].mxu0
        %v1927 = vadd.f32 0.0, %v1926
        %v1928 = vpop.f32.mrb[0].mxu0
        %v1929 = vpop.f32.mrb[0].mxu0
        %v1930 = vadd.f32 0.0, %v1929
        %v1931 = vpop.f32.mrb[0].mxu0
        %1932 = vmatprep.mubr.bf16.mxu0 0
        %1933 = vmatmul.mubr.bf16.gmra.mrb[0].mxu0 %v1830
        %v1934 = vpop.f32.mrb[0].mxu0
        %v1935 = vadd.f32 0.0, %v1934
        %v1936 = vpop.f32.mrb[0].mxu0
        %v1937 = vpop.f32.mrb[0].mxu0
        %v1938 = vadd.f32 0.0, %v1937
        %v1939 = vpop.f32.mrb[0].mxu0
        %1940 = vmatprep.mubr.bf16.mxu0 0
        %1941 = vmatmul.mubr.bf16.gmra.mrb[0].mxu0 %v1831
        %v1942 = vpop.f32.mrb[0].mxu0
        %v1943 = vadd.f32 0.0, %v1942
        %v1944 = vpop.f32.mrb[0].mxu0
        %v1945 = vpop.f32.mrb[0].mxu0
        %v1946 = vadd.f32 0.0, %v1945
        %v1947 = vpop.f32.mrb[0].mxu0
        %1948 = vdwg.mxu0
        %v1949 = vadd.f32 %v1775, %v1919
        %v1950 = vadd.f32 %v1776, %v1922
        %v1951 = vadd.f32 %v1777, %v1927
        %v1952 = vadd.f32 %v1778, %v1930
        %v1953 = vadd.f32 %v1779, %v1935
        %v1954 = vadd.f32 %v1780, %v1938
        %v1955 = vadd.f32 %v1781, %v1943
        %v1956 = vadd.f32 %v1782, %v1946
        %s1957 = sadd.s32 %s1784, 18
        %s1958 = smul.addr %s1957, 4
        %s1959 = scalar_lea.vmem %s490, %s1958 [#allocation2]
        %v1960 = vld [vmem:[%s1959] sm:$0xf]
        %v1961 = vld [vmem:[%s1959 + $0x8] sm:$0xf]
        %v1962 = vld [vmem:[%s1959 + $0x10] sm:$0xf]
        %v1963 = vld [vmem:[%s1959 + $0x18] sm:$0xf]
        %v1964 = vld [vmem:[%s1959 + $0x20] sm:$0xf]
        %v1965 = vld [vmem:[%s1959 + $0x28] sm:$0xf]
        %v1966 = vld [vmem:[%s1959 + $0x30] sm:$0xf]
        %v1967 = vld [vmem:[%s1959 + $0x38] sm:$0xf]
        %s1968 = scalar_lea.vmem %s1, 448
        %v1969 = vld [vmem:[%s1968] sm:$0xf]
        %v1970 = vld [vmem:[%s1968 + $0x4] sm:$0xf]
        %v1971 = vld [vmem:[%s1968 + $0x8] sm:$0xf]
        %v1972 = vld [vmem:[%s1968 + $0xc] sm:$0xf]
        %v1973 = vld [vmem:[%s1968 + $0x10] sm:$0xf]
        %v1974 = vld [vmem:[%s1968 + $0x14] sm:$0xf]
        %v1975 = vld [vmem:[%s1968 + $0x18] sm:$0xf]
        %v1976 = vld [vmem:[%s1968 + $0x1c] sm:$0xf]
        %v1977 = vld [vmem:[%s1968 + $0x20] sm:$0xf]
        %v1978 = vld [vmem:[%s1968 + $0x24] sm:$0xf]
        %v1979 = vld [vmem:[%s1968 + $0x28] sm:$0xf]
        %v1980 = vld [vmem:[%s1968 + $0x2c] sm:$0xf]
        %v1981 = vld [vmem:[%s1968 + $0x30] sm:$0xf]
        %v1982 = vld [vmem:[%s1968 + $0x34] sm:$0xf]
        %v1983 = vld [vmem:[%s1968 + $0x38] sm:$0xf]
        %v1984 = vld [vmem:[%s1968 + $0x3c] sm:$0xf]
        %v1993 = vunpack.c.l.b16 %v1960
        %v1994 = vunpack.c.l.b16 %v1961
        %v1995 = vunpack.c.l.b16 %v1962
        %v1996 = vunpack.c.l.b16 %v1963
        %v1997 = vunpack.c.l.b16 %v1964
        %v1998 = vunpack.c.l.b16 %v1965
        %v1999 = vunpack.c.l.b16 %v1966
        %v2000 = vunpack.c.l.b16 %v1967
        %v2001 = vpack.c.b16 %v1994, %v1993
        %v2002 = vpack.c.b16 %v1996, %v1995
        %v2003 = vpack.c.b16 %v1998, %v1997
        %v2004 = vpack.c.b16 %v2000, %v1999
        %v2025 = vunpack.c.l.b16 %v1969
        %v2026 = vunpack.c.l.b16 %v1970
        %v2027 = vunpack.c.l.b16 %v1971
        %v2028 = vunpack.c.l.b16 %v1972
        %v2029 = vunpack.c.l.b16 %v1973
        %v2030 = vunpack.c.l.b16 %v1974
        %v2031 = vunpack.c.l.b16 %v1975
        %v2032 = vunpack.c.l.b16 %v1976
        %v2033 = vunpack.c.l.b16 %v1977
        %v2034 = vunpack.c.l.b16 %v1978
        %v2035 = vunpack.c.l.b16 %v1979
        %v2036 = vunpack.c.l.b16 %v1980
        %v2037 = vunpack.c.l.b16 %v1981
        %v2038 = vunpack.c.l.b16 %v1982
        %v2039 = vunpack.c.l.b16 %v1983
        %v2040 = vunpack.c.l.b16 %v1984
        %v2041 = vpack.c.b16 %v2026, %v2025
        %v2042 = vpack.c.b16 %v2028, %v2027
        %v2043 = vpack.c.b16 %v2030, %v2029
        %v2044 = vpack.c.b16 %v2032, %v2031
        %v2045 = vpack.c.b16 %v2034, %v2033
        %v2046 = vpack.c.b16 %v2036, %v2035
        %v2047 = vpack.c.b16 %v2038, %v2037
        %v2048 = vpack.c.b16 %v2040, %v2039
        %2057 = vmatprep.subr.bf16.mxu0 0
        %2058 = vmatpush1.bf16.msra.mxu0 %v2041
        %2059 = vmatprep.subr.bf16.mxu0 0
        %2060 = vmatpush1.bf16.msra.mxu0 %v2042
        %2061 = vmatprep.subr.bf16.mxu0 0
        %2062 = vmatpush1.bf16.msra.mxu0 %v2043
        %2063 = vmatprep.subr.bf16.mxu0 0
        %2064 = vmatpush1.bf16.msra.mxu0 %v2044
        %2065 = vmatprep.subr.bf16.mxu0 0
        %2066 = vmatpush1.bf16.msra.mxu0 %v2045
        %2067 = vmatprep.subr.bf16.mxu0 0
        %2068 = vmatpush1.bf16.msra.mxu0 %v2046
        %2069 = vmatprep.subr.bf16.mxu0 0
        %2070 = vmatpush1.bf16.msra.mxu0 %v2047
        %2071 = vmatprep.subr.bf16.mxu0 0
        %2072 = vmatpush1.bf16.msra.mxu0 %v2048
        %2073 = vmatprep.subr.bf16.mxu0 0
        %2074 = vmatpush1.bf16.msra.mxu0 0
        %2075 = vmatprep.subr.bf16.mxu0 0
        %2076 = vmatpush1.bf16.msra.mxu0 0
        %2077 = vmatprep.subr.bf16.mxu0 0
        %2078 = vmatpush1.bf16.msra.mxu0 0
        %2079 = vmatprep.subr.bf16.mxu0 0
        %2080 = vmatpush1.bf16.msra.mxu0 0
        %2081 = vmatprep.subr.bf16.mxu0 0
        %2082 = vmatpush1.bf16.msra.mxu0 0
        %2083 = vmatprep.subr.bf16.mxu0 0
        %2084 = vmatpush1.bf16.msra.mxu0 0
        %2085 = vmatprep.subr.bf16.mxu0 0
        %2086 = vmatpush1.bf16.msra.mxu0 0
        %2087 = vmatprep.subr.bf16.mxu0 0
        %2088 = vmatpush1.bf16.msra.mxu0 0
        %2089 = vmatprep.mubr.bf16.mxu0 0
        %2090 = vmatmul.mubr.bf16.gmra.mrb[0].mxu0 %v2001
        %v2091 = vpop.f32.mrb[0].mxu0
        %v2092 = vadd.f32 0.0, %v2091
        %v2093 = vpop.f32.mrb[0].mxu0
        %v2094 = vpop.f32.mrb[0].mxu0
        %v2095 = vadd.f32 0.0, %v2094
        %v2096 = vpop.f32.mrb[0].mxu0
        %2097 = vmatprep.mubr.bf16.mxu0 0
        %2098 = vmatmul.mubr.bf16.gmra.mrb[0].mxu0 %v2002
        %v2099 = vpop.f32.mrb[0].mxu0
        %v2100 = vadd.f32 0.0, %v2099
        %v2101 = vpop.f32.mrb[0].mxu0
        %v2102 = vpop.f32.mrb[0].mxu0
        %v2103 = vadd.f32 0.0, %v2102
        %v2104 = vpop.f32.mrb[0].mxu0
        %2105 = vmatprep.mubr.bf16.mxu0 0
        %2106 = vmatmul.mubr.bf16.gmra.mrb[0].mxu0 %v2003
        %v2107 = vpop.f32.mrb[0].mxu0
        %v2108 = vadd.f32 0.0, %v2107
        %v2109 = vpop.f32.mrb[0].mxu0
        %v2110 = vpop.f32.mrb[0].mxu0
        %v2111 = vadd.f32 0.0, %v2110
        %v2112 = vpop.f32.mrb[0].mxu0
        %2113 = vmatprep.mubr.bf16.mxu0 0
        %2114 = vmatmul.mubr.bf16.gmra.mrb[0].mxu0 %v2004
        %v2115 = vpop.f32.mrb[0].mxu0
        %v2116 = vadd.f32 0.0, %v2115
        %v2117 = vpop.f32.mrb[0].mxu0
        %v2118 = vpop.f32.mrb[0].mxu0
        %v2119 = vadd.f32 0.0, %v2118
        %v2120 = vpop.f32.mrb[0].mxu0
        %2121 = vdwg.mxu0
        %v2122 = vadd.f32 %v1949, %v2092
        %v2123 = vadd.f32 %v1950, %v2095
        %v2124 = vadd.f32 %v1951, %v2100
        %v2125 = vadd.f32 %v1952, %v2103
        %v2126 = vadd.f32 %v1953, %v2108
        %v2127 = vadd.f32 %v1954, %v2111
        %v2128 = vadd.f32 %v1955, %v2116
        %v2129 = vadd.f32 %v1956, %v2119
        %v2130 = vld [vmem:[%s1786] sm:$0xf]
        %v2131 = vld [vmem:[%s1786 + $0x4] sm:$0x1]
        %v2132 = vld [vmem:[%s1786 + $0x8] sm:$0xf]
        %v2133 = vld [vmem:[%s1786 + $0xc] sm:$0x1]
        %v2134 = vld [vmem:[%s1786 + $0x10] sm:$0xf]
        %v2135 = vld [vmem:[%s1786 + $0x14] sm:$0x1]
        %v2136 = vld [vmem:[%s1786 + $0x18] sm:$0xf]
        %v2137 = vld [vmem:[%s1786 + $0x1c] sm:$0x1]
        %v2138 = vld [vmem:[%s1786 + $0x20] sm:$0xf]
        %v2139 = vld [vmem:[%s1786 + $0x24] sm:$0x1]
        %v2140 = vld [vmem:[%s1786 + $0x28] sm:$0xf]
        %v2141 = vld [vmem:[%s1786 + $0x2c] sm:$0x1]
        %v2142 = vld [vmem:[%s1786 + $0x30] sm:$0xf]
        %v2143 = vld [vmem:[%s1786 + $0x34] sm:$0x1]
        %v2144 = vld [vmem:[%s1786 + $0x38] sm:$0xf]
        %v2145 = vld [vmem:[%s1786 + $0x3c] sm:$0x1]
        %v2147 = vshrl.u32 %v2130, 16
        %v2149 = vrot.slane %v2147, 4
        %v2150 = vshll.u32 %v2130, 16
        %v2152 = vrot.slane %v2150, 5
        %v2153 = vor.u32 %v2149, %v2152
        %v2154 = vrot.slane %v2153, 4
        %v2156 = vshll.u32 %v2131, 16
        %v2158 = vrot.slane %v2156, 5
        %v2159 = vsel %vm888, %v2154, %v2158
        %v2161 = vshrl.u32 %v2132, 16
        %v2163 = vrot.slane %v2161, 4
        %v2164 = vshll.u32 %v2132, 16
        %v2166 = vrot.slane %v2164, 5
        %v2167 = vor.u32 %v2163, %v2166
        %v2168 = vrot.slane %v2167, 4
        %v2170 = vshll.u32 %v2133, 16
        %v2172 = vrot.slane %v2170, 5
        %v2173 = vsel %vm888, %v2168, %v2172
        %v2175 = vshrl.u32 %v2134, 16
        %v2177 = vrot.slane %v2175, 4
        %v2178 = vshll.u32 %v2134, 16
        %v2180 = vrot.slane %v2178, 5
        %v2181 = vor.u32 %v2177, %v2180
        %v2182 = vrot.slane %v2181, 4
        %v2184 = vshll.u32 %v2135, 16
        %v2186 = vrot.slane %v2184, 5
        %v2187 = vsel %vm888, %v2182, %v2186
        %v2189 = vshrl.u32 %v2136, 16
        %v2191 = vrot.slane %v2189, 4
        %v2192 = vshll.u32 %v2136, 16
        %v2194 = vrot.slane %v2192, 5
        %v2195 = vor.u32 %v2191, %v2194
        %v2196 = vrot.slane %v2195, 4
        %v2198 = vshll.u32 %v2137, 16
        %v2200 = vrot.slane %v2198, 5
        %v2201 = vsel %vm888, %v2196, %v2200
        %v2203 = vshrl.u32 %v2138, 16
        %v2205 = vrot.slane %v2203, 4
        %v2206 = vshll.u32 %v2138, 16
        %v2208 = vrot.slane %v2206, 5
        %v2209 = vor.u32 %v2205, %v2208
        %v2210 = vrot.slane %v2209, 4
        %v2212 = vshll.u32 %v2139, 16
        %v2214 = vrot.slane %v2212, 5
        %v2215 = vsel %vm888, %v2210, %v2214
        %v2217 = vshrl.u32 %v2140, 16
        %v2219 = vrot.slane %v2217, 4
        %v2220 = vshll.u32 %v2140, 16
        %v2222 = vrot.slane %v2220, 5
        %v2223 = vor.u32 %v2219, %v2222
        %v2224 = vrot.slane %v2223, 4
        %v2226 = vshll.u32 %v2141, 16
        %v2228 = vrot.slane %v2226, 5
        %v2229 = vsel %vm888, %v2224, %v2228
        %v2231 = vshrl.u32 %v2142, 16
        %v2233 = vrot.slane %v2231, 4
        %v2234 = vshll.u32 %v2142, 16
        %v2236 = vrot.slane %v2234, 5
        %v2237 = vor.u32 %v2233, %v2236
        %v2238 = vrot.slane %v2237, 4
        %v2240 = vshll.u32 %v2143, 16
        %v2242 = vrot.slane %v2240, 5
        %v2243 = vsel %vm888, %v2238, %v2242
        %v2245 = vshrl.u32 %v2144, 16
        %v2247 = vrot.slane %v2245, 4
        %v2248 = vshll.u32 %v2144, 16
        %v2250 = vrot.slane %v2248, 5
        %v2251 = vor.u32 %v2247, %v2250
        %v2252 = vrot.slane %v2251, 4
        %v2254 = vshll.u32 %v2145, 16
        %v2256 = vrot.slane %v2254, 5
        %v2257 = vsel %vm888, %v2252, %v2256
        %s2258 = scalar_lea.vmem %s1, 512
        %v2259 = vld [vmem:[%s2258] sm:$0xf]
        %v2260 = vld [vmem:[%s2258 + $0x4] sm:$0xf]
        %v2261 = vld [vmem:[%s2258 + $0x8] sm:$0xf]
        %v2262 = vld [vmem:[%s2258 + $0xc] sm:$0xf]
        %v2263 = vld [vmem:[%s2258 + $0x10] sm:$0xf]
        %v2264 = vld [vmem:[%s2258 + $0x14] sm:$0xf]
        %v2265 = vld [vmem:[%s2258 + $0x18] sm:$0xf]
        %v2266 = vld [vmem:[%s2258 + $0x1c] sm:$0xf]
        %v2267 = vld [vmem:[%s2258 + $0x20] sm:$0xf]
        %v2268 = vld [vmem:[%s2258 + $0x24] sm:$0xf]
        %v2269 = vld [vmem:[%s2258 + $0x28] sm:$0xf]
        %v2270 = vld [vmem:[%s2258 + $0x2c] sm:$0xf]
        %v2271 = vld [vmem:[%s2258 + $0x30] sm:$0xf]
        %v2272 = vld [vmem:[%s2258 + $0x34] sm:$0xf]
        %v2273 = vld [vmem:[%s2258 + $0x38] sm:$0xf]
        %v2274 = vld [vmem:[%s2258 + $0x3c] sm:$0xf]
        %v2275 = vunpack.c.l.b16 %v2159
        %v2276 = vunpack.c.l.b16 %v2173
        %v2277 = vunpack.c.l.b16 %v2187
        %v2278 = vunpack.c.l.b16 %v2201
        %v2279 = vunpack.c.l.b16 %v2215
        %v2280 = vunpack.c.l.b16 %v2229
        %v2281 = vunpack.c.l.b16 %v2243
        %v2282 = vunpack.c.l.b16 %v2257
        %v2283 = vpack.c.b16 %v2276, %v2275
        %v2284 = vpack.c.b16 %v2278, %v2277
        %v2285 = vpack.c.b16 %v2280, %v2279
        %v2286 = vpack.c.b16 %v2282, %v2281
        %v2307 = vunpack.c.l.b16 %v2259
        %v2308 = vunpack.c.l.b16 %v2260
        %v2309 = vunpack.c.l.b16 %v2261
        %v2310 = vunpack.c.l.b16 %v2262
        %v2311 = vunpack.c.l.b16 %v2263
        %v2312 = vunpack.c.l.b16 %v2264
        %v2313 = vunpack.c.l.b16 %v2265
        %v2314 = vunpack.c.l.b16 %v2266
        %v2315 = vunpack.c.l.b16 %v2267
        %v2316 = vunpack.c.l.b16 %v2268
        %v2317 = vunpack.c.l.b16 %v2269
        %v2318 = vunpack.c.l.b16 %v2270
        %v2319 = vunpack.c.l.b16 %v2271
        %v2320 = vunpack.c.l.b16 %v2272
        %v2321 = vunpack.c.l.b16 %v2273
        %v2322 = vunpack.c.l.b16 %v2274
        %v2323 = vpack.c.b16 %v2308, %v2307
        %v2324 = vpack.c.b16 %v2310, %v2309
        %v2325 = vpack.c.b16 %v2312, %v2311
        %v2326 = vpack.c.b16 %v2314, %v2313
        %v2327 = vpack.c.b16 %v2316, %v2315
        %v2328 = vpack.c.b16 %v2318, %v2317
        %v2329 = vpack.c.b16 %v2320, %v2319
        %v2330 = vpack.c.b16 %v2322, %v2321
        %2339 = vmatprep.subr.bf16.mxu0 0
        %2340 = vmatpush1.bf16.msra.mxu0 %v2323
        %2341 = vmatprep.subr.bf16.mxu0 0
        %2342 = vmatpush1.bf16.msra.mxu0 %v2324
        %2343 = vmatprep.subr.bf16.mxu0 0
        %2344 = vmatpush1.bf16.msra.mxu0 %v2325
        %2345 = vmatprep.subr.bf16.mxu0 0
        %2346 = vmatpush1.bf16.msra.mxu0 %v2326
        %2347 = vmatprep.subr.bf16.mxu0 0
        %2348 = vmatpush1.bf16.msra.mxu0 %v2327
        %2349 = vmatprep.subr.bf16.mxu0 0
        %2350 = vmatpush1.bf16.msra.mxu0 %v2328
        %2351 = vmatprep.subr.bf16.mxu0 0
        %2352 = vmatpush1.bf16.msra.mxu0 %v2329
        %2353 = vmatprep.subr.bf16.mxu0 0
        %2354 = vmatpush1.bf16.msra.mxu0 %v2330
        %2355 = vmatprep.subr.bf16.mxu0 0
        %2356 = vmatpush1.bf16.msra.mxu0 0
        %2357 = vmatprep.subr.bf16.mxu0 0
        %2358 = vmatpush1.bf16.msra.mxu0 0
        %2359 = vmatprep.subr.bf16.mxu0 0
        %2360 = vmatpush1.bf16.msra.mxu0 0
        %2361 = vmatprep.subr.bf16.mxu0 0
        %2362 = vmatpush1.bf16.msra.mxu0 0
        %2363 = vmatprep.subr.bf16.mxu0 0
        %2364 = vmatpush1.bf16.msra.mxu0 0
        %2365 = vmatprep.subr.bf16.mxu0 0
        %2366 = vmatpush1.bf16.msra.mxu0 0
        %2367 = vmatprep.subr.bf16.mxu0 0
        %2368 = vmatpush1.bf16.msra.mxu0 0
        %2369 = vmatprep.subr.bf16.mxu0 0
        %2370 = vmatpush1.bf16.msra.mxu0 0
        %2371 = vmatprep.mubr.bf16.mxu0 0
        %2372 = vmatmul.mubr.bf16.gmra.mrb[0].mxu0 %v2283
        %v2373 = vpop.f32.mrb[0].mxu0
        %v2374 = vadd.f32 0.0, %v2373
        %v2375 = vpop.f32.mrb[0].mxu0
        %v2376 = vpop.f32.mrb[0].mxu0
        %v2377 = vadd.f32 0.0, %v2376
        %v2378 = vpop.f32.mrb[0].mxu0
        %2379 = vmatprep.mubr.bf16.mxu0 0
        %2380 = vmatmul.mubr.bf16.gmra.mrb[0].mxu0 %v2284
        %v2381 = vpop.f32.mrb[0].mxu0
        %v2382 = vadd.f32 0.0, %v2381
        %v2383 = vpop.f32.mrb[0].mxu0
        %v2384 = vpop.f32.mrb[0].mxu0
        %v2385 = vadd.f32 0.0, %v2384
        %v2386 = vpop.f32.mrb[0].mxu0
        %2387 = vmatprep.mubr.bf16.mxu0 0
        %2388 = vmatmul.mubr.bf16.gmra.mrb[0].mxu0 %v2285
        %v2389 = vpop.f32.mrb[0].mxu0
        %v2390 = vadd.f32 0.0, %v2389
        %v2391 = vpop.f32.mrb[0].mxu0
        %v2392 = vpop.f32.mrb[0].mxu0
        %v2393 = vadd.f32 0.0, %v2392
        %v2394 = vpop.f32.mrb[0].mxu0
        %2395 = vmatprep.mubr.bf16.mxu0 0
        %2396 = vmatmul.mubr.bf16.gmra.mrb[0].mxu0 %v2286
        %v2397 = vpop.f32.mrb[0].mxu0
        %v2398 = vadd.f32 0.0, %v2397
        %v2399 = vpop.f32.mrb[0].mxu0
        %v2400 = vpop.f32.mrb[0].mxu0
        %v2401 = vadd.f32 0.0, %v2400
        %v2402 = vpop.f32.mrb[0].mxu0
        %2403 = vdwg.mxu0
        %v2404 = vadd.f32 %v2122, %v2374
        %v2405 = vadd.f32 %v2123, %v2377
        %v2406 = vadd.f32 %v2124, %v2382
        %v2407 = vadd.f32 %v2125, %v2385
        %v2408 = vadd.f32 %v2126, %v2390
        %v2409 = vadd.f32 %v2127, %v2393
        %v2410 = vadd.f32 %v2128, %v2398
        %v2411 = vadd.f32 %v2129, %v2401
        %v2412 = vpack.c.bf16 %v2404, %v2404
        %v2413 = vpack.c.bf16 %v2405, %v2405
        %v2414 = vpack.c.bf16 %v2406, %v2406
        %v2415 = vpack.c.bf16 %v2407, %v2407
        %v2416 = vpack.c.bf16 %v2408, %v2408
        %v2417 = vpack.c.bf16 %v2409, %v2409
        %v2418 = vpack.c.bf16 %v2410, %v2410
        %v2419 = vpack.c.bf16 %v2411, %v2411
        %2420 = vst [vmem:[%s530] sm:$0xf] %v2412
        %2421 = vst [vmem:[%s530 + $0x4] sm:$0xf] %v2413
        %2422 = vst [vmem:[%s530 + $0x8] sm:$0xf] %v2414
        %2423 = vst [vmem:[%s530 + $0xc] sm:$0xf] %v2415
        %2424 = vst [vmem:[%s530 + $0x10] sm:$0xf] %v2416
        %2425 = vst [vmem:[%s530 + $0x14] sm:$0xf] %v2417
        %2426 = vst [vmem:[%s530 + $0x18] sm:$0xf] %v2418
        %2427 = vst [vmem:[%s530 + $0x1c] sm:$0xf] %v2419
        %v2428 = vadd.f32 %v2404, %v2405
        %v2429 = vadd.f32 %v2428, %v2406
        %v2430 = vadd.f32 %v2429, %v2407
        %v2431 = vadd.f32 %v2430, %v2408
        %v2432 = vadd.f32 %v2431, %v2409
        %v2433 = vadd.f32 %v2432, %v2410
        %v2434 = vadd.f32 %v2433, %v2411
        %v2435 = vrot.slane %v2434, 4
        %v2436 = vadd.f32 %v2434, %v2435
        %v2437 = vrot.slane %v2436, 2
        %v2438 = vadd.f32 %v2436, %v2437
        %v2439 = vrot.slane %v2438, 1
        %v2440 = vadd.f32 %v2438, %v2439
        %v2441 = vmul.f32 %v2440, 0.015625
        %v2442 = vsub.f32 %v2404, %v2441
        %v2443 = vsub.f32 %v2405, %v2441
        %v2444 = vsub.f32 %v2406, %v2441
        %v2445 = vsub.f32 %v2407, %v2441
        %v2446 = vsub.f32 %v2408, %v2441
        %v2447 = vsub.f32 %v2409, %v2441
        %v2448 = vsub.f32 %v2410, %v2441
        %v2449 = vsub.f32 %v2411, %v2441
        %v2450 = vmul.f32 %v2442, %v2442
        %v2451 = vmul.f32 %v2443, %v2443
        %v2452 = vmul.f32 %v2444, %v2444
        %v2453 = vmul.f32 %v2445, %v2445
        %v2454 = vmul.f32 %v2446, %v2446
        %v2455 = vmul.f32 %v2447, %v2447
        %v2456 = vmul.f32 %v2448, %v2448
        %v2457 = vmul.f32 %v2449, %v2449
        %v2458 = vadd.f32 %v2450, %v2451
        %v2459 = vadd.f32 %v2458, %v2452
        %v2460 = vadd.f32 %v2459, %v2453
        %v2461 = vadd.f32 %v2460, %v2454
        %v2462 = vadd.f32 %v2461, %v2455
        %v2463 = vadd.f32 %v2462, %v2456
        %v2464 = vadd.f32 %v2463, %v2457
        %v2465 = vrot.slane %v2464, 4
        %v2466 = vadd.f32 %v2464, %v2465
        %v2467 = vrot.slane %v2466, 2
        %v2468 = vadd.f32 %v2466, %v2467
        %v2469 = vrot.slane %v2468, 1
        %v2470 = vadd.f32 %v2468, %v2469
        %vm2471 = vcmask 1040384
        %v2472 = vsel %vm2471, %v2440, %v2470
        %2473 = vst [vmem:[%s538] sm:$0x3] %v2472
        %s2474 = smul.u32 8, %s20
        %p2475 = scmp.lt.s32.totalorder %s19, 1
        %s2476 = scalar_select %p2475, %s19, 1
        %p2477 = scmp.lt.s32.totalorder %s2474, 7
        %s2478 = scalar_select %p2477, %s2474, 7
        %s2479 = smul.addr %s2476, 8
        %s2480 = sadd.s32 %s2478, %s2479
        %s2481 = smul.addr %s2480, 4
        %s2482 = scalar_lea.vmem %s2, %s2481
        %p2483 = scmp.lt.s32.totalorder %s19, 1
        %s2484 = scalar_select %p2483, %s19, 1
        %p2485 = scmp.lt.s32.totalorder %s20, 0
        %s2486 = scalar_select %p2485, %s20, 0
        %s2487 = sadd.s32 %s2486, %s2484
        %s2488 = smul.addr %s2487, 2
        %s2489 = scalar_lea.vmem %s3, %s2488
        // Predicated region
        $region70: #{res_block_forward.6} parent=64 // pred_check
          %p2490 = pneg %p94
        $region71: #{res_block_forward.6} parent=64 // pred_check_branch
          %2492 = sbr.rel (%p2490) target = $region73
        $region72: #{res_block_forward.6} parent=64 // pred_region
          %s2493 = smul.u32 8, %s20
        $region73: #{res_block_forward.6} parent=64 // pred_fallthru
          _
        // Predicated region
        $region74: #{res_block_forward.6} parent=64 // pred_check
          %p2494 = pneg %p122
        $region75: #{res_block_forward.6} parent=64 // pred_check_branch
          %2496 = sbr.rel (%p2494) target = $region77
        $region76: #{res_block_forward.6} parent=64 // pred_region
          _
        $region77: #{res_block_forward.6} parent=64 // pred_fallthru
          _
      $region65: #{res_block_forward.6} parent=5 // pred_fallthru
        _
      %p2497 = scmp.le.s32.totalorder 2, %s10
      // Predicated region
      $region78: #{res_block_forward.6} parent=5 // pred_check
        %p2498 = pneg %p2497
      $region79: #{res_block_forward.6} parent=5 // pred_check_branch
        %2500 = sbr.rel (%p2498) target = $region81
      $region80: #{res_block_forward.6} parent=5 // pred_region
        %s2501 = ssub.s32 %s10, 2
        // Predicated region
        $region82: #{res_block_forward.6} parent=80 // pred_check
          %p2502 = pneg %p100
        $region83: #{res_block_forward.6} parent=80 // pred_check_branch
          %2504 = sbr.rel (%p2502) target = $region85
        $region84: #{res_block_forward.6} parent=80 // pred_region
          %s2505 = smul.u32 8, %s22
          %p2506 = scmp.lt.s32.totalorder %s21, 1
          %s2507 = scalar_select %p2506, %s21, 1
          %p2508 = scmp.lt.s32.totalorder %s2505, 7
          %s2509 = scalar_select %p2508, %s2505, 7
          %s2510 = smul.addr %s2507, 8
          %s2511 = sadd.s32 %s2509, %s2510
          %s2512 = smul.addr %s2511, 4
          %s2513 = scalar_lea.vmem %s2, %s2512
        $region85: #{res_block_forward.6} parent=80 // pred_fallthru
          _
        // Predicated region
        $region86: #{res_block_forward.6} parent=80 // pred_check
          %p2514 = pneg %p128
        $region87: #{res_block_forward.6} parent=80 // pred_check_branch
          %2516 = sbr.rel (%p2514) target = $region89
        $region88: #{res_block_forward.6} parent=80 // pred_region
          %p2517 = scmp.lt.s32.totalorder %s21, 1
          %s2518 = scalar_select %p2517, %s21, 1
          %p2519 = scmp.lt.s32.totalorder %s22, 0
          %s2520 = scalar_select %p2519, %s22, 0
          %s2521 = sadd.s32 %s2520, %s2518
          %s2522 = smul.addr %s2521, 2
          %s2523 = scalar_lea.vmem %s3, %s2522
        $region89: #{res_block_forward.6} parent=80 // pred_fallthru
          _
      $region81: #{res_block_forward.6} parent=5 // pred_fallthru
        _
    $region6: #{res_block_forward.6} parent=1 // loop_footer
      %s14 = sadd.s32 1, %s10
    $region7: #{res_block_forward.6} parent=1 // loop_footer_branch
      %9 = sbr.rel target = $region3
    $region8: #{res_block_forward.6} parent=1 // loop_exit
      _

// kernel: res_block_forward.10
$region0: #{res_block_forward.10}
  #allocation0 [shape = 'u32[]', space=smem, size = 0x4, offset = 0x4, fixed_abs, tag = 'smem constant byte address 0x4 - core index']
  #allocation1 [shape = 'u32[144,128]{1,0:T(1,128)}', space=vmem, size = 0x12000, scoped, tag = 'internal scratch']
  %s0 = inlined_call_operand.vmem [shape: bf16[1,2,10,10,128], index: 0, kind: input, shape index: {}]
  %s1 = inlined_call_operand.vmem [shape: bf16[9,128,128], index: 1, kind: input, shape index: {}]
  %s2 = inlined_call_operand.vmem [shape: bf16[2,8,8,128], index: 2, kind: output, shape index: {0}]
  %s3 = inlined_call_operand.vmem [shape: f32[2,1,2,128], index: 3, kind: output, shape index: {1}]
  %4 = xla_tuple %s2, %s3
  %s5 = sld [smem:[#allocation0]]
  $region49: #{res_block_forward.10} parent=0
    _
  %s7 = ssub.s32 1, %s5
  %s8 = scalar_select 0, %s7, %s5
  loop: start=0, step=1, limit=4
  $region2: #{res_block_forward.10} parent=0 // loop_pre_header
    _
  $region3: #{res_block_forward.10} parent=0 // loop_header
    %s10 = sphi 0, %s14
    %p11 = scmp.ge.s32.totalorder %s10, 4
    %s17 = sphi 0, %s29
    %s18 = sphi 0, %s25
    %s19 = sphi 0, %s17
    %s20 = sphi 0, %s18
    %s21 = sphi 0, %s19
    %s22 = sphi 0, %s20
    %s32 = sphi 0, %s34
    %s35 = sphi 0, %s32
    %s36 = sphi 0, %s35
    %s52 = sphi 0, %s36
    %s56 = sphi 0, %s56
    %s58 = sphi 0, %s56
    %s59 = sphi 0, %s58
    %s73 = sphi 0, %s59
    %s81 = sphi 0, %s83
    %s84 = sphi 0, %s81
    %s85 = sphi 0, %s84
    %s101 = sphi 0, %s85
    %s109 = sphi 0, %s111
    %s112 = sphi 0, %s109
    %s113 = sphi 0, %s112
    %s129 = sphi 0, %s113
  $region4: #{res_block_forward.10} parent=0 // loop_header_branch
    %13 = sbr.rel (%p11) target = $region8
  $region5: #{res_block_forward.10} parent=0 // loop_body
    %s15 = ssub.s32 %s10, 1
    %s16 = ssub.s32 %s10, 2
    %s23 = sadd.s32 1, %s18
    %p24 = scmp.ge.s32.totalorder %s23, 1
    %s25 = scalar_select %p24, 0, %s23
    %s26 = sadd.s32 1, %s17
    %s27 = scalar_select %p24, %s26, %s17
    %p28 = scmp.ge.s32.totalorder %s27, 2
    %s29 = scalar_select %p28, 0, %s27
    %s30 = ssub.s32 %s17, %s29
    %p31 = scmp.eq.s32.totalorder %s30, 0
    %s33 = sadd.s32 %s32, 1
    %s34 = scalar_select %p31, %s32, %s33
    %p37 = pneg %p31
    %p38 = scmp.eq.s32.totalorder %s10, 1
    %p39 = por %p37, %p38
    %p40 = scmp.ne.s32.totalorder %s32, %s35
    %p41 = scmp.eq.s32.totalorder %s10, 0
    %p42 = por %p40, %p41
    %p43 = scmp.ne.s32.totalorder %s32, %s35
    %p44 = scmp.eq.s32.totalorder %s15, 1
    %p45 = por %p43, %p44
    %p46 = scmp.ne.s32.totalorder %s35, %s36
    %p47 = scmp.eq.s32.totalorder %s15, 0
    %p48 = por %p46, %p47
    %p49 = scmp.ne.s32.totalorder %s35, %s36
    %p50 = scmp.eq.s32.totalorder %s16, 1
    %p51 = por %p49, %p50
    %p53 = scmp.ne.s32.totalorder %s36, %s52
    %p54 = scmp.eq.s32.totalorder %s16, 0
    %p55 = por %p53, %p54
    %s57 = sadd.s32 %s56, 1
    %p60 = scmp.eq.s32.totalorder %s10, 1
    %p61 = scmp.ne.s32.totalorder %s56, %s58
    %p62 = scmp.eq.s32.totalorder %s10, 0
    %p63 = por %p61, %p62
    %p64 = scmp.ne.s32.totalorder %s56, %s58
    %p65 = scmp.eq.s32.totalorder %s15, 1
    %p66 = por %p64, %p65
    %p67 = scmp.ne.s32.totalorder %s58, %s59
    %p68 = scmp.eq.s32.totalorder %s15, 0
    %p69 = por %p67, %p68
    %p70 = scmp.ne.s32.totalorder %s58, %s59
    %p71 = scmp.eq.s32.totalorder %s16, 1
    %p72 = por %p70, %p71
    %p74 = scmp.ne.s32.totalorder %s59, %s73
    %p75 = scmp.eq.s32.totalorder %s16, 0
    %p76 = por %p74, %p75
    %s77 = ssub.s32 %s17, %s29
    %s78 = ssub.s32 %s18, %s25
    %s79 = sor.u32 %s77, %s78
    %p80 = scmp.eq.s32.totalorder %s79, 0
    %s82 = sadd.s32 %s81, 1
    %s83 = scalar_select %p80, %s81, %s82
    %p86 = pneg %p80
    %p87 = scmp.eq.s32.totalorder %s10, 1
    %p88 = por %p86, %p87
    %p89 = scmp.ne.s32.totalorder %s81, %s84
    %p90 = scmp.eq.s32.totalorder %s10, 0
    %p91 = por %p89, %p90
    %p92 = scmp.ne.s32.totalorder %s81, %s84
    %p93 = scmp.eq.s32.totalorder %s15, 1
    %p94 = por %p92, %p93
    %p95 = scmp.ne.s32.totalorder %s84, %s85
    %p96 = scmp.eq.s32.totalorder %s15, 0
    %p97 = por %p95, %p96
    %p98 = scmp.ne.s32.totalorder %s84, %s85
    %p99 = scmp.eq.s32.totalorder %s16, 1
    %p100 = por %p98, %p99
    %p102 = scmp.ne.s32.totalorder %s85, %s101
    %p103 = scmp.eq.s32.totalorder %s16, 0
    %p104 = por %p102, %p103
    %s105 = ssub.s32 %s17, %s29
    %s106 = ssub.s32 %s18, %s25
    %s107 = sor.u32 %s105, %s106
    %p108 = scmp.eq.s32.totalorder %s107, 0
    %s110 = sadd.s32 %s109, 1
    %s111 = scalar_select %p108, %s109, %s110
    %p114 = pneg %p108
    %p115 = scmp.eq.s32.totalorder %s10, 1
    %p116 = por %p114, %p115
    %p117 = scmp.ne.s32.totalorder %s109, %s112
    %p118 = scmp.eq.s32.totalorder %s10, 0
    %p119 = por %p117, %p118
    %p120 = scmp.ne.s32.totalorder %s109, %s112
    %p121 = scmp.eq.s32.totalorder %s15, 1
    %p122 = por %p120, %p121
    %p123 = scmp.ne.s32.totalorder %s112, %s113
    %p124 = scmp.eq.s32.totalorder %s15, 0
    %p125 = por %p123, %p124
    %p126 = scmp.ne.s32.totalorder %s112, %s113
    %p127 = scmp.eq.s32.totalorder %s16, 1
    %p128 = por %p126, %p127
    %p130 = scmp.ne.s32.totalorder %s113, %s129
    %p131 = scmp.eq.s32.totalorder %s16, 0
    %p132 = por %p130, %p131
    %p133 = scmp.le.s32.totalorder 1, %s10
    %p134 = scmp.lt.s32.totalorder %s10, 3
    %p135 = pnand %p133, %p134
    %p136 = pneg %p135
    // Predicated region
    $region9: #{res_block_forward.10} parent=5 // pred_check
      _
    $region10: #{res_block_forward.10} parent=5 // pred_check_branch
      %138 = sbr.rel (%p135) target = $region12
    $region11: #{res_block_forward.10} parent=5 // pred_region
      %s139 = ssub.s32 %s10, 1
      // Predicated region
      $region13: #{res_block_forward.10} parent=11 // pred_check
        %p140 = pneg %p69
      $region14: #{res_block_forward.10} parent=11 // pred_check_branch
        %142 = sbr.rel (%p140) target = $region16
      $region15: #{res_block_forward.10} parent=11 // pred_region
        _
      $region16: #{res_block_forward.10} parent=11 // pred_fallthru
        _
    $region12: #{res_block_forward.10} parent=5 // pred_fallthru
      _
    %p143 = scmp.lt.s32.totalorder %s10, 2
    // Predicated region
    $region17: #{res_block_forward.10} parent=5 // pred_check
      %p144 = pneg %p143
    $region18: #{res_block_forward.10} parent=5 // pred_check_branch
      %146 = sbr.rel (%p144) target = $region20
    $region19: #{res_block_forward.10} parent=5 // pred_region
      // Predicated region
      $region21: #{res_block_forward.10} parent=19 // pred_check
        %p147 = pneg %p42
      $region22: #{res_block_forward.10} parent=19 // pred_check_branch
        %149 = sbr.rel (%p147) target = $region24
      $region23: #{res_block_forward.10} parent=19 // pred_region
        %p150 = scmp.lt.s32.totalorder %s17, 1
        %s151 = scalar_select %p150, %s17, 1
        %s152 = smul.addr %s151, 20
        %s153 = smul.addr %s152, 4
        %s154 = scalar_lea.vmem %s0, %s153
      $region24: #{res_block_forward.10} parent=19 // pred_fallthru
        _
    $region20: #{res_block_forward.10} parent=5 // pred_fallthru
      _
    %p155 = scmp.le.s32.totalorder 1, %s10
    %p156 = scmp.lt.s32.totalorder %s10, 3
    %p157 = pnand %p155, %p156
    %p158 = pneg %p157
    // Predicated region
    $region25: #{res_block_forward.10} parent=5 // pred_check
      _
    $region26: #{res_block_forward.10} parent=5 // pred_check_branch
      %160 = sbr.rel (%p157) target = $region28
    $region27: #{res_block_forward.10} parent=5 // pred_region
      %s161 = ssub.s32 %s10, 1
      %p162 = scmp.lt.s32.totalorder %s19, 1
      %s163 = scalar_select %p162, %s19, 1
      %s164 = smul.addr %s163, 20
      %s165 = smul.addr %s164, 4
      %s166 = scalar_lea.vmem %s0, %s165
      %p167 = pneg %p48
      %p168 = pneg %p45
      %p169 = pneg %p69
      %p170 = pneg %p66
      %p171 = pneg %p97
      %p172 = pneg %p94
      %s173 = smul.u32 8, %s20
      %p174 = scmp.lt.s32.totalorder %s19, 1
      %s175 = scalar_select %p174, %s19, 1
      %p176 = scmp.lt.s32.totalorder %s173, 7
      %s177 = scalar_select %p176, %s173, 7
      %s178 = smul.addr %s175, 8
      %s179 = sadd.s32 %s177, %s178
      %s180 = smul.addr %s179, 4
      %s181 = scalar_lea.vmem %s2, %s180
      %p182 = pneg %p125
      %p183 = pneg %p122
      %p184 = scmp.lt.s32.totalorder %s19, 1
      %s185 = scalar_select %p184, %s19, 1
      %p186 = scmp.lt.s32.totalorder %s20, 0
      %s187 = scalar_select %p186, %s20, 0
      %s188 = sadd.s32 %s187, %s185
      %s189 = smul.addr %s188, 2
      %s190 = scalar_lea.vmem %s3, %s189
      %p191 = scmp.lt.s32.totalorder %s19, 1
      %s192 = scalar_select %p191, %s19, 1
      %s193 = smul.addr %s192, 20
      %s194 = smul.addr %s193, 4
      %s195 = scalar_lea.vmem %s0, %s194
      %s196 = smul.u32 8, %s20
      %p197 = scmp.lt.s32.totalorder %s19, 1
      %s198 = scalar_select %p197, %s19, 1
      %p199 = scmp.lt.s32.totalorder %s196, 7
      %s200 = scalar_select %p199, %s196, 7
      %s201 = smul.addr %s198, 8
      %s202 = sadd.s32 %s200, %s201
      %s203 = smul.addr %s202, 4
      %s204 = scalar_lea.vmem %s2, %s203
      %s205 = smul.u32 8, %s20
      %p206 = scmp.lt.s32.totalorder %s19, 1
      %s207 = scalar_select %p206, %s19, 1
      %p208 = scmp.lt.s32.totalorder %s20, 0
      %s209 = scalar_select %p208, %s20, 0
      %s210 = sadd.s32 %s209, %s207
      %s211 = smul.addr %s210, 2
      %s212 = scalar_lea.vmem %s3, %s211
      %s214 = smul.u32 %s20, 8
      %s215 = smul.u32 %s214, 2
      %s216 = smul.addr %s215, 4
      %s217 = scalar_lea.vmem %s195, %s216
      %v218 = vld [vmem:[%s217] sm:$0xf]
      %v219 = vld [vmem:[%s217 + $0x8] sm:$0xf]
      %v220 = vld [vmem:[%s217 + $0x10] sm:$0xf]
      %v221 = vld [vmem:[%s217 + $0x18] sm:$0xf]
      %v222 = vld [vmem:[%s217 + $0x20] sm:$0xf]
      %v223 = vld [vmem:[%s217 + $0x28] sm:$0xf]
      %v224 = vld [vmem:[%s217 + $0x30] sm:$0xf]
      %v225 = vld [vmem:[%s217 + $0x38] sm:$0xf]
      %v226 = vld [vmem:[%s1] sm:$0xf]
      %v227 = vld [vmem:[%s1 + $0x4] sm:$0xf]
      %v228 = vld [vmem:[%s1 + $0x8] sm:$0xf]
      %v229 = vld [vmem:[%s1 + $0xc] sm:$0xf]
      %v230 = vld [vmem:[%s1 + $0x10] sm:$0xf]
      %v231 = vld [vmem:[%s1 + $0x14] sm:$0xf]
      %v232 = vld [vmem:[%s1 + $0x18] sm:$0xf]
      %v233 = vld [vmem:[%s1 + $0x1c] sm:$0xf]
      %v234 = vld [vmem:[%s1 + $0x20] sm:$0xf]
      %v235 = vld [vmem:[%s1 + $0x24] sm:$0xf]
      %v236 = vld [vmem:[%s1 + $0x28] sm:$0xf]
      %v237 = vld [vmem:[%s1 + $0x2c] sm:$0xf]
      %v238 = vld [vmem:[%s1 + $0x30] sm:$0xf]
      %v239 = vld [vmem:[%s1 + $0x34] sm:$0xf]
      %v240 = vld [vmem:[%s1 + $0x38] sm:$0xf]
      %v241 = vld [vmem:[%s1 + $0x3c] sm:$0xf]
      %v242 = vld [vmem:[%s217 + $0x4] sm:$0x1]
      %v243 = vld [vmem:[%s217 + $0xc] sm:$0x1]
      %v244 = vld [vmem:[%s217 + $0x14] sm:$0x1]
      %v245 = vld [vmem:[%s217 + $0x1c] sm:$0x1]
      %v246 = vld [vmem:[%s217 + $0x24] sm:$0x1]
      %v247 = vld [vmem:[%s217 + $0x2c] sm:$0x1]
      %v248 = vld [vmem:[%s217 + $0x34] sm:$0x1]
      %v249 = vld [vmem:[%s217 + $0x3c] sm:$0x1]
      %vm250 = vsmask.f32 3328
      %vm251 = vsmask.f32 7440
      %vm252 = vmor %vm250, %vm251
      %v254 = vshrl.u32 %v218, 16
      %v256 = vrot.slane %v254, 4
      %v257 = vshll.u32 %v218, 16
      %v259 = vrot.slane %v257, 5
      %v260 = vor.u32 %v256, %v259
      %v261 = vrot.slane %v260, 4
      %v263 = vshll.u32 %v242, 16
      %v265 = vrot.slane %v263, 5
      %v266 = vsel %vm252, %v261, %v265
      %v268 = vshrl.u32 %v219, 16
      %v270 = vrot.slane %v268, 4
      %v271 = vshll.u32 %v219, 16
      %v273 = vrot.slane %v271, 5
      %v274 = vor.u32 %v270, %v273
      %v275 = vrot.slane %v274, 4
      %v277 = vshll.u32 %v243, 16
      %v279 = vrot.slane %v277, 5
      %v280 = vsel %vm252, %v275, %v279
      %v282 = vshrl.u32 %v220, 16
      %v284 = vrot.slane %v282, 4
      %v285 = vshll.u32 %v220, 16
      %v287 = vrot.slane %v285, 5
      %v288 = vor.u32 %v284, %v287
      %v289 = vrot.slane %v288, 4
      %v291 = vshll.u32 %v244, 16
      %v293 = vrot.slane %v291, 5
      %v294 = vsel %vm252, %v289, %v293
      %v296 = vshrl.u32 %v221, 16
      %v298 = vrot.slane %v296, 4
      %v299 = vshll.u32 %v221, 16
      %v301 = vrot.slane %v299, 5
      %v302 = vor.u32 %v298, %v301
      %v303 = vrot.slane %v302, 4
      %v305 = vshll.u32 %v245, 16
      %v307 = vrot.slane %v305, 5
      %v308 = vsel %vm252, %v303, %v307
      %v310 = vshrl.u32 %v222, 16
      %v312 = vrot.slane %v310, 4
      %v313 = vshll.u32 %v222, 16
      %v315 = vrot.slane %v313, 5
      %v316 = vor.u32 %v312, %v315
      %v317 = vrot.slane %v316, 4
      %v319 = vshll.u32 %v246, 16
      %v321 = vrot.slane %v319, 5
      %v322 = vsel %vm252, %v317, %v321
      %v324 = vshrl.u32 %v223, 16
      %v326 = vrot.slane %v324, 4
      %v327 = vshll.u32 %v223, 16
      %v329 = vrot.slane %v327, 5
      %v330 = vor.u32 %v326, %v329
      %v331 = vrot.slane %v330, 4
      %v333 = vshll.u32 %v247, 16
      %v335 = vrot.slane %v333, 5
      %v336 = vsel %vm252, %v331, %v335
      %v338 = vshrl.u32 %v224, 16
      %v340 = vrot.slane %v338, 4
      %v341 = vshll.u32 %v224, 16
      %v343 = vrot.slane %v341, 5
      %v344 = vor.u32 %v340, %v343
      %v345 = vrot.slane %v344, 4
      %v347 = vshll.u32 %v248, 16
      %v349 = vrot.slane %v347, 5
      %v350 = vsel %vm252, %v345, %v349
      %v352 = vshrl.u32 %v225, 16
      %v354 = vrot.slane %v352, 4
      %v355 = vshll.u32 %v225, 16
      %v357 = vrot.slane %v355, 5
      %v358 = vor.u32 %v354, %v357
      %v359 = vrot.slane %v358, 4
      %v361 = vshll.u32 %v249, 16
      %v363 = vrot.slane %v361, 5
      %v364 = vsel %vm252, %v359, %v363
      %s365 = scalar_lea.vmem %s1, 64
      %v366 = vld [vmem:[%s365] sm:$0xf]
      %v367 = vld [vmem:[%s365 + $0x4] sm:$0xf]
      %v368 = vld [vmem:[%s365 + $0x8] sm:$0xf]
      %v369 = vld [vmem:[%s365 + $0xc] sm:$0xf]
      %v370 = vld [vmem:[%s365 + $0x10] sm:$0xf]
      %v371 = vld [vmem:[%s365 + $0x14] sm:$0xf]
      %v372 = vld [vmem:[%s365 + $0x18] sm:$0xf]
      %v373 = vld [vmem:[%s365 + $0x1c] sm:$0xf]
      %v374 = vld [vmem:[%s365 + $0x20] sm:$0xf]
      %v375 = vld [vmem:[%s365 + $0x24] sm:$0xf]
      %v376 = vld [vmem:[%s365 + $0x28] sm:$0xf]
      %v377 = vld [vmem:[%s365 + $0x2c] sm:$0xf]
      %v378 = vld [vmem:[%s365 + $0x30] sm:$0xf]
      %v379 = vld [vmem:[%s365 + $0x34] sm:$0xf]
      %v380 = vld [vmem:[%s365 + $0x38] sm:$0xf]
      %v381 = vld [vmem:[%s365 + $0x3c] sm:$0xf]
      %v382 = vunpack.c.l.b16 %v266
      %v383 = vunpack.c.l.b16 %v280
      %v384 = vunpack.c.l.b16 %v294
      %v385 = vunpack.c.l.b16 %v308
      %v386 = vunpack.c.l.b16 %v322
      %v387 = vunpack.c.l.b16 %v336
      %v388 = vunpack.c.l.b16 %v350
      %v389 = vunpack.c.l.b16 %v364
      %v390 = vpack.c.b16 %v383, %v382
      %v391 = vpack.c.b16 %v385, %v384
      %v392 = vpack.c.b16 %v387, %v386
      %v393 = vpack.c.b16 %v389, %v388
      %v414 = vunpack.c.l.b16 %v366
      %v415 = vunpack.c.l.b16 %v367
      %v416 = vunpack.c.l.b16 %v368
      %v417 = vunpack.c.l.b16 %v369
      %v418 = vunpack.c.l.b16 %v370
      %v419 = vunpack.c.l.b16 %v371
      %v420 = vunpack.c.l.b16 %v372
      %v421 = vunpack.c.l.b16 %v373
      %v422 = vunpack.c.l.b16 %v374
      %v423 = vunpack.c.l.b16 %v375
      %v424 = vunpack.c.l.b16 %v376
      %v425 = vunpack.c.l.b16 %v377
      %v426 = vunpack.c.l.b16 %v378
      %v427 = vunpack.c.l.b16 %v379
      %v428 = vunpack.c.l.b16 %v380
      %v429 = vunpack.c.l.b16 %v381
      %v430 = vpack.c.b16 %v415, %v414
      %v431 = vpack.c.b16 %v417, %v416
      %v432 = vpack.c.b16 %v419, %v418
      %v433 = vpack.c.b16 %v421, %v420
      %v434 = vpack.c.b16 %v423, %v422
      %v435 = vpack.c.b16 %v425, %v424
      %v436 = vpack.c.b16 %v427, %v426
      %v437 = vpack.c.b16 %v429, %v428
      %446 = vmatprep.subr.bf16.mxu0 0
      %447 = vmatpush1.bf16.msra.mxu0 %v430
      %448 = vmatprep.subr.bf16.mxu0 0
      %449 = vmatpush1.bf16.msra.mxu0 %v431
      %450 = vmatprep.subr.bf16.mxu0 0
      %451 = vmatpush1.bf16.msra.mxu0 %v432
      %452 = vmatprep.subr.bf16.mxu0 0
      %453 = vmatpush1.bf16.msra.mxu0 %v433
      %454 = vmatprep.subr.bf16.mxu0 0
      %455 = vmatpush1.bf16.msra.mxu0 %v434
      %456 = vmatprep.subr.bf16.mxu0 0
      %457 = vmatpush1.bf16.msra.mxu0 %v435
      %458 = vmatprep.subr.bf16.mxu0 0
      %459 = vmatpush1.bf16.msra.mxu0 %v436
      %460 = vmatprep.subr.bf16.mxu0 0
      %461 = vmatpush1.bf16.msra.mxu0 %v437
      %462 = vmatprep.subr.bf16.mxu0 0
      %463 = vmatpush1.bf16.msra.mxu0 0
      %464 = vmatprep.subr.bf16.mxu0 0
      %465 = vmatpush1.bf16.msra.mxu0 0
      %466 = vmatprep.subr.bf16.mxu0 0
      %467 = vmatpush1.bf16.msra.mxu0 0
      %468 = vmatprep.subr.bf16.mxu0 0
      %469 = vmatpush1.bf16.msra.mxu0 0
      %470 = vmatprep.subr.bf16.mxu0 0
      %471 = vmatpush1.bf16.msra.mxu0 0
      %472 = vmatprep.subr.bf16.mxu0 0
      %473 = vmatpush1.bf16.msra.mxu0 0
      %474 = vmatprep.subr.bf16.mxu0 0
      %475 = vmatpush1.bf16.msra.mxu0 0
      %476 = vmatprep.subr.bf16.mxu0 0
      %477 = vmatpush1.bf16.msra.mxu0 0
      %478 = vmatprep.mubr.bf16.mxu0 0
      %479 = vmatmul.mubr.bf16.gmra.mrb[0].mxu0 %v390
      %v480 = vpop.f32.mrb[0].mxu0
      %v481 = vadd.f32 0.0, %v480
      %v482 = vpop.f32.mrb[0].mxu0
      %v483 = vpop.f32.mrb[0].mxu0
      %v484 = vadd.f32 0.0, %v483
      %v485 = vpop.f32.mrb[0].mxu0
      %486 = vmatprep.mubr.bf16.mxu0 0
      %487 = vmatmul.mubr.bf16.gmra.mrb[0].mxu0 %v391
      %v488 = vpop.f32.mrb[0].mxu0
      %v489 = vadd.f32 0.0, %v488
      %v490 = vpop.f32.mrb[0].mxu0
      %v491 = vpop.f32.mrb[0].mxu0
      %v492 = vadd.f32 0.0, %v491
      %v493 = vpop.f32.mrb[0].mxu0
      %494 = vmatprep.mubr.bf16.mxu0 0
      %495 = vmatmul.mubr.bf16.gmra.mrb[0].mxu0 %v392
      %v496 = vpop.f32.mrb[0].mxu0
      %v497 = vadd.f32 0.0, %v496
      %v498 = vpop.f32.mrb[0].mxu0
      %v499 = vpop.f32.mrb[0].mxu0
      %v500 = vadd.f32 0.0, %v499
      %v501 = vpop.f32.mrb[0].mxu0
      %502 = vmatprep.mubr.bf16.mxu0 0
      %503 = vmatmul.mubr.bf16.gmra.mrb[0].mxu0 %v393
      %v504 = vpop.f32.mrb[0].mxu0
      %v505 = vadd.f32 0.0, %v504
      %v506 = vpop.f32.mrb[0].mxu0
      %v507 = vpop.f32.mrb[0].mxu0
      %v508 = vadd.f32 0.0, %v507
      %v509 = vpop.f32.mrb[0].mxu0
      %510 = vdwg.mxu0
      %v519 = vunpack.c.l.b16 %v218
      %v520 = vunpack.c.l.b16 %v219
      %v521 = vunpack.c.l.b16 %v220
      %v522 = vunpack.c.l.b16 %v221
      %v523 = vunpack.c.l.b16 %v222
      %v524 = vunpack.c.l.b16 %v223
      %v525 = vunpack.c.l.b16 %v224
      %v526 = vunpack.c.l.b16 %v225
      %v527 = vpack.c.b16 %v520, %v519
      %v528 = vpack.c.b16 %v522, %v521
      %v529 = vpack.c.b16 %v524, %v523
      %v530 = vpack.c.b16 %v526, %v525
      %v551 = vunpack.c.l.b16 %v226
      %v552 = vunpack.c.l.b16 %v227
      %v553 = vunpack.c.l.b16 %v228
      %v554 = vunpack.c.l.b16 %v229
      %v555 = vunpack.c.l.b16 %v230
      %v556 = vunpack.c.l.b16 %v231
      %v557 = vunpack.c.l.b16 %v232
      %v558 = vunpack.c.l.b16 %v233
      %v559 = vunpack.c.l.b16 %v234
      %v560 = vunpack.c.l.b16 %v235
      %v561 = vunpack.c.l.b16 %v236
      %v562 = vunpack.c.l.b16 %v237
      %v563 = vunpack.c.l.b16 %v238
      %v564 = vunpack.c.l.b16 %v239
      %v565 = vunpack.c.l.b16 %v240
      %v566 = vunpack.c.l.b16 %v241
      %v567 = vpack.c.b16 %v552, %v551
      %v568 = vpack.c.b16 %v554, %v553
      %v569 = vpack.c.b16 %v556, %v555
      %v570 = vpack.c.b16 %v558, %v557
      %v571 = vpack.c.b16 %v560, %v559
      %v572 = vpack.c.b16 %v562, %v561
      %v573 = vpack.c.b16 %v564, %v563
      %v574 = vpack.c.b16 %v566, %v565
      %583 = vmatprep.subr.bf16.mxu0 0
      %584 = vmatpush1.bf16.msra.mxu0 %v567
      %585 = vmatprep.subr.bf16.mxu0 0
      %586 = vmatpush1.bf16.msra.mxu0 %v568
      %587 = vmatprep.subr.bf16.mxu0 0
      %588 = vmatpush1.bf16.msra.mxu0 %v569
      %589 = vmatprep.subr.bf16.mxu0 0
      %590 = vmatpush1.bf16.msra.mxu0 %v570
      %591 = vmatprep.subr.bf16.mxu0 0
      %592 = vmatpush1.bf16.msra.mxu0 %v571
      %593 = vmatprep.subr.bf16.mxu0 0
      %594 = vmatpush1.bf16.msra.mxu0 %v572
      %595 = vmatprep.subr.bf16.mxu0 0
      %596 = vmatpush1.bf16.msra.mxu0 %v573
      %597 = vmatprep.subr.bf16.mxu0 0
      %598 = vmatpush1.bf16.msra.mxu0 %v574
      %599 = vmatprep.subr.bf16.mxu0 0
      %600 = vmatpush1.bf16.msra.mxu0 0
      %601 = vmatprep.subr.bf16.mxu0 0
      %602 = vmatpush1.bf16.msra.mxu0 0
      %603 = vmatprep.subr.bf16.mxu0 0
      %604 = vmatpush1.bf16.msra.mxu0 0
      %605 = vmatprep.subr.bf16.mxu0 0
      %606 = vmatpush1.bf16.msra.mxu0 0
      %607 = vmatprep.subr.bf16.mxu0 0
      %608 = vmatpush1.bf16.msra.mxu0 0
      %609 = vmatprep.subr.bf16.mxu0 0
      %610 = vmatpush1.bf16.msra.mxu0 0
      %611 = vmatprep.subr.bf16.mxu0 0
      %612 = vmatpush1.bf16.msra.mxu0 0
      %613 = vmatprep.subr.bf16.mxu0 0
      %614 = vmatpush1.bf16.msra.mxu0 0
      %615 = vmatprep.mubr.bf16.mxu0 0
      %616 = vmatmul.mubr.bf16.gmra.mrb[0].mxu0 %v527
      %v617 = vpop.f32.mrb[0].mxu0
      %v618 = vadd.f32 %v481, %v617
      %v619 = vpop.f32.mrb[0].mxu0
      %v620 = vpop.f32.mrb[0].mxu0
      %v621 = vadd.f32 %v484, %v620
      %v622 = vpop.f32.mrb[0].mxu0
      %623 = vmatprep.mubr.bf16.mxu0 0
      %624 = vmatmul.mubr.bf16.gmra.mrb[0].mxu0 %v528
      %v625 = vpop.f32.mrb[0].mxu0
      %v626 = vadd.f32 %v489, %v625
      %v627 = vpop.f32.mrb[0].mxu0
      %v628 = vpop.f32.mrb[0].mxu0
      %v629 = vadd.f32 %v492, %v628
      %v630 = vpop.f32.mrb[0].mxu0
      %631 = vmatprep.mubr.bf16.mxu0 0
      %632 = vmatmul.mubr.bf16.gmra.mrb[0].mxu0 %v529
      %v633 = vpop.f32.mrb[0].mxu0
      %v634 = vadd.f32 %v497, %v633
      %v635 = vpop.f32.mrb[0].mxu0
      %v636 = vpop.f32.mrb[0].mxu0
      %v637 = vadd.f32 %v500, %v636
      %v638 = vpop.f32.mrb[0].mxu0
      %639 = vmatprep.mubr.bf16.mxu0 0
      %640 = vmatmul.mubr.bf16.gmra.mrb[0].mxu0 %v530
      %v641 = vpop.f32.mrb[0].mxu0
      %v642 = vadd.f32 %v505, %v641
      %v643 = vpop.f32.mrb[0].mxu0
      %v644 = vpop.f32.mrb[0].mxu0
      %v645 = vadd.f32 %v508, %v644
      %v646 = vpop.f32.mrb[0].mxu0
      %647 = vdwg.mxu0
      %v648 = vld [vmem:[%s217] sm:$0xe]
      %v649 = vld [vmem:[%s217 + $0x8] sm:$0xe]
      %v650 = vld [vmem:[%s217 + $0x10] sm:$0xe]
      %v651 = vld [vmem:[%s217 + $0x18] sm:$0xe]
      %v652 = vld [vmem:[%s217 + $0x20] sm:$0xe]
      %v653 = vld [vmem:[%s217 + $0x28] sm:$0xe]
      %v654 = vld [vmem:[%s217 + $0x30] sm:$0xe]
      %v655 = vld [vmem:[%s217 + $0x38] sm:$0xe]
      %vm672 = vcmask 1042432
      %vm673 = vcmask 1046532
      %vm674 = vmor %vm672, %vm673
      %v675 = vrot.slane %v648, 5
      %v676 = vrot.slane %v675, 4
      %v677 = vrot.slane %v242, 5
      %v678 = vsel %vm674, %v676, %v677
      %v679 = vrot.slane %v649, 5
      %v680 = vrot.slane %v679, 4
      %v681 = vrot.slane %v243, 5
      %v682 = vsel %vm674, %v680, %v681
      %v683 = vrot.slane %v650, 5
      %v684 = vrot.slane %v683, 4
      %v685 = vrot.slane %v244, 5
      %v686 = vsel %vm674, %v684, %v685
      %v687 = vrot.slane %v651, 5
      %v688 = vrot.slane %v687, 4
      %v689 = vrot.slane %v245, 5
      %v690 = vsel %vm674, %v688, %v689
      %v691 = vrot.slane %v652, 5
      %v692 = vrot.slane %v691, 4
      %v693 = vrot.slane %v246, 5
      %v694 = vsel %vm674, %v692, %v693
      %v695 = vrot.slane %v653, 5
      %v696 = vrot.slane %v695, 4
      %v697 = vrot.slane %v247, 5
      %v698 = vsel %vm674, %v696, %v697
      %v699 = vrot.slane %v654, 5
      %v700 = vrot.slane %v699, 4
      %v701 = vrot.slane %v248, 5
      %v702 = vsel %vm674, %v700, %v701
      %v703 = vrot.slane %v655, 5
      %v704 = vrot.slane %v703, 4
      %v705 = vrot.slane %v249, 5
      %v706 = vsel %vm674, %v704, %v705
      %s707 = scalar_lea.vmem %s1, 128
      %v708 = vld [vmem:[%s707] sm:$0xf]
      %v709 = vld [vmem:[%s707 + $0x4] sm:$0xf]
      %v710 = vld [vmem:[%s707 + $0x8] sm:$0xf]
      %v711 = vld [vmem:[%s707 + $0xc] sm:$0xf]
      %v712 = vld [vmem:[%s707 + $0x10] sm:$0xf]
      %v713 = vld [vmem:[%s707 + $0x14] sm:$0xf]
      %v714 = vld [vmem:[%s707 + $0x18] sm:$0xf]
      %v715 = vld [vmem:[%s707 + $0x1c] sm:$0xf]
      %v716 = vld [vmem:[%s707 + $0x20] sm:$0xf]
      %v717 = vld [vmem:[%s707 + $0x24] sm:$0xf]
      %v718 = vld [vmem:[%s707 + $0x28] sm:$0xf]
      %v719 = vld [vmem:[%s707 + $0x2c] sm:$0xf]
      %v720 = vld [vmem:[%s707 + $0x30] sm:$0xf]
      %v721 = vld [vmem:[%s707 + $0x34] sm:$0xf]
      %v722 = vld [vmem:[%s707 + $0x38] sm:$0xf]
      %v723 = vld [vmem:[%s707 + $0x3c] sm:$0xf]
      %v724 = vunpack.c.l.b16 %v678
      %v725 = vunpack.c.l.b16 %v682
      %v726 = vunpack.c.l.b16 %v686
      %v727 = vunpack.c.l.b16 %v690
      %v728 = vunpack.c.l.b16 %v694
      %v729 = vunpack.c.l.b16 %v698
      %v730 = vunpack.c.l.b16 %v702
      %v731 = vunpack.c.l.b16 %v706
      %v732 = vpack.c.b16 %v725, %v724
      %v733 = vpack.c.b16 %v727, %v726
      %v734 = vpack.c.b16 %v729, %v728
      %v735 = vpack.c.b16 %v731, %v730
      %v756 = vunpack.c.l.b16 %v708
      %v757 = vunpack.c.l.b16 %v709
      %v758 = vunpack.c.l.b16 %v710
      %v759 = vunpack.c.l.b16 %v711
      %v760 = vunpack.c.l.b16 %v712
      %v761 = vunpack.c.l.b16 %v713
      %v762 = vunpack.c.l.b16 %v714
      %v763 = vunpack.c.l.b16 %v715
      %v764 = vunpack.c.l.b16 %v716
      %v765 = vunpack.c.l.b16 %v717
      %v766 = vunpack.c.l.b16 %v718
      %v767 = vunpack.c.l.b16 %v719
      %v768 = vunpack.c.l.b16 %v720
      %v769 = vunpack.c.l.b16 %v721
      %v770 = vunpack.c.l.b16 %v722
      %v771 = vunpack.c.l.b16 %v723
      %v772 = vpack.c.b16 %v757, %v756
      %v773 = vpack.c.b16 %v759, %v758
      %v774 = vpack.c.b16 %v761, %v760
      %v775 = vpack.c.b16 %v763, %v762
      %v776 = vpack.c.b16 %v765, %v764
      %v777 = vpack.c.b16 %v767, %v766
      %v778 = vpack.c.b16 %v769, %v768
      %v779 = vpack.c.b16 %v771, %v770
      %788 = vmatprep.subr.bf16.mxu0 0
      %789 = vmatpush1.bf16.msra.mxu0 %v772
      %790 = vmatprep.subr.bf16.mxu0 0
      %791 = vmatpush1.bf16.msra.mxu0 %v773
      %792 = vmatprep.subr.bf16.mxu0 0
      %793 = vmatpush1.bf16.msra.mxu0 %v774
      %794 = vmatprep.subr.bf16.mxu0 0
      %795 = vmatpush1.bf16.msra.mxu0 %v775
      %796 = vmatprep.subr.bf16.mxu0 0
      %797 = vmatpush1.bf16.msra.mxu0 %v776
      %798 = vmatprep.subr.bf16.mxu0 0
      %799 = vmatpush1.bf16.msra.mxu0 %v777
      %800 = vmatprep.subr.bf16.mxu0 0
      %801 = vmatpush1.bf16.msra.mxu0 %v778
      %802 = vmatprep.subr.bf16.mxu0 0
      %803 = vmatpush1.bf16.msra.mxu0 %v779
      %804 = vmatprep.subr.bf16.mxu0 0
      %805 = vmatpush1.bf16.msra.mxu0 0
      %806 = vmatprep.subr.bf16.mxu0 0
      %807 = vmatpush1.bf16.msra.mxu0 0
      %808 = vmatprep.subr.bf16.mxu0 0
      %809 = vmatpush1.bf16.msra.mxu0 0
      %810 = vmatprep.subr.bf16.mxu0 0
      %811 = vmatpush1.bf16.msra.mxu0 0
      %812 = vmatprep.subr.bf16.mxu0 0
      %813 = vmatpush1.bf16.msra.mxu0 0
      %814 = vmatprep.subr.bf16.mxu0 0
      %815 = vmatpush1.bf16.msra.mxu0 0
      %816 = vmatprep.subr.bf16.mxu0 0
      %817 = vmatpush1.bf16.msra.mxu0 0
      %818 = vmatprep.subr.bf16.mxu0 0
      %819 = vmatpush1.bf16.msra.mxu0 0
      %820 = vmatprep.mubr.bf16.mxu0 0
      %821 = vmatmul.mubr.bf16.gmra.mrb[0].mxu0 %v732
      %v822 = vpop.f32.mrb[0].mxu0
      %v823 = vadd.f32 0.0, %v822
      %v824 = vpop.f32.mrb[0].mxu0
      %v825 = vpop.f32.mrb[0].mxu0
      %v826 = vadd.f32 0.0, %v825
      %v827 = vpop.f32.mrb[0].mxu0
      %828 = vmatprep.mubr.bf16.mxu0 0
      %829 = vmatmul.mubr.bf16.gmra.mrb[0].mxu0 %v733
      %v830 = vpop.f32.mrb[0].mxu0
      %v831 = vadd.f32 0.0, %v830
      %v832 = vpop.f32.mrb[0].mxu0
      %v833 = vpop.f32.mrb[0].mxu0
      %v834 = vadd.f32 0.0, %v833
      %v835 = vpop.f32.mrb[0].mxu0
      %836 = vmatprep.mubr.bf16.mxu0 0
      %837 = vmatmul.mubr.bf16.gmra.mrb[0].mxu0 %v734
      %v838 = vpop.f32.mrb[0].mxu0
      %v839 = vadd.f32 0.0, %v838
      %v840 = vpop.f32.mrb[0].mxu0
      %v841 = vpop.f32.mrb[0].mxu0
      %v842 = vadd.f32 0.0, %v841
      %v843 = vpop.f32.mrb[0].mxu0
      %844 = vmatprep.mubr.bf16.mxu0 0
      %845 = vmatmul.mubr.bf16.gmra.mrb[0].mxu0 %v735
      %v846 = vpop.f32.mrb[0].mxu0
      %v847 = vadd.f32 0.0, %v846
      %v848 = vpop.f32.mrb[0].mxu0
      %v849 = vpop.f32.mrb[0].mxu0
      %v850 = vadd.f32 0.0, %v849
      %v851 = vpop.f32.mrb[0].mxu0
      %852 = vdwg.mxu0
      %v853 = vadd.f32 %v618, %v823
      %v854 = vadd.f32 %v621, %v826
      %v855 = vadd.f32 %v626, %v831
      %v856 = vadd.f32 %v629, %v834
      %v857 = vadd.f32 %v634, %v839
      %v858 = vadd.f32 %v637, %v842
      %v859 = vadd.f32 %v642, %v847
      %v860 = vadd.f32 %v645, %v850
      %s861 = sadd.s32 %s214, 1
      %s862 = smul.u32 %s861, 2
      %s863 = smul.addr %s862, 4
      %s864 = scalar_lea.vmem %s195, %s863
      %v865 = vld [vmem:[%s864] sm:$0xf]
      %v866 = vld [vmem:[%s864 + $0x8] sm:$0xf]
      %v867 = vld [vmem:[%s864 + $0x10] sm:$0xf]
      %v868 = vld [vmem:[%s864 + $0x18] sm:$0xf]
      %v869 = vld [vmem:[%s864 + $0x20] sm:$0xf]
      %v870 = vld [vmem:[%s864 + $0x28] sm:$0xf]
      %v871 = vld [vmem:[%s864 + $0x30] sm:$0xf]
      %v872 = vld [vmem:[%s864 + $0x38] sm:$0xf]
      %s873 = scalar_lea.vmem %s1, 192
      %v874 = vld [vmem:[%s873] sm:$0xf]
      %v875 = vld [vmem:[%s873 + $0x4] sm:$0xf]
      %v876 = vld [vmem:[%s873 + $0x8] sm:$0xf]
      %v877 = vld [vmem:[%s873 + $0xc] sm:$0xf]
      %v878 = vld [vmem:[%s873 + $0x10] sm:$0xf]
      %v879 = vld [vmem:[%s873 + $0x14] sm:$0xf]
      %v880 = vld [vmem:[%s873 + $0x18] sm:$0xf]
      %v881 = vld [vmem:[%s873 + $0x1c] sm:$0xf]
      %v882 = vld [vmem:[%s873 + $0x20] sm:$0xf]
      %v883 = vld [vmem:[%s873 + $0x24] sm:$0xf]
      %v884 = vld [vmem:[%s873 + $0x28] sm:$0xf]
      %v885 = vld [vmem:[%s873 + $0x2c] sm:$0xf]
      %v886 = vld [vmem:[%s873 + $0x30] sm:$0xf]
      %v887 = vld [vmem:[%s873 + $0x34] sm:$0xf]
      %v888 = vld [vmem:[%s873 + $0x38] sm:$0xf]
      %v889 = vld [vmem:[%s873 + $0x3c] sm:$0xf]
      %v898 = vunpack.c.l.b16 %v865
      %v899 = vunpack.c.l.b16 %v866
      %v900 = vunpack.c.l.b16 %v867
      %v901 = vunpack.c.l.b16 %v868
      %v902 = vunpack.c.l.b16 %v869
      %v903 = vunpack.c.l.b16 %v870
      %v904 = vunpack.c.l.b16 %v871
      %v905 = vunpack.c.l.b16 %v872
      %v906 = vpack.c.b16 %v899, %v898
      %v907 = vpack.c.b16 %v901, %v900
      %v908 = vpack.c.b16 %v903, %v902
      %v909 = vpack.c.b16 %v905, %v904
      %v930 = vunpack.c.l.b16 %v874
      %v931 = vunpack.c.l.b16 %v875
      %v932 = vunpack.c.l.b16 %v876
      %v933 = vunpack.c.l.b16 %v877
      %v934 = vunpack.c.l.b16 %v878
      %v935 = vunpack.c.l.b16 %v879
      %v936 = vunpack.c.l.b16 %v880
      %v937 = vunpack.c.l.b16 %v881
      %v938 = vunpack.c.l.b16 %v882
      %v939 = vunpack.c.l.b16 %v883
      %v940 = vunpack.c.l.b16 %v884
      %v941 = vunpack.c.l.b16 %v885
      %v942 = vunpack.c.l.b16 %v886
      %v943 = vunpack.c.l.b16 %v887
      %v944 = vunpack.c.l.b16 %v888
      %v945 = vunpack.c.l.b16 %v889
      %v946 = vpack.c.b16 %v931, %v930
      %v947 = vpack.c.b16 %v933, %v932
      %v948 = vpack.c.b16 %v935, %v934
      %v949 = vpack.c.b16 %v937, %v936
      %v950 = vpack.c.b16 %v939, %v938
      %v951 = vpack.c.b16 %v941, %v940
      %v952 = vpack.c.b16 %v943, %v942
      %v953 = vpack.c.b16 %v945, %v944
      %962 = vmatprep.subr.bf16.mxu0 0
      %963 = vmatpush1.bf16.msra.mxu0 %v946
      %964 = vmatprep.subr.bf16.mxu0 0
      %965 = vmatpush1.bf16.msra.mxu0 %v947
      %966 = vmatprep.subr.bf16.mxu0 0
      %967 = vmatpush1.bf16.msra.mxu0 %v948
      %968 = vmatprep.subr.bf16.mxu0 0
      %969 = vmatpush1.bf16.msra.mxu0 %v949
      %970 = vmatprep.subr.bf16.mxu0 0
      %971 = vmatpush1.bf16.msra.mxu0 %v950
      %972 = vmatprep.subr.bf16.mxu0 0
      %973 = vmatpush1.bf16.msra.mxu0 %v951
      %974 = vmatprep.subr.bf16.mxu0 0
      %975 = vmatpush1.bf16.msra.mxu0 %v952
      %976 = vmatprep.subr.bf16.mxu0 0
      %977 = vmatpush1.bf16.msra.mxu0 %v953
      %978 = vmatprep.subr.bf16.mxu0 0
      %979 = vmatpush1.bf16.msra.mxu0 0
      %980 = vmatprep.subr.bf16.mxu0 0
      %981 = vmatpush1.bf16.msra.mxu0 0
      %982 = vmatprep.subr.bf16.mxu0 0
      %983 = vmatpush1.bf16.msra.mxu0 0
      %984 = vmatprep.subr.bf16.mxu0 0
      %985 = vmatpush1.bf16.msra.mxu0 0
      %986 = vmatprep.subr.bf16.mxu0 0
      %987 = vmatpush1.bf16.msra.mxu0 0
      %988 = vmatprep.subr.bf16.mxu0 0
      %989 = vmatpush1.bf16.msra.mxu0 0
      %990 = vmatprep.subr.bf16.mxu0 0
      %991 = vmatpush1.bf16.msra.mxu0 0
      %992 = vmatprep.subr.bf16.mxu0 0
      %993 = vmatpush1.bf16.msra.mxu0 0
      %994 = vmatprep.mubr.bf16.mxu0 0
      %995 = vmatmul.mubr.bf16.gmra.mrb[0].mxu0 %v906
      %v996 = vpop.f32.mrb[0].mxu0
      %v997 = vadd.f32 0.0, %v996
      %v998 = vpop.f32.mrb[0].mxu0
      %v999 = vpop.f32.mrb[0].mxu0
      %v1000 = vadd.f32 0.0, %v999
      %v1001 = vpop.f32.mrb[0].mxu0
      %1002 = vmatprep.mubr.bf16.mxu0 0
      %1003 = vmatmul.mubr.bf16.gmra.mrb[0].mxu0 %v907
      %v1004 = vpop.f32.mrb[0].mxu0
      %v1005 = vadd.f32 0.0, %v1004
      %v1006 = vpop.f32.mrb[0].mxu0
      %v1007 = vpop.f32.mrb[0].mxu0
      %v1008 = vadd.f32 0.0, %v1007
      %v1009 = vpop.f32.mrb[0].mxu0
      %1010 = vmatprep.mubr.bf16.mxu0 0
      %1011 = vmatmul.mubr.bf16.gmra.mrb[0].mxu0 %v908
      %v1012 = vpop.f32.mrb[0].mxu0
      %v1013 = vadd.f32 0.0, %v1012
      %v1014 = vpop.f32.mrb[0].mxu0
      %v1015 = vpop.f32.mrb[0].mxu0
      %v1016 = vadd.f32 0.0, %v1015
      %v1017 = vpop.f32.mrb[0].mxu0
      %1018 = vmatprep.mubr.bf16.mxu0 0
      %1019 = vmatmul.mubr.bf16.gmra.mrb[0].mxu0 %v909
      %v1020 = vpop.f32.mrb[0].mxu0
      %v1021 = vadd.f32 0.0, %v1020
      %v1022 = vpop.f32.mrb[0].mxu0
      %v1023 = vpop.f32.mrb[0].mxu0
      %v1024 = vadd.f32 0.0, %v1023
      %v1025 = vpop.f32.mrb[0].mxu0
      %1026 = vdwg.mxu0
      %v1027 = vadd.f32 %v853, %v997
      %v1028 = vadd.f32 %v854, %v1000
      %v1029 = vadd.f32 %v855, %v1005
      %v1030 = vadd.f32 %v856, %v1008
      %v1031 = vadd.f32 %v857, %v1013
      %v1032 = vadd.f32 %v858, %v1016
      %v1033 = vadd.f32 %v859, %v1021
      %v1034 = vadd.f32 %v860, %v1024
      %v1035 = vld [vmem:[%s864] sm:$0xf]
      %v1036 = vld [vmem:[%s864 + $0x4] sm:$0x1]
      %v1037 = vld [vmem:[%s864 + $0x8] sm:$0xf]
      %v1038 = vld [vmem:[%s864 + $0xc] sm:$0x1]
      %v1039 = vld [vmem:[%s864 + $0x10] sm:$0xf]
      %v1040 = vld [vmem:[%s864 + $0x14] sm:$0x1]
      %v1041 = vld [vmem:[%s864 + $0x18] sm:$0xf]
      %v1042 = vld [vmem:[%s864 + $0x1c] sm:$0x1]
      %v1043 = vld [vmem:[%s864 + $0x20] sm:$0xf]
      %v1044 = vld [vmem:[%s864 + $0x24] sm:$0x1]
      %v1045 = vld [vmem:[%s864 + $0x28] sm:$0xf]
      %v1046 = vld [vmem:[%s864 + $0x2c] sm:$0x1]
      %v1047 = vld [vmem:[%s864 + $0x30] sm:$0xf]
      %v1048 = vld [vmem:[%s864 + $0x34] sm:$0x1]
      %v1049 = vld [vmem:[%s864 + $0x38] sm:$0xf]
      %v1050 = vld [vmem:[%s864 + $0x3c] sm:$0x1]
      %v1052 = vshrl.u32 %v1035, 16
      %v1054 = vrot.slane %v1052, 4
      %v1055 = vshll.u32 %v1035, 16
      %v1057 = vrot.slane %v1055, 5
      %v1058 = vor.u32 %v1054, %v1057
      %v1059 = vrot.slane %v1058, 4
      %v1061 = vshll.u32 %v1036, 16
      %v1063 = vrot.slane %v1061, 5
      %v1064 = vsel %vm252, %v1059, %v1063
      %v1066 = vshrl.u32 %v1037, 16
      %v1068 = vrot.slane %v1066, 4
      %v1069 = vshll.u32 %v1037, 16
      %v1071 = vrot.slane %v1069, 5
      %v1072 = vor.u32 %v1068, %v1071
      %v1073 = vrot.slane %v1072, 4
      %v1075 = vshll.u32 %v1038, 16
      %v1077 = vrot.slane %v1075, 5
      %v1078 = vsel %vm252, %v1073, %v1077
      %v1080 = vshrl.u32 %v1039, 16
      %v1082 = vrot.slane %v1080, 4
      %v1083 = vshll.u32 %v1039, 16
      %v1085 = vrot.slane %v1083, 5
      %v1086 = vor.u32 %v1082, %v1085
      %v1087 = vrot.slane %v1086, 4
      %v1089 = vshll.u32 %v1040, 16
      %v1091 = vrot.slane %v1089, 5
      %v1092 = vsel %vm252, %v1087, %v1091
      %v1094 = vshrl.u32 %v1041, 16
      %v1096 = vrot.slane %v1094, 4
      %v1097 = vshll.u32 %v1041, 16
      %v1099 = vrot.slane %v1097, 5
      %v1100 = vor.u32 %v1096, %v1099
      %v1101 = vrot.slane %v1100, 4
      %v1103 = vshll.u32 %v1042, 16
      %v1105 = vrot.slane %v1103, 5
      %v1106 = vsel %vm252, %v1101, %v1105
      %v1108 = vshrl.u32 %v1043, 16
      %v1110 = vrot.slane %v1108, 4
      %v1111 = vshll.u32 %v1043, 16
      %v1113 = vrot.slane %v1111, 5
      %v1114 = vor.u32 %v1110, %v1113
      %v1115 = vrot.slane %v1114, 4
      %v1117 = vshll.u32 %v1044, 16
      %v1119 = vrot.slane %v1117, 5
      %v1120 = vsel %vm252, %v1115, %v1119
      %v1122 = vshrl.u32 %v1045, 16
      %v1124 = vrot.slane %v1122, 4
      %v1125 = vshll.u32 %v1045, 16
      %v1127 = vrot.slane %v1125, 5
      %v1128 = vor.u32 %v1124, %v1127
      %v1129 = vrot.slane %v1128, 4
      %v1131 = vshll.u32 %v1046, 16
      %v1133 = vrot.slane %v1131, 5
      %v1134 = vsel %vm252, %v1129, %v1133
      %v1136 = vshrl.u32 %v1047, 16
      %v1138 = vrot.slane %v1136, 4
      %v1139 = vshll.u32 %v1047, 16
      %v1141 = vrot.slane %v1139, 5
      %v1142 = vor.u32 %v1138, %v1141
      %v1143 = vrot.slane %v1142, 4
      %v1145 = vshll.u32 %v1048, 16
      %v1147 = vrot.slane %v1145, 5
      %v1148 = vsel %vm252, %v1143, %v1147
      %v1150 = vshrl.u32 %v1049, 16
      %v1152 = vrot.slane %v1150, 4
      %v1153 = vshll.u32 %v1049, 16
      %v1155 = vrot.slane %v1153, 5
      %v1156 = vor.u32 %v1152, %v1155
      %v1157 = vrot.slane %v1156, 4
      %v1159 = vshll.u32 %v1050, 16
      %v1161 = vrot.slane %v1159, 5
      %v1162 = vsel %vm252, %v1157, %v1161
      %s1163 = scalar_lea.vmem %s1, 256
      %v1164 = vld [vmem:[%s1163] sm:$0xf]
      %v1165 = vld [vmem:[%s1163 + $0x4] sm:$0xf]
      %v1166 = vld [vmem:[%s1163 + $0x8] sm:$0xf]
      %v1167 = vld [vmem:[%s1163 + $0xc] sm:$0xf]
      %v1168 = vld [vmem:[%s1163 + $0x10] sm:$0xf]
      %v1169 = vld [vmem:[%s1163 + $0x14] sm:$0xf]
      %v1170 = vld [vmem:[%s1163 + $0x18] sm:$0xf]
      %v1171 = vld [vmem:[%s1163 + $0x1c] sm:$0xf]
      %v1172 = vld [vmem:[%s1163 + $0x20] sm:$0xf]
      %v1173 = vld [vmem:[%s1163 + $0x24] sm:$0xf]
      %v1174 = vld [vmem:[%s1163 + $0x28] sm:$0xf]
      %v1175 = vld [vmem:[%s1163 + $0x2c] sm:$0xf]
      %v1176 = vld [vmem:[%s1163 + $0x30] sm:$0xf]
      %v1177 = vld [vmem:[%s1163 + $0x34] sm:$0xf]
      %v1178 = vld [vmem:[%s1163 + $0x38] sm:$0xf]
      %v1179 = vld [vmem:[%s1163 + $0x3c] sm:$0xf]
      %v1180 = vunpack.c.l.b16 %v1064
      %v1181 = vunpack.c.l.b16 %v1078
      %v1182 = vunpack.c.l.b16 %v1092
      %v1183 = vunpack.c.l.b16 %v1106
      %v1184 = vunpack.c.l.b16 %v1120
      %v1185 = vunpack.c.l.b16 %v1134
      %v1186 = vunpack.c.l.b16 %v1148
      %v1187 = vunpack.c.l.b16 %v1162
      %v1188 = vpack.c.b16 %v1181, %v1180
      %v1189 = vpack.c.b16 %v1183, %v1182
      %v1190 = vpack.c.b16 %v1185, %v1184
      %v1191 = vpack.c.b16 %v1187, %v1186
      %v1212 = vunpack.c.l.b16 %v1164
      %v1213 = vunpack.c.l.b16 %v1165
      %v1214 = vunpack.c.l.b16 %v1166
      %v1215 = vunpack.c.l.b16 %v1167
      %v1216 = vunpack.c.l.b16 %v1168
      %v1217 = vunpack.c.l.b16 %v1169
      %v1218 = vunpack.c.l.b16 %v1170
      %v1219 = vunpack.c.l.b16 %v1171
      %v1220 = vunpack.c.l.b16 %v1172
      %v1221 = vunpack.c.l.b16 %v1173
      %v1222 = vunpack.c.l.b16 %v1174
      %v1223 = vunpack.c.l.b16 %v1175
      %v1224 = vunpack.c.l.b16 %v1176
      %v1225 = vunpack.c.l.b16 %v1177
      %v1226 = vunpack.c.l.b16 %v1178
      %v1227 = vunpack.c.l.b16 %v1179
      %v1228 = vpack.c.b16 %v1213, %v1212
      %v1229 = vpack.c.b16 %v1215, %v1214
      %v1230 = vpack.c.b16 %v1217, %v1216
      %v1231 = vpack.c.b16 %v1219, %v1218
      %v1232 = vpack.c.b16 %v1221, %v1220
      %v1233 = vpack.c.b16 %v1223, %v1222
      %v1234 = vpack.c.b16 %v1225, %v1224
      %v1235 = vpack.c.b16 %v1227, %v1226
      %1244 = vmatprep.subr.bf16.mxu0 0
      %1245 = vmatpush1.bf16.msra.mxu0 %v1228
      %1246 = vmatprep.subr.bf16.mxu0 0
      %1247 = vmatpush1.bf16.msra.mxu0 %v1229
      %1248 = vmatprep.subr.bf16.mxu0 0
      %1249 = vmatpush1.bf16.msra.mxu0 %v1230
      %1250 = vmatprep.subr.bf16.mxu0 0
      %1251 = vmatpush1.bf16.msra.mxu0 %v1231
      %1252 = vmatprep.subr.bf16.mxu0 0
      %1253 = vmatpush1.bf16.msra.mxu0 %v1232
      %1254 = vmatprep.subr.bf16.mxu0 0
      %1255 = vmatpush1.bf16.msra.mxu0 %v1233
      %1256 = vmatprep.subr.bf16.mxu0 0
      %1257 = vmatpush1.bf16.msra.mxu0 %v1234
      %1258 = vmatprep.subr.bf16.mxu0 0
      %1259 = vmatpush1.bf16.msra.mxu0 %v1235
      %1260 = vmatprep.subr.bf16.mxu0 0
      %1261 = vmatpush1.bf16.msra.mxu0 0
      %1262 = vmatprep.subr.bf16.mxu0 0
      %1263 = vmatpush1.bf16.msra.mxu0 0
      %1264 = vmatprep.subr.bf16.mxu0 0
      %1265 = vmatpush1.bf16.msra.mxu0 0
      %1266 = vmatprep.subr.bf16.mxu0 0
      %1267 = vmatpush1.bf16.msra.mxu0 0
      %1268 = vmatprep.subr.bf16.mxu0 0
      %1269 = vmatpush1.bf16.msra.mxu0 0
      %1270 = vmatprep.subr.bf16.mxu0 0
      %1271 = vmatpush1.bf16.msra.mxu0 0
      %1272 = vmatprep.subr.bf16.mxu0 0
      %1273 = vmatpush1.bf16.msra.mxu0 0
      %1274 = vmatprep.subr.bf16.mxu0 0
      %1275 = vmatpush1.bf16.msra.mxu0 0
      %1276 = vmatprep.mubr.bf16.mxu0 0
      %1277 = vmatmul.mubr.bf16.gmra.mrb[0].mxu0 %v1188
      %v1278 = vpop.f32.mrb[0].mxu0
      %v1279 = vadd.f32 0.0, %v1278
      %v1280 = vpop.f32.mrb[0].mxu0
      %v1281 = vpop.f32.mrb[0].mxu0
      %v1282 = vadd.f32 0.0, %v1281
      %v1283 = vpop.f32.mrb[0].mxu0
      %1284 = vmatprep.mubr.bf16.mxu0 0
      %1285 = vmatmul.mubr.bf16.gmra.mrb[0].mxu0 %v1189
      %v1286 = vpop.f32.mrb[0].mxu0
      %v1287 = vadd.f32 0.0, %v1286
      %v1288 = vpop.f32.mrb[0].mxu0
      %v1289 = vpop.f32.mrb[0].mxu0
      %v1290 = vadd.f32 0.0, %v1289
      %v1291 = vpop.f32.mrb[0].mxu0
      %1292 = vmatprep.mubr.bf16.mxu0 0
      %1293 = vmatmul.mubr.bf16.gmra.mrb[0].mxu0 %v1190
      %v1294 = vpop.f32.mrb[0].mxu0
      %v1295 = vadd.f32 0.0, %v1294
      %v1296 = vpop.f32.mrb[0].mxu0
      %v1297 = vpop.f32.mrb[0].mxu0
      %v1298 = vadd.f32 0.0, %v1297
      %v1299 = vpop.f32.mrb[0].mxu0
      %1300 = vmatprep.mubr.bf16.mxu0 0
      %1301 = vmatmul.mubr.bf16.gmra.mrb[0].mxu0 %v1191
      %v1302 = vpop.f32.mrb[0].mxu0
      %v1303 = vadd.f32 0.0, %v1302
      %v1304 = vpop.f32.mrb[0].mxu0
      %v1305 = vpop.f32.mrb[0].mxu0
      %v1306 = vadd.f32 0.0, %v1305
      %v1307 = vpop.f32.mrb[0].mxu0
      %1308 = vdwg.mxu0
      %v1309 = vadd.f32 %v1027, %v1279
      %v1310 = vadd.f32 %v1028, %v1282
      %v1311 = vadd.f32 %v1029, %v1287
      %v1312 = vadd.f32 %v1030, %v1290
      %v1313 = vadd.f32 %v1031, %v1295
      %v1314 = vadd.f32 %v1032, %v1298
      %v1315 = vadd.f32 %v1033, %v1303
      %v1316 = vadd.f32 %v1034, %v1306
      %v1317 = vld [vmem:[%s864] sm:$0xe]
      %v1318 = vld [vmem:[%s864 + $0x8] sm:$0xe]
      %v1319 = vld [vmem:[%s864 + $0x10] sm:$0xe]
      %v1320 = vld [vmem:[%s864 + $0x18] sm:$0xe]
      %v1321 = vld [vmem:[%s864 + $0x20] sm:$0xe]
      %v1322 = vld [vmem:[%s864 + $0x28] sm:$0xe]
      %v1323 = vld [vmem:[%s864 + $0x30] sm:$0xe]
      %v1324 = vld [vmem:[%s864 + $0x38] sm:$0xe]
      %v1341 = vrot.slane %v1317, 5
      %v1342 = vrot.slane %v1341, 4
      %v1343 = vrot.slane %v1036, 5
      %v1344 = vsel %vm674, %v1342, %v1343
      %v1345 = vrot.slane %v1318, 5
      %v1346 = vrot.slane %v1345, 4
      %v1347 = vrot.slane %v1038, 5
      %v1348 = vsel %vm674, %v1346, %v1347
      %v1349 = vrot.slane %v1319, 5
      %v1350 = vrot.slane %v1349, 4
      %v1351 = vrot.slane %v1040, 5
      %v1352 = vsel %vm674, %v1350, %v1351
      %v1353 = vrot.slane %v1320, 5
      %v1354 = vrot.slane %v1353, 4
      %v1355 = vrot.slane %v1042, 5
      %v1356 = vsel %vm674, %v1354, %v1355
      %v1357 = vrot.slane %v1321, 5
      %v1358 = vrot.slane %v1357, 4
      %v1359 = vrot.slane %v1044, 5
      %v1360 = vsel %vm674, %v1358, %v1359
      %v1361 = vrot.slane %v1322, 5
      %v1362 = vrot.slane %v1361, 4
      %v1363 = vrot.slane %v1046, 5
      %v1364 = vsel %vm674, %v1362, %v1363
      %v1365 = vrot.slane %v1323, 5
      %v1366 = vrot.slane %v1365, 4
      %v1367 = vrot.slane %v1048, 5
      %v1368 = vsel %vm674, %v1366, %v1367
      %v1369 = vrot.slane %v1324, 5
      %v1370 = vrot.slane %v1369, 4
      %v1371 = vrot.slane %v1050, 5
      %v1372 = vsel %vm674, %v1370, %v1371
      %s1373 = scalar_lea.vmem %s1, 320
      %v1374 = vld [vmem:[%s1373] sm:$0xf]
      %v1375 = vld [vmem:[%s1373 + $0x4] sm:$0xf]
      %v1376 = vld [vmem:[%s1373 + $0x8] sm:$0xf]
      %v1377 = vld [vmem:[%s1373 + $0xc] sm:$0xf]
      %v1378 = vld [vmem:[%s1373 + $0x10] sm:$0xf]
      %v1379 = vld [vmem:[%s1373 + $0x14] sm:$0xf]
      %v1380 = vld [vmem:[%s1373 + $0x18] sm:$0xf]
      %v1381 = vld [vmem:[%s1373 + $0x1c] sm:$0xf]
      %v1382 = vld [vmem:[%s1373 + $0x20] sm:$0xf]
      %v1383 = vld [vmem:[%s1373 + $0x24] sm:$0xf]
      %v1384 = vld [vmem:[%s1373 + $0x28] sm:$0xf]
      %v1385 = vld [vmem:[%s1373 + $0x2c] sm:$0xf]
      %v1386 = vld [vmem:[%s1373 + $0x30] sm:$0xf]
      %v1387 = vld [vmem:[%s1373 + $0x34] sm:$0xf]
      %v1388 = vld [vmem:[%s1373 + $0x38] sm:$0xf]
      %v1389 = vld [vmem:[%s1373 + $0x3c] sm:$0xf]
      %v1390 = vunpack.c.l.b16 %v1344
      %v1391 = vunpack.c.l.b16 %v1348
      %v1392 = vunpack.c.l.b16 %v1352
      %v1393 = vunpack.c.l.b16 %v1356
      %v1394 = vunpack.c.l.b16 %v1360
      %v1395 = vunpack.c.l.b16 %v1364
      %v1396 = vunpack.c.l.b16 %v1368
      %v1397 = vunpack.c.l.b16 %v1372
      %v1398 = vpack.c.b16 %v1391, %v1390
      %v1399 = vpack.c.b16 %v1393, %v1392
      %v1400 = vpack.c.b16 %v1395, %v1394
      %v1401 = vpack.c.b16 %v1397, %v1396
      %v1422 = vunpack.c.l.b16 %v1374
      %v1423 = vunpack.c.l.b16 %v1375
      %v1424 = vunpack.c.l.b16 %v1376
      %v1425 = vunpack.c.l.b16 %v1377
      %v1426 = vunpack.c.l.b16 %v1378
      %v1427 = vunpack.c.l.b16 %v1379
      %v1428 = vunpack.c.l.b16 %v1380
      %v1429 = vunpack.c.l.b16 %v1381
      %v1430 = vunpack.c.l.b16 %v1382
      %v1431 = vunpack.c.l.b16 %v1383
      %v1432 = vunpack.c.l.b16 %v1384
      %v1433 = vunpack.c.l.b16 %v1385
      %v1434 = vunpack.c.l.b16 %v1386
      %v1435 = vunpack.c.l.b16 %v1387
      %v1436 = vunpack.c.l.b16 %v1388
      %v1437 = vunpack.c.l.b16 %v1389
      %v1438 = vpack.c.b16 %v1423, %v1422
      %v1439 = vpack.c.b16 %v1425, %v1424
      %v1440 = vpack.c.b16 %v1427, %v1426
      %v1441 = vpack.c.b16 %v1429, %v1428
      %v1442 = vpack.c.b16 %v1431, %v1430
      %v1443 = vpack.c.b16 %v1433, %v1432
      %v1444 = vpack.c.b16 %v1435, %v1434
      %v1445 = vpack.c.b16 %v1437, %v1436
      %1454 = vmatprep.subr.bf16.mxu0 0
      %1455 = vmatpush1.bf16.msra.mxu0 %v1438
      %1456 = vmatprep.subr.bf16.mxu0 0
      %1457 = vmatpush1.bf16.msra.mxu0 %v1439
      %1458 = vmatprep.subr.bf16.mxu0 0
      %1459 = vmatpush1.bf16.msra.mxu0 %v1440
      %1460 = vmatprep.subr.bf16.mxu0 0
      %1461 = vmatpush1.bf16.msra.mxu0 %v1441
      %1462 = vmatprep.subr.bf16.mxu0 0
      %1463 = vmatpush1.bf16.msra.mxu0 %v1442
      %1464 = vmatprep.subr.bf16.mxu0 0
      %1465 = vmatpush1.bf16.msra.mxu0 %v1443
      %1466 = vmatprep.subr.bf16.mxu0 0
      %1467 = vmatpush1.bf16.msra.mxu0 %v1444
      %1468 = vmatprep.subr.bf16.mxu0 0
      %1469 = vmatpush1.bf16.msra.mxu0 %v1445
      %1470 = vmatprep.subr.bf16.mxu0 0
      %1471 = vmatpush1.bf16.msra.mxu0 0
      %1472 = vmatprep.subr.bf16.mxu0 0
      %1473 = vmatpush1.bf16.msra.mxu0 0
      %1474 = vmatprep.subr.bf16.mxu0 0
      %1475 = vmatpush1.bf16.msra.mxu0 0
      %1476 = vmatprep.subr.bf16.mxu0 0
      %1477 = vmatpush1.bf16.msra.mxu0 0
      %1478 = vmatprep.subr.bf16.mxu0 0
      %1479 = vmatpush1.bf16.msra.mxu0 0
      %1480 = vmatprep.subr.bf16.mxu0 0
      %1481 = vmatpush1.bf16.msra.mxu0 0
      %1482 = vmatprep.subr.bf16.mxu0 0
      %1483 = vmatpush1.bf16.msra.mxu0 0
      %1484 = vmatprep.subr.bf16.mxu0 0
      %1485 = vmatpush1.bf16.msra.mxu0 0
      %1486 = vmatprep.mubr.bf16.mxu0 0
      %1487 = vmatmul.mubr.bf16.gmra.mrb[0].mxu0 %v1398
      %v1488 = vpop.f32.mrb[0].mxu0
      %v1489 = vadd.f32 0.0, %v1488
      %v1490 = vpop.f32.mrb[0].mxu0
      %v1491 = vpop.f32.mrb[0].mxu0
      %v1492 = vadd.f32 0.0, %v1491
      %v1493 = vpop.f32.mrb[0].mxu0
      %1494 = vmatprep.mubr.bf16.mxu0 0
      %1495 = vmatmul.mubr.bf16.gmra.mrb[0].mxu0 %v1399
      %v1496 = vpop.f32.mrb[0].mxu0
      %v1497 = vadd.f32 0.0, %v1496
      %v1498 = vpop.f32.mrb[0].mxu0
      %v1499 = vpop.f32.mrb[0].mxu0
      %v1500 = vadd.f32 0.0, %v1499
      %v1501 = vpop.f32.mrb[0].mxu0
      %1502 = vmatprep.mubr.bf16.mxu0 0
      %1503 = vmatmul.mubr.bf16.gmra.mrb[0].mxu0 %v1400
      %v1504 = vpop.f32.mrb[0].mxu0
      %v1505 = vadd.f32 0.0, %v1504
      %v1506 = vpop.f32.mrb[0].mxu0
      %v1507 = vpop.f32.mrb[0].mxu0
      %v1508 = vadd.f32 0.0, %v1507
      %v1509 = vpop.f32.mrb[0].mxu0
      %1510 = vmatprep.mubr.bf16.mxu0 0
      %1511 = vmatmul.mubr.bf16.gmra.mrb[0].mxu0 %v1401
      %v1512 = vpop.f32.mrb[0].mxu0
      %v1513 = vadd.f32 0.0, %v1512
      %v1514 = vpop.f32.mrb[0].mxu0
      %v1515 = vpop.f32.mrb[0].mxu0
      %v1516 = vadd.f32 0.0, %v1515
      %v1517 = vpop.f32.mrb[0].mxu0
      %1518 = vdwg.mxu0
      %v1519 = vadd.f32 %v1309, %v1489
      %v1520 = vadd.f32 %v1310, %v1492
      %v1521 = vadd.f32 %v1311, %v1497
      %v1522 = vadd.f32 %v1312, %v1500
      %v1523 = vadd.f32 %v1313, %v1505
      %v1524 = vadd.f32 %v1314, %v1508
      %v1525 = vadd.f32 %v1315, %v1513
      %v1526 = vadd.f32 %v1316, %v1516
      %s1527 = sadd.s32 %s214, 2
      %s1528 = smul.u32 %s1527, 2
      %s1529 = smul.addr %s1528, 4
      %s1530 = scalar_lea.vmem %s195, %s1529
      %v1531 = vld [vmem:[%s1530] sm:$0xf]
      %v1532 = vld [vmem:[%s1530 + $0x8] sm:$0xf]
      %v1533 = vld [vmem:[%s1530 + $0x10] sm:$0xf]
      %v1534 = vld [vmem:[%s1530 + $0x18] sm:$0xf]
      %v1535 = vld [vmem:[%s1530 + $0x20] sm:$0xf]
      %v1536 = vld [vmem:[%s1530 + $0x28] sm:$0xf]
      %v1537 = vld [vmem:[%s1530 + $0x30] sm:$0xf]
      %v1538 = vld [vmem:[%s1530 + $0x38] sm:$0xf]
      %s1539 = scalar_lea.vmem %s1, 384
      %v1540 = vld [vmem:[%s1539] sm:$0xf]
      %v1541 = vld [vmem:[%s1539 + $0x4] sm:$0xf]
      %v1542 = vld [vmem:[%s1539 + $0x8] sm:$0xf]
      %v1543 = vld [vmem:[%s1539 + $0xc] sm:$0xf]
      %v1544 = vld [vmem:[%s1539 + $0x10] sm:$0xf]
      %v1545 = vld [vmem:[%s1539 + $0x14] sm:$0xf]
      %v1546 = vld [vmem:[%s1539 + $0x18] sm:$0xf]
      %v1547 = vld [vmem:[%s1539 + $0x1c] sm:$0xf]
      %v1548 = vld [vmem:[%s1539 + $0x20] sm:$0xf]
      %v1549 = vld [vmem:[%s1539 + $0x24] sm:$0xf]
      %v1550 = vld [vmem:[%s1539 + $0x28] sm:$0xf]
      %v1551 = vld [vmem:[%s1539 + $0x2c] sm:$0xf]
      %v1552 = vld [vmem:[%s1539 + $0x30] sm:$0xf]
      %v1553 = vld [vmem:[%s1539 + $0x34] sm:$0xf]
      %v1554 = vld [vmem:[%s1539 + $0x38] sm:$0xf]
      %v1555 = vld [vmem:[%s1539 + $0x3c] sm:$0xf]
      %v1564 = vunpack.c.l.b16 %v1531
      %v1565 = vunpack.c.l.b16 %v1532
      %v1566 = vunpack.c.l.b16 %v1533
      %v1567 = vunpack.c.l.b16 %v1534
      %v1568 = vunpack.c.l.b16 %v1535
      %v1569 = vunpack.c.l.b16 %v1536
      %v1570 = vunpack.c.l.b16 %v1537
      %v1571 = vunpack.c.l.b16 %v1538
      %v1572 = vpack.c.b16 %v1565, %v1564
      %v1573 = vpack.c.b16 %v1567, %v1566
      %v1574 = vpack.c.b16 %v1569, %v1568
      %v1575 = vpack.c.b16 %v1571, %v1570
      %v1596 = vunpack.c.l.b16 %v1540
      %v1597 = vunpack.c.l.b16 %v1541
      %v1598 = vunpack.c.l.b16 %v1542
      %v1599 = vunpack.c.l.b16 %v1543
      %v1600 = vunpack.c.l.b16 %v1544
      %v1601 = vunpack.c.l.b16 %v1545
      %v1602 = vunpack.c.l.b16 %v1546
      %v1603 = vunpack.c.l.b16 %v1547
      %v1604 = vunpack.c.l.b16 %v1548
      %v1605 = vunpack.c.l.b16 %v1549
      %v1606 = vunpack.c.l.b16 %v1550
      %v1607 = vunpack.c.l.b16 %v1551
      %v1608 = vunpack.c.l.b16 %v1552
      %v1609 = vunpack.c.l.b16 %v1553
      %v1610 = vunpack.c.l.b16 %v1554
      %v1611 = vunpack.c.l.b16 %v1555
      %v1612 = vpack.c.b16 %v1597, %v1596
      %v1613 = vpack.c.b16 %v1599, %v1598
      %v1614 = vpack.c.b16 %v1601, %v1600
      %v1615 = vpack.c.b16 %v1603, %v1602
      %v1616 = vpack.c.b16 %v1605, %v1604
      %v1617 = vpack.c.b16 %v1607, %v1606
      %v1618 = vpack.c.b16 %v1609, %v1608
      %v1619 = vpack.c.b16 %v1611, %v1610
      %1628 = vmatprep.subr.bf16.mxu0 0
      %1629 = vmatpush1.bf16.msra.mxu0 %v1612
      %1630 = vmatprep.subr.bf16.mxu0 0
      %1631 = vmatpush1.bf16.msra.mxu0 %v1613
      %1632 = vmatprep.subr.bf16.mxu0 0
      %1633 = vmatpush1.bf16.msra.mxu0 %v1614
      %1634 = vmatprep.subr.bf16.mxu0 0
      %1635 = vmatpush1.bf16.msra.mxu0 %v1615
      %1636 = vmatprep.subr.bf16.mxu0 0
      %1637 = vmatpush1.bf16.msra.mxu0 %v1616
      %1638 = vmatprep.subr.bf16.mxu0 0
      %1639 = vmatpush1.bf16.msra.mxu0 %v1617
      %1640 = vmatprep.subr.bf16.mxu0 0
      %1641 = vmatpush1.bf16.msra.mxu0 %v1618
      %1642 = vmatprep.subr.bf16.mxu0 0
      %1643 = vmatpush1.bf16.msra.mxu0 %v1619
      %1644 = vmatprep.subr.bf16.mxu0 0
      %1645 = vmatpush1.bf16.msra.mxu0 0
      %1646 = vmatprep.subr.bf16.mxu0 0
      %1647 = vmatpush1.bf16.msra.mxu0 0
      %1648 = vmatprep.subr.bf16.mxu0 0
      %1649 = vmatpush1.bf16.msra.mxu0 0
      %1650 = vmatprep.subr.bf16.mxu0 0
      %1651 = vmatpush1.bf16.msra.mxu0 0
      %1652 = vmatprep.subr.bf16.mxu0 0
      %1653 = vmatpush1.bf16.msra.mxu0 0
      %1654 = vmatprep.subr.bf16.mxu0 0
      %1655 = vmatpush1.bf16.msra.mxu0 0
      %1656 = vmatprep.subr.bf16.mxu0 0
      %1657 = vmatpush1.bf16.msra.mxu0 0
      %1658 = vmatprep.subr.bf16.mxu0 0
      %1659 = vmatpush1.bf16.msra.mxu0 0
      %1660 = vmatprep.mubr.bf16.mxu0 0
      %1661 = vmatmul.mubr.bf16.gmra.mrb[0].mxu0 %v1572
      %v1662 = vpop.f32.mrb[0].mxu0
      %v1663 = vadd.f32 0.0, %v1662
      %v1664 = vpop.f32.mrb[0].mxu0
      %v1665 = vpop.f32.mrb[0].mxu0
      %v1666 = vadd.f32 0.0, %v1665
      %v1667 = vpop.f32.mrb[0].mxu0
      %1668 = vmatprep.mubr.bf16.mxu0 0
      %1669 = vmatmul.mubr.bf16.gmra.mrb[0].mxu0 %v1573
      %v1670 = vpop.f32.mrb[0].mxu0
      %v1671 = vadd.f32 0.0, %v1670
      %v1672 = vpop.f32.mrb[0].mxu0
      %v1673 = vpop.f32.mrb[0].mxu0
      %v1674 = vadd.f32 0.0, %v1673
      %v1675 = vpop.f32.mrb[0].mxu0
      %1676 = vmatprep.mubr.bf16.mxu0 0
      %1677 = vmatmul.mubr.bf16.gmra.mrb[0].mxu0 %v1574
      %v1678 = vpop.f32.mrb[0].mxu0
      %v1679 = vadd.f32 0.0, %v1678
      %v1680 = vpop.f32.mrb[0].mxu0
      %v1681 = vpop.f32.mrb[0].mxu0
      %v1682 = vadd.f32 0.0, %v1681
      %v1683 = vpop.f32.mrb[0].mxu0
      %1684 = vmatprep.mubr.bf16.mxu0 0
      %1685 = vmatmul.mubr.bf16.gmra.mrb[0].mxu0 %v1575
      %v1686 = vpop.f32.mrb[0].mxu0
      %v1687 = vadd.f32 0.0, %v1686
      %v1688 = vpop.f32.mrb[0].mxu0
      %v1689 = vpop.f32.mrb[0].mxu0
      %v1690 = vadd.f32 0.0, %v1689
      %v1691 = vpop.f32.mrb[0].mxu0
      %1692 = vdwg.mxu0
      %v1693 = vadd.f32 %v1519, %v1663
      %v1694 = vadd.f32 %v1520, %v1666
      %v1695 = vadd.f32 %v1521, %v1671
      %v1696 = vadd.f32 %v1522, %v1674
      %v1697 = vadd.f32 %v1523, %v1679
      %v1698 = vadd.f32 %v1524, %v1682
      %v1699 = vadd.f32 %v1525, %v1687
      %v1700 = vadd.f32 %v1526, %v1690
      %v1701 = vld [vmem:[%s1530] sm:$0xf]
      %v1702 = vld [vmem:[%s1530 + $0x4] sm:$0x1]
      %v1703 = vld [vmem:[%s1530 + $0x8] sm:$0xf]
      %v1704 = vld [vmem:[%s1530 + $0xc] sm:$0x1]
      %v1705 = vld [vmem:[%s1530 + $0x10] sm:$0xf]
      %v1706 = vld [vmem:[%s1530 + $0x14] sm:$0x1]
      %v1707 = vld [vmem:[%s1530 + $0x18] sm:$0xf]
      %v1708 = vld [vmem:[%s1530 + $0x1c] sm:$0x1]
      %v1709 = vld [vmem:[%s1530 + $0x20] sm:$0xf]
      %v1710 = vld [vmem:[%s1530 + $0x24] sm:$0x1]
      %v1711 = vld [vmem:[%s1530 + $0x28] sm:$0xf]
      %v1712 = vld [vmem:[%s1530 + $0x2c] sm:$0x1]
      %v1713 = vld [vmem:[%s1530 + $0x30] sm:$0xf]
      %v1714 = vld [vmem:[%s1530 + $0x34] sm:$0x1]
      %v1715 = vld [vmem:[%s1530 + $0x38] sm:$0xf]
      %v1716 = vld [vmem:[%s1530 + $0x3c] sm:$0x1]
      %v1718 = vshrl.u32 %v1701, 16
      %v1720 = vrot.slane %v1718, 4
      %v1721 = vshll.u32 %v1701, 16
      %v1723 = vrot.slane %v1721, 5
      %v1724 = vor.u32 %v1720, %v1723
      %v1725 = vrot.slane %v1724, 4
      %v1727 = vshll.u32 %v1702, 16
      %v1729 = vrot.slane %v1727, 5
      %v1730 = vsel %vm252, %v1725, %v1729
      %v1732 = vshrl.u32 %v1703, 16
      %v1734 = vrot.slane %v1732, 4
      %v1735 = vshll.u32 %v1703, 16
      %v1737 = vrot.slane %v1735, 5
      %v1738 = vor.u32 %v1734, %v1737
      %v1739 = vrot.slane %v1738, 4
      %v1741 = vshll.u32 %v1704, 16
      %v1743 = vrot.slane %v1741, 5
      %v1744 = vsel %vm252, %v1739, %v1743
      %v1746 = vshrl.u32 %v1705, 16
      %v1748 = vrot.slane %v1746, 4
      %v1749 = vshll.u32 %v1705, 16
      %v1751 = vrot.slane %v1749, 5
      %v1752 = vor.u32 %v1748, %v1751
      %v1753 = vrot.slane %v1752, 4
      %v1755 = vshll.u32 %v1706, 16
      %v1757 = vrot.slane %v1755, 5
      %v1758 = vsel %vm252, %v1753, %v1757
      %v1760 = vshrl.u32 %v1707, 16
      %v1762 = vrot.slane %v1760, 4
      %v1763 = vshll.u32 %v1707, 16
      %v1765 = vrot.slane %v1763, 5
      %v1766 = vor.u32 %v1762, %v1765
      %v1767 = vrot.slane %v1766, 4
      %v1769 = vshll.u32 %v1708, 16
      %v1771 = vrot.slane %v1769, 5
      %v1772 = vsel %vm252, %v1767, %v1771
      %v1774 = vshrl.u32 %v1709, 16
      %v1776 = vrot.slane %v1774, 4
      %v1777 = vshll.u32 %v1709, 16
      %v1779 = vrot.slane %v1777, 5
      %v1780 = vor.u32 %v1776, %v1779
      %v1781 = vrot.slane %v1780, 4
      %v1783 = vshll.u32 %v1710, 16
      %v1785 = vrot.slane %v1783, 5
      %v1786 = vsel %vm252, %v1781, %v1785
      %v1788 = vshrl.u32 %v1711, 16
      %v1790 = vrot.slane %v1788, 4
      %v1791 = vshll.u32 %v1711, 16
      %v1793 = vrot.slane %v1791, 5
      %v1794 = vor.u32 %v1790, %v1793
      %v1795 = vrot.slane %v1794, 4
      %v1797 = vshll.u32 %v1712, 16
      %v1799 = vrot.slane %v1797, 5
      %v1800 = vsel %vm252, %v1795, %v1799
      %v1802 = vshrl.u32 %v1713, 16
      %v1804 = vrot.slane %v1802, 4
      %v1805 = vshll.u32 %v1713, 16
      %v1807 = vrot.slane %v1805, 5
      %v1808 = vor.u32 %v1804, %v1807
      %v1809 = vrot.slane %v1808, 4
      %v1811 = vshll.u32 %v1714, 16
      %v1813 = vrot.slane %v1811, 5
      %v1814 = vsel %vm252, %v1809, %v1813
      %v1816 = vshrl.u32 %v1715, 16
      %v1818 = vrot.slane %v1816, 4
      %v1819 = vshll.u32 %v1715, 16
      %v1821 = vrot.slane %v1819, 5
      %v1822 = vor.u32 %v1818, %v1821
      %v1823 = vrot.slane %v1822, 4
      %v1825 = vshll.u32 %v1716, 16
      %v1827 = vrot.slane %v1825, 5
      %v1828 = vsel %vm252, %v1823, %v1827
      %s1829 = scalar_lea.vmem %s1, 448
      %v1830 = vld [vmem:[%s1829] sm:$0xf]
      %v1831 = vld [vmem:[%s1829 + $0x4] sm:$0xf]
      %v1832 = vld [vmem:[%s1829 + $0x8] sm:$0xf]
      %v1833 = vld [vmem:[%s1829 + $0xc] sm:$0xf]
      %v1834 = vld [vmem:[%s1829 + $0x10] sm:$0xf]
      %v1835 = vld [vmem:[%s1829 + $0x14] sm:$0xf]
      %v1836 = vld [vmem:[%s1829 + $0x18] sm:$0xf]
      %v1837 = vld [vmem:[%s1829 + $0x1c] sm:$0xf]
      %v1838 = vld [vmem:[%s1829 + $0x20] sm:$0xf]
      %v1839 = vld [vmem:[%s1829 + $0x24] sm:$0xf]
      %v1840 = vld [vmem:[%s1829 + $0x28] sm:$0xf]
      %v1841 = vld [vmem:[%s1829 + $0x2c] sm:$0xf]
      %v1842 = vld [vmem:[%s1829 + $0x30] sm:$0xf]
      %v1843 = vld [vmem:[%s1829 + $0x34] sm:$0xf]
      %v1844 = vld [vmem:[%s1829 + $0x38] sm:$0xf]
      %v1845 = vld [vmem:[%s1829 + $0x3c] sm:$0xf]
      %v1846 = vunpack.c.l.b16 %v1730
      %v1847 = vunpack.c.l.b16 %v1744
      %v1848 = vunpack.c.l.b16 %v1758
      %v1849 = vunpack.c.l.b16 %v1772
      %v1850 = vunpack.c.l.b16 %v1786
      %v1851 = vunpack.c.l.b16 %v1800
      %v1852 = vunpack.c.l.b16 %v1814
      %v1853 = vunpack.c.l.b16 %v1828
      %v1854 = vpack.c.b16 %v1847, %v1846
      %v1855 = vpack.c.b16 %v1849, %v1848
      %v1856 = vpack.c.b16 %v1851, %v1850
      %v1857 = vpack.c.b16 %v1853, %v1852
      %v1878 = vunpack.c.l.b16 %v1830
      %v1879 = vunpack.c.l.b16 %v1831
      %v1880 = vunpack.c.l.b16 %v1832
      %v1881 = vunpack.c.l.b16 %v1833
      %v1882 = vunpack.c.l.b16 %v1834
      %v1883 = vunpack.c.l.b16 %v1835
      %v1884 = vunpack.c.l.b16 %v1836
      %v1885 = vunpack.c.l.b16 %v1837
      %v1886 = vunpack.c.l.b16 %v1838
      %v1887 = vunpack.c.l.b16 %v1839
      %v1888 = vunpack.c.l.b16 %v1840
      %v1889 = vunpack.c.l.b16 %v1841
      %v1890 = vunpack.c.l.b16 %v1842
      %v1891 = vunpack.c.l.b16 %v1843
      %v1892 = vunpack.c.l.b16 %v1844
      %v1893 = vunpack.c.l.b16 %v1845
      %v1894 = vpack.c.b16 %v1879, %v1878
      %v1895 = vpack.c.b16 %v1881, %v1880
      %v1896 = vpack.c.b16 %v1883, %v1882
      %v1897 = vpack.c.b16 %v1885, %v1884
      %v1898 = vpack.c.b16 %v1887, %v1886
      %v1899 = vpack.c.b16 %v1889, %v1888
      %v1900 = vpack.c.b16 %v1891, %v1890
      %v1901 = vpack.c.b16 %v1893, %v1892
      %1910 = vmatprep.subr.bf16.mxu0 0
      %1911 = vmatpush1.bf16.msra.mxu0 %v1894
      %1912 = vmatprep.subr.bf16.mxu0 0
      %1913 = vmatpush1.bf16.msra.mxu0 %v1895
      %1914 = vmatprep.subr.bf16.mxu0 0
      %1915 = vmatpush1.bf16.msra.mxu0 %v1896
      %1916 = vmatprep.subr.bf16.mxu0 0
      %1917 = vmatpush1.bf16.msra.mxu0 %v1897
      %1918 = vmatprep.subr.bf16.mxu0 0
      %1919 = vmatpush1.bf16.msra.mxu0 %v1898
      %1920 = vmatprep.subr.bf16.mxu0 0
      %1921 = vmatpush1.bf16.msra.mxu0 %v1899
      %1922 = vmatprep.subr.bf16.mxu0 0
      %1923 = vmatpush1.bf16.msra.mxu0 %v1900
      %1924 = vmatprep.subr.bf16.mxu0 0
      %1925 = vmatpush1.bf16.msra.mxu0 %v1901
      %1926 = vmatprep.subr.bf16.mxu0 0
      %1927 = vmatpush1.bf16.msra.mxu0 0
      %1928 = vmatprep.subr.bf16.mxu0 0
      %1929 = vmatpush1.bf16.msra.mxu0 0
      %1930 = vmatprep.subr.bf16.mxu0 0
      %1931 = vmatpush1.bf16.msra.mxu0 0
      %1932 = vmatprep.subr.bf16.mxu0 0
      %1933 = vmatpush1.bf16.msra.mxu0 0
      %1934 = vmatprep.subr.bf16.mxu0 0
      %1935 = vmatpush1.bf16.msra.mxu0 0
      %1936 = vmatprep.subr.bf16.mxu0 0
      %1937 = vmatpush1.bf16.msra.mxu0 0
      %1938 = vmatprep.subr.bf16.mxu0 0
      %1939 = vmatpush1.bf16.msra.mxu0 0
      %1940 = vmatprep.subr.bf16.mxu0 0
      %1941 = vmatpush1.bf16.msra.mxu0 0
      %1942 = vmatprep.mubr.bf16.mxu0 0
      %1943 = vmatmul.mubr.bf16.gmra.mrb[0].mxu0 %v1854
      %v1944 = vpop.f32.mrb[0].mxu0
      %v1945 = vadd.f32 0.0, %v1944
      %v1946 = vpop.f32.mrb[0].mxu0
      %v1947 = vpop.f32.mrb[0].mxu0
      %v1948 = vadd.f32 0.0, %v1947
      %v1949 = vpop.f32.mrb[0].mxu0
      %1950 = vmatprep.mubr.bf16.mxu0 0
      %1951 = vmatmul.mubr.bf16.gmra.mrb[0].mxu0 %v1855
      %v1952 = vpop.f32.mrb[0].mxu0
      %v1953 = vadd.f32 0.0, %v1952
      %v1954 = vpop.f32.mrb[0].mxu0
      %v1955 = vpop.f32.mrb[0].mxu0
      %v1956 = vadd.f32 0.0, %v1955
      %v1957 = vpop.f32.mrb[0].mxu0
      %1958 = vmatprep.mubr.bf16.mxu0 0
      %1959 = vmatmul.mubr.bf16.gmra.mrb[0].mxu0 %v1856
      %v1960 = vpop.f32.mrb[0].mxu0
      %v1961 = vadd.f32 0.0, %v1960
      %v1962 = vpop.f32.mrb[0].mxu0
      %v1963 = vpop.f32.mrb[0].mxu0
      %v1964 = vadd.f32 0.0, %v1963
      %v1965 = vpop.f32.mrb[0].mxu0
      %1966 = vmatprep.mubr.bf16.mxu0 0
      %1967 = vmatmul.mubr.bf16.gmra.mrb[0].mxu0 %v1857
      %v1968 = vpop.f32.mrb[0].mxu0
      %v1969 = vadd.f32 0.0, %v1968
      %v1970 = vpop.f32.mrb[0].mxu0
      %v1971 = vpop.f32.mrb[0].mxu0
      %v1972 = vadd.f32 0.0, %v1971
      %v1973 = vpop.f32.mrb[0].mxu0
      %1974 = vdwg.mxu0
      %v1975 = vadd.f32 %v1693, %v1945
      %v1976 = vadd.f32 %v1694, %v1948
      %v1977 = vadd.f32 %v1695, %v1953
      %v1978 = vadd.f32 %v1696, %v1956
      %v1979 = vadd.f32 %v1697, %v1961
      %v1980 = vadd.f32 %v1698, %v1964
      %v1981 = vadd.f32 %v1699, %v1969
      %v1982 = vadd.f32 %v1700, %v1972
      %v1983 = vld [vmem:[%s1530] sm:$0xe]
      %v1984 = vld [vmem:[%s1530 + $0x8] sm:$0xe]
      %v1985 = vld [vmem:[%s1530 + $0x10] sm:$0xe]
      %v1986 = vld [vmem:[%s1530 + $0x18] sm:$0xe]
      %v1987 = vld [vmem:[%s1530 + $0x20] sm:$0xe]
      %v1988 = vld [vmem:[%s1530 + $0x28] sm:$0xe]
      %v1989 = vld [vmem:[%s1530 + $0x30] sm:$0xe]
      %v1990 = vld [vmem:[%s1530 + $0x38] sm:$0xe]
      %v2007 = vrot.slane %v1983, 5
      %v2008 = vrot.slane %v2007, 4
      %v2009 = vrot.slane %v1702, 5
      %v2010 = vsel %vm674, %v2008, %v2009
      %v2011 = vrot.slane %v1984, 5
      %v2012 = vrot.slane %v2011, 4
      %v2013 = vrot.slane %v1704, 5
      %v2014 = vsel %vm674, %v2012, %v2013
      %v2015 = vrot.slane %v1985, 5
      %v2016 = vrot.slane %v2015, 4
      %v2017 = vrot.slane %v1706, 5
      %v2018 = vsel %vm674, %v2016, %v2017
      %v2019 = vrot.slane %v1986, 5
      %v2020 = vrot.slane %v2019, 4
      %v2021 = vrot.slane %v1708, 5
      %v2022 = vsel %vm674, %v2020, %v2021
      %v2023 = vrot.slane %v1987, 5
      %v2024 = vrot.slane %v2023, 4
      %v2025 = vrot.slane %v1710, 5
      %v2026 = vsel %vm674, %v2024, %v2025
      %v2027 = vrot.slane %v1988, 5
      %v2028 = vrot.slane %v2027, 4
      %v2029 = vrot.slane %v1712, 5
      %v2030 = vsel %vm674, %v2028, %v2029
      %v2031 = vrot.slane %v1989, 5
      %v2032 = vrot.slane %v2031, 4
      %v2033 = vrot.slane %v1714, 5
      %v2034 = vsel %vm674, %v2032, %v2033
      %v2035 = vrot.slane %v1990, 5
      %v2036 = vrot.slane %v2035, 4
      %v2037 = vrot.slane %v1716, 5
      %v2038 = vsel %vm674, %v2036, %v2037
      %s2039 = scalar_lea.vmem %s1, 512
      %v2040 = vld [vmem:[%s2039] sm:$0xf]
      %v2041 = vld [vmem:[%s2039 + $0x4] sm:$0xf]
      %v2042 = vld [vmem:[%s2039 + $0x8] sm:$0xf]
      %v2043 = vld [vmem:[%s2039 + $0xc] sm:$0xf]
      %v2044 = vld [vmem:[%s2039 + $0x10] sm:$0xf]
      %v2045 = vld [vmem:[%s2039 + $0x14] sm:$0xf]
      %v2046 = vld [vmem:[%s2039 + $0x18] sm:$0xf]
      %v2047 = vld [vmem:[%s2039 + $0x1c] sm:$0xf]
      %v2048 = vld [vmem:[%s2039 + $0x20] sm:$0xf]
      %v2049 = vld [vmem:[%s2039 + $0x24] sm:$0xf]
      %v2050 = vld [vmem:[%s2039 + $0x28] sm:$0xf]
      %v2051 = vld [vmem:[%s2039 + $0x2c] sm:$0xf]
      %v2052 = vld [vmem:[%s2039 + $0x30] sm:$0xf]
      %v2053 = vld [vmem:[%s2039 + $0x34] sm:$0xf]
      %v2054 = vld [vmem:[%s2039 + $0x38] sm:$0xf]
      %v2055 = vld [vmem:[%s2039 + $0x3c] sm:$0xf]
      %v2056 = vunpack.c.l.b16 %v2010
      %v2057 = vunpack.c.l.b16 %v2014
      %v2058 = vunpack.c.l.b16 %v2018
      %v2059 = vunpack.c.l.b16 %v2022
      %v2060 = vunpack.c.l.b16 %v2026
      %v2061 = vunpack.c.l.b16 %v2030
      %v2062 = vunpack.c.l.b16 %v2034
      %v2063 = vunpack.c.l.b16 %v2038
      %v2064 = vpack.c.b16 %v2057, %v2056
      %v2065 = vpack.c.b16 %v2059, %v2058
      %v2066 = vpack.c.b16 %v2061, %v2060
      %v2067 = vpack.c.b16 %v2063, %v2062
      %v2088 = vunpack.c.l.b16 %v2040
      %v2089 = vunpack.c.l.b16 %v2041
      %v2090 = vunpack.c.l.b16 %v2042
      %v2091 = vunpack.c.l.b16 %v2043
      %v2092 = vunpack.c.l.b16 %v2044
      %v2093 = vunpack.c.l.b16 %v2045
      %v2094 = vunpack.c.l.b16 %v2046
      %v2095 = vunpack.c.l.b16 %v2047
      %v2096 = vunpack.c.l.b16 %v2048
      %v2097 = vunpack.c.l.b16 %v2049
      %v2098 = vunpack.c.l.b16 %v2050
      %v2099 = vunpack.c.l.b16 %v2051
      %v2100 = vunpack.c.l.b16 %v2052
      %v2101 = vunpack.c.l.b16 %v2053
      %v2102 = vunpack.c.l.b16 %v2054
      %v2103 = vunpack.c.l.b16 %v2055
      %v2104 = vpack.c.b16 %v2089, %v2088
      %v2105 = vpack.c.b16 %v2091, %v2090
      %v2106 = vpack.c.b16 %v2093, %v2092
      %v2107 = vpack.c.b16 %v2095, %v2094
      %v2108 = vpack.c.b16 %v2097, %v2096
      %v2109 = vpack.c.b16 %v2099, %v2098
      %v2110 = vpack.c.b16 %v2101, %v2100
      %v2111 = vpack.c.b16 %v2103, %v2102
      %2120 = vmatprep.subr.bf16.mxu0 0
      %2121 = vmatpush1.bf16.msra.mxu0 %v2104
      %2122 = vmatprep.subr.bf16.mxu0 0
      %2123 = vmatpush1.bf16.msra.mxu0 %v2105
      %2124 = vmatprep.subr.bf16.mxu0 0
      %2125 = vmatpush1.bf16.msra.mxu0 %v2106
      %2126 = vmatprep.subr.bf16.mxu0 0
      %2127 = vmatpush1.bf16.msra.mxu0 %v2107
      %2128 = vmatprep.subr.bf16.mxu0 0
      %2129 = vmatpush1.bf16.msra.mxu0 %v2108
      %2130 = vmatprep.subr.bf16.mxu0 0
      %2131 = vmatpush1.bf16.msra.mxu0 %v2109
      %2132 = vmatprep.subr.bf16.mxu0 0
      %2133 = vmatpush1.bf16.msra.mxu0 %v2110
      %2134 = vmatprep.subr.bf16.mxu0 0
      %2135 = vmatpush1.bf16.msra.mxu0 %v2111
      %2136 = vmatprep.subr.bf16.mxu0 0
      %2137 = vmatpush1.bf16.msra.mxu0 0
      %2138 = vmatprep.subr.bf16.mxu0 0
      %2139 = vmatpush1.bf16.msra.mxu0 0
      %2140 = vmatprep.subr.bf16.mxu0 0
      %2141 = vmatpush1.bf16.msra.mxu0 0
      %2142 = vmatprep.subr.bf16.mxu0 0
      %2143 = vmatpush1.bf16.msra.mxu0 0
      %2144 = vmatprep.subr.bf16.mxu0 0
      %2145 = vmatpush1.bf16.msra.mxu0 0
      %2146 = vmatprep.subr.bf16.mxu0 0
      %2147 = vmatpush1.bf16.msra.mxu0 0
      %2148 = vmatprep.subr.bf16.mxu0 0
      %2149 = vmatpush1.bf16.msra.mxu0 0
      %2150 = vmatprep.subr.bf16.mxu0 0
      %2151 = vmatpush1.bf16.msra.mxu0 0
      %2152 = vmatprep.mubr.bf16.mxu0 0
      %2153 = vmatmul.mubr.bf16.gmra.mrb[0].mxu0 %v2064
      %v2154 = vpop.f32.mrb[0].mxu0
      %v2155 = vadd.f32 0.0, %v2154
      %v2156 = vpop.f32.mrb[0].mxu0
      %v2157 = vpop.f32.mrb[0].mxu0
      %v2158 = vadd.f32 0.0, %v2157
      %v2159 = vpop.f32.mrb[0].mxu0
      %2160 = vmatprep.mubr.bf16.mxu0 0
      %2161 = vmatmul.mubr.bf16.gmra.mrb[0].mxu0 %v2065
      %v2162 = vpop.f32.mrb[0].mxu0
      %v2163 = vadd.f32 0.0, %v2162
      %v2164 = vpop.f32.mrb[0].mxu0
      %v2165 = vpop.f32.mrb[0].mxu0
      %v2166 = vadd.f32 0.0, %v2165
      %v2167 = vpop.f32.mrb[0].mxu0
      %2168 = vmatprep.mubr.bf16.mxu0 0
      %2169 = vmatmul.mubr.bf16.gmra.mrb[0].mxu0 %v2066
      %v2170 = vpop.f32.mrb[0].mxu0
      %v2171 = vadd.f32 0.0, %v2170
      %v2172 = vpop.f32.mrb[0].mxu0
      %v2173 = vpop.f32.mrb[0].mxu0
      %v2174 = vadd.f32 0.0, %v2173
      %v2175 = vpop.f32.mrb[0].mxu0
      %2176 = vmatprep.mubr.bf16.mxu0 0
      %2177 = vmatmul.mubr.bf16.gmra.mrb[0].mxu0 %v2067
      %v2178 = vpop.f32.mrb[0].mxu0
      %v2179 = vadd.f32 0.0, %v2178
      %v2180 = vpop.f32.mrb[0].mxu0
      %v2181 = vpop.f32.mrb[0].mxu0
      %v2182 = vadd.f32 0.0, %v2181
      %v2183 = vpop.f32.mrb[0].mxu0
      %2184 = vdwg.mxu0
      %v2185 = vadd.f32 %v1975, %v2155
      %v2186 = vadd.f32 %v1976, %v2158
      %v2187 = vadd.f32 %v1977, %v2163
      %v2188 = vadd.f32 %v1978, %v2166
      %v2189 = vadd.f32 %v1979, %v2171
      %v2190 = vadd.f32 %v1980, %v2174
      %v2191 = vadd.f32 %v1981, %v2179
      %v2192 = vadd.f32 %v1982, %v2182
      %v2193 = vpack.c.bf16 %v2185, %v2185
      %v2194 = vpack.c.bf16 %v2186, %v2186
      %v2195 = vpack.c.bf16 %v2187, %v2187
      %v2196 = vpack.c.bf16 %v2188, %v2188
      %v2197 = vpack.c.bf16 %v2189, %v2189
      %v2198 = vpack.c.bf16 %v2190, %v2190
      %v2199 = vpack.c.bf16 %v2191, %v2191
      %v2200 = vpack.c.bf16 %v2192, %v2192
      %2201 = vst [vmem:[%s204] sm:$0xf] %v2193
      %2202 = vst [vmem:[%s204 + $0x4] sm:$0xf] %v2194
      %2203 = vst [vmem:[%s204 + $0x8] sm:$0xf] %v2195
      %2204 = vst [vmem:[%s204 + $0xc] sm:$0xf] %v2196
      %2205 = vst [vmem:[%s204 + $0x10] sm:$0xf] %v2197
      %2206 = vst [vmem:[%s204 + $0x14] sm:$0xf] %v2198
      %2207 = vst [vmem:[%s204 + $0x18] sm:$0xf] %v2199
      %2208 = vst [vmem:[%s204 + $0x1c] sm:$0xf] %v2200
      %v2209 = vadd.f32 %v2185, %v2186
      %v2210 = vadd.f32 %v2209, %v2187
      %v2211 = vadd.f32 %v2210, %v2188
      %v2212 = vadd.f32 %v2211, %v2189
      %v2213 = vadd.f32 %v2212, %v2190
      %v2214 = vadd.f32 %v2213, %v2191
      %v2215 = vadd.f32 %v2214, %v2192
      %v2216 = vrot.slane %v2215, 4
      %v2217 = vadd.f32 %v2215, %v2216
      %v2218 = vrot.slane %v2217, 2
      %v2219 = vadd.f32 %v2217, %v2218
      %v2220 = vrot.slane %v2219, 1
      %v2221 = vadd.f32 %v2219, %v2220
      %v2222 = vmul.f32 %v2221, 0.015625
      %v2223 = vsub.f32 %v2185, %v2222
      %v2224 = vsub.f32 %v2186, %v2222
      %v2225 = vsub.f32 %v2187, %v2222
      %v2226 = vsub.f32 %v2188, %v2222
      %v2227 = vsub.f32 %v2189, %v2222
      %v2228 = vsub.f32 %v2190, %v2222
      %v2229 = vsub.f32 %v2191, %v2222
      %v2230 = vsub.f32 %v2192, %v2222
      %v2231 = vmul.f32 %v2223, %v2223
      %v2232 = vmul.f32 %v2224, %v2224
      %v2233 = vmul.f32 %v2225, %v2225
      %v2234 = vmul.f32 %v2226, %v2226
      %v2235 = vmul.f32 %v2227, %v2227
      %v2236 = vmul.f32 %v2228, %v2228
      %v2237 = vmul.f32 %v2229, %v2229
      %v2238 = vmul.f32 %v2230, %v2230
      %v2239 = vadd.f32 %v2231, %v2232
      %v2240 = vadd.f32 %v2239, %v2233
      %v2241 = vadd.f32 %v2240, %v2234
      %v2242 = vadd.f32 %v2241, %v2235
      %v2243 = vadd.f32 %v2242, %v2236
      %v2244 = vadd.f32 %v2243, %v2237
      %v2245 = vadd.f32 %v2244, %v2238
      %v2246 = vrot.slane %v2245, 4
      %v2247 = vadd.f32 %v2245, %v2246
      %v2248 = vrot.slane %v2247, 2
      %v2249 = vadd.f32 %v2247, %v2248
      %v2250 = vrot.slane %v2249, 1
      %v2251 = vadd.f32 %v2249, %v2250
      %vm2252 = vcmask 1040384
      %v2253 = vsel %vm2252, %v2221, %v2251
      %2254 = vst [vmem:[%s212] sm:$0x3] %v2253
      %s2255 = smul.u32 8, %s20
      %p2256 = scmp.lt.s32.totalorder %s19, 1
      %s2257 = scalar_select %p2256, %s19, 1
      %p2258 = scmp.lt.s32.totalorder %s2255, 7
      %s2259 = scalar_select %p2258, %s2255, 7
      %s2260 = smul.addr %s2257, 8
      %s2261 = sadd.s32 %s2259, %s2260
      %s2262 = smul.addr %s2261, 4
      %s2263 = scalar_lea.vmem %s2, %s2262
      %p2264 = scmp.lt.s32.totalorder %s19, 1
      %s2265 = scalar_select %p2264, %s19, 1
      %p2266 = scmp.lt.s32.totalorder %s20, 0
      %s2267 = scalar_select %p2266, %s20, 0
      %s2268 = sadd.s32 %s2267, %s2265
      %s2269 = smul.addr %s2268, 2
      %s2270 = scalar_lea.vmem %s3, %s2269
      // Predicated region
      $region29: #{res_block_forward.10} parent=27 // pred_check
        %p2271 = pneg %p94
      $region30: #{res_block_forward.10} parent=27 // pred_check_branch
        %2273 = sbr.rel (%p2271) target = $region32
      $region31: #{res_block_forward.10} parent=27 // pred_region
        %s2274 = smul.u32 8, %s20
      $region32: #{res_block_forward.10} parent=27 // pred_fallthru
        _
      // Predicated region
      $region33: #{res_block_forward.10} parent=27 // pred_check
        %p2275 = pneg %p122
      $region34: #{res_block_forward.10} parent=27 // pred_check_branch
        %2277 = sbr.rel (%p2275) target = $region36
      $region35: #{res_block_forward.10} parent=27 // pred_region
        _
      $region36: #{res_block_forward.10} parent=27 // pred_fallthru
        _
    $region28: #{res_block_forward.10} parent=5 // pred_fallthru
      _
    %p2278 = scmp.le.s32.totalorder 2, %s10
    // Predicated region
    $region37: #{res_block_forward.10} parent=5 // pred_check
      %p2279 = pneg %p2278
    $region38: #{res_block_forward.10} parent=5 // pred_check_branch
      %2281 = sbr.rel (%p2279) target = $region40
    $region39: #{res_block_forward.10} parent=5 // pred_region
      %s2282 = ssub.s32 %s10, 2
      // Predicated region
      $region41: #{res_block_forward.10} parent=39 // pred_check
        %p2283 = pneg %p100
      $region42: #{res_block_forward.10} parent=39 // pred_check_branch
        %2285 = sbr.rel (%p2283) target = $region44
      $region43: #{res_block_forward.10} parent=39 // pred_region
        %s2286 = smul.u32 8, %s22
        %p2287 = scmp.lt.s32.totalorder %s21, 1
        %s2288 = scalar_select %p2287, %s21, 1
        %p2289 = scmp.lt.s32.totalorder %s2286, 7
        %s2290 = scalar_select %p2289, %s2286, 7
        %s2291 = smul.addr %s2288, 8
        %s2292 = sadd.s32 %s2290, %s2291
        %s2293 = smul.addr %s2292, 4
        %s2294 = scalar_lea.vmem %s2, %s2293
      $region44: #{res_block_forward.10} parent=39 // pred_fallthru
        _
      // Predicated region
      $region45: #{res_block_forward.10} parent=39 // pred_check
        %p2295 = pneg %p128
      $region46: #{res_block_forward.10} parent=39 // pred_check_branch
        %2297 = sbr.rel (%p2295) target = $region48
      $region47: #{res_block_forward.10} parent=39 // pred_region
        %p2298 = scmp.lt.s32.totalorder %s21, 1
        %s2299 = scalar_select %p2298, %s21, 1
        %p2300 = scmp.lt.s32.totalorder %s22, 0
        %s2301 = scalar_select %p2300, %s22, 0
        %s2302 = sadd.s32 %s2301, %s2299
        %s2303 = smul.addr %s2302, 2
        %s2304 = scalar_lea.vmem %s3, %s2303
      $region48: #{res_block_forward.10} parent=39 // pred_fallthru
        _
    $region40: #{res_block_forward.10} parent=5 // pred_fallthru
      _
  $region6: #{res_block_forward.10} parent=0 // loop_footer
    %s14 = sadd.s32 1, %s10
  $region7: #{res_block_forward.10} parent=0 // loop_footer_branch
    %9 = sbr.rel target = $region3
  $region8: #{res_block_forward.10} parent=0 // loop_exit
    _

</llo_original>
